<compile_context>
chip_gen: v6e
topology: v6e:2x2x1
jax: 0.10.0
libtpu: 0.0.40
codegen_flags: <defaults>
</compile_context>

<pallas_src>
import jax
import jax.numpy as jnp
from jax.experimental import pallas as pl
from jax.experimental.pallas import tpu as pltpu


def _round_up(x, m):
    return ((x + m - 1) // m) * m


# ------------------------------ fused kernel --------------------------------
def _gcn_kernel(x_ref, ops_ref, w_ref, b_ref, o_ref):
    """One (n, l)-tile of the fused diffusion-GCN block.

    x_ref  : (C, T, Vp)      bf16 input tile; padded graph nodes on lanes
    ops_ref: (P-1, Vp, Vp)   bf16 diffusion operators [A1, A1^2, ..., AS^order]
    w_ref  : (P, C_out, C)   bf16 per-hop 1x1-conv weight blocks (hop 0 = identity)
    b_ref  : (C_out, 1)      f32 conv bias
    o_ref  : (C_out, T*Vp)   f32 output tile (lane-dense)
    """
    C, T, Vp = x_ref.shape
    P = w_ref.shape[0]
    Co = o_ref.shape[0]

    # Free view (T multiple of the sublane tile): diffusion contracts the lane dim.
    x2 = x_ref[...].reshape(C * T, Vp)

    acc = jnp.zeros((Co, T * Vp), jnp.float32)
    for p in range(P):
        if p == 0:
            d = x2                                                   # identity hop
        else:
            # diffusion hop p: (C*T, Vp) @ (Vp, Vp) on the MXU, f32 result
            d = jnp.dot(x2, ops_ref[p - 1], preferred_element_type=jnp.float32)
            d = d.astype(jnp.bfloat16)
        # tile-aligned re-view (T % 8 == 0, Vp % 128 == 0), then fold this hop into
        # the output with its 1x1-conv block; accumulate in f32.
        acc = acc + jnp.dot(w_ref[p], d.reshape(C, T * Vp),
                            preferred_element_type=jnp.float32)

    o_ref[...] = acc + b_ref[...]                                    # bias broadcast


# ------------------------------ tile sizing ----------------------------------
def _choose_tile_t(nl, vp, c_in, c_out, n_hops, *, budget_bytes=24 << 20,
                   t_max=256, min_grid_steps=8):
    """Pick the (n, l)-tile length from a total per-tile VMEM byte budget."""
    in_sz = 2  # bf16 operands
    # grid-invariant operands (still double-buffered by the pipeline)
    const = 2 * ((n_hops - 1) * vp * vp * in_sz        # diffusion operators
                 + n_hops * c_out * c_in * in_sz       # conv weight blocks
                 + c_out * 128 * 4)                    # bias (lane-padded)
    # bytes that scale with one (n, l) position
    per_t = (2 * c_in * vp * in_sz       # x block, double-buffered
             + 2 * c_out * vp * 4        # f32 out block, double-buffered
             + c_in * vp * (4 + in_sz)   # live hop intermediate (f32 dot out + bf16)
             + c_out * vp * 4)           # f32 accumulator
    t = max((budget_bytes - const) // per_t, 16)
    # keep at least ~min_grid_steps grid steps for pipelining / megacore sharding
    t_steps = _round_up(max(-(-nl // min_grid_steps), 16), 16)
    t = min(t, t_max, t_steps)
    return max(16, (t // 16) * 16)


# ------------------------------ gcn forward ----------------------------------
def gcn_forward(x, supports, W, b, *, order=2, tile_t=None):
    """Fused Graph-WaveNet diffusion-GCN block.

    x: (N, C_in, V, L) f32; supports: list of (V, V); W: (C_out, C_total);
    b: (C_out,), with C_total == (order * len(supports) + 1) * C_in.
    Returns (N, C_out, V, L) f32.
    """
    N, C, V, L = x.shape
    S = len(supports)
    P = 1 + S * order
    C_out, C_total = W.shape
    assert C_total == P * C, (C_total, P, C)

    hp = jax.lax.Precision.HIGHEST

    # Non-identity diffusion operators A_s^1..A_s^order (f32 powers, then bf16).
    ops = []
    for A in supports:
        Ak = A.astype(jnp.float32)
        ops.append(Ak)
        for _ in range(2, order + 1):
            Ak = jnp.dot(Ak, A.astype(jnp.float32), precision=hp)
            ops.append(Ak)
    # Pad graph nodes to a lane-tile multiple: in-kernel re-views become tile aligned
    # and output stores are lane dense.
    Vp = _round_up(V, 128)
    ops_arr = jnp.zeros((P - 1, Vp, Vp), jnp.float32)
    ops_arr = ops_arr.at[:, :V, :V].set(jnp.stack(ops, axis=0)).astype(jnp.bfloat16)

    # Per-hop 1x1-conv weight blocks: w_stack[p, o, c] = W[o, p*C + c].
    w_stack = jnp.transpose(W.reshape(C_out, P, C), (1, 0, 2)).astype(jnp.bfloat16)
    b2 = b.reshape(C_out, 1).astype(jnp.float32)

    # Layout: channels outer, flattened (n, l) on sublanes, padded nodes on lanes.
    NL = N * L
    T = tile_t if tile_t is not None else _choose_tile_t(NL, Vp, C, C_out, P)
    T = max(16, _round_up(T, 16))
    NLp = _round_up(NL, T)
    x_c = jnp.transpose(x, (1, 0, 3, 2)).reshape(C, NL, V)      # [c, n*L + l, v]
    x_c = jnp.pad(x_c, ((0, 0), (0, NLp - NL), (0, Vp - V))).astype(jnp.bfloat16)

    out = pl.pallas_call(
        _gcn_kernel,
        out_shape=jax.ShapeDtypeStruct((C_out, NLp * Vp), jnp.float32),
        grid=(NLp // T,),
        in_specs=[
            pl.BlockSpec((C, T, Vp), lambda i: (0, i, 0)),        # x tile
            pl.BlockSpec((P - 1, Vp, Vp), lambda i: (0, 0, 0)),   # diffusion operators
            pl.BlockSpec((P, C_out, C), lambda i: (0, 0, 0)),     # conv weight blocks
            pl.BlockSpec((C_out, 1), lambda i: (0, 0)),           # bias
        ],
        out_specs=pl.BlockSpec((C_out, T * Vp), lambda i: (0, i)),
        compiler_params=pltpu.CompilerParams(
            dimension_semantics=("parallel",),
            vmem_limit_bytes=48 * 1024 * 1024,    # headroom on v7x's 64 MiB VMEM
        ),
    )(x_c, ops_arr, w_stack, b2)

    y = out.reshape(C_out, NLp, Vp)[:, :NL, :V].reshape(C_out, N, L, V)
    y = jnp.transpose(y, (1, 0, 3, 2))                            # (N, C_out, V, L)
    # TODO(synk): F.dropout left as identity (deterministic inference path).
    return y


# ------------------------------ pure-JAX reference ---------------------------
def gcn_reference(x, supports, W, b, *, order=2):
    hp = jax.lax.Precision.HIGHEST
    out = [x]
    for A in supports:
        x1 = jnp.einsum('ncvl,vw->ncwl', x, A, precision=hp)
        out.append(x1)
        for _ in range(2, order + 1):
            x1 = jnp.einsum('ncvl,vw->ncwl', x1, A, precision=hp)
            out.append(x1)
    h = jnp.concatenate(out, axis=1)                               # (N, C_total, V, L)
    y = jnp.einsum('ncvl,oc->novl', h, W, precision=hp) + b[None, :, None, None]
    return y


if __name__ == "__main__":
    # Small shapes consistent with gcn.forward: x (N, C_in, V, L), 3 supports, order 2.
    N, C_in, V, L = 2, 4, 8, 20
    support_len, order = 3, 2
    C_out = 32
    C_total = (order * support_len + 1) * C_in                     # 28

    key = jax.random.PRNGKey(0)
    kx, ka, kw, kb = jax.random.split(key, 4)

    x = jax.random.normal(kx, (N, C_in, V, L), dtype=jnp.float32)

    # Deterministic synthetic adjacency matrices (row-normalized).
    A_raw = jax.random.uniform(ka, (support_len, V, V), dtype=jnp.float32)
    A_raw = A_raw / jnp.sum(A_raw, axis=-1, keepdims=True)
    supports = [A_raw[s] for s in range(support_len)]

    # Conv2d(1x1) params: weight (C_out, C_total), bias (C_out,).
    bound = 1.0 / (C_total ** 0.5)
    W_conv = jax.random.uniform(kw, (C_out, C_total), dtype=jnp.float32,
                                minval=-bound, maxval=bound)
    b_conv = jax.random.uniform(kb, (C_out,), dtype=jnp.float32,
                                minval=-bound, maxval=bound)

    # Auto tile -> multi-step grid even at these tiny shapes, so the pipelined path runs.
    y = gcn_forward(x, supports, W_conv, b_conv, order=order)
    y = jax.block_until_ready(y)

    y_ref = gcn_reference(x, supports, W_conv, b_conv, order=order)
    assert y.shape == (N, C_out, V, L), y.shape
    max_err = float(jnp.max(jnp.abs(y - y_ref)))
    # bf16 MXU operands with f32 accumulation -> bf16-level tolerance.
    assert jnp.allclose(y, y_ref, atol=2e-2, rtol=2e-2), max_err

    print("KERNEL_OK")
</pallas_src>

<mosaic_0001>
module attributes {stable_mosaic.version = 11 : i64} {
  func.func @_gcn_kernel(%arg0: i32, %arg1: memref<4x16x128xbf16, #tpu.memory_space<vmem>>, %arg2: memref<6x128x128xbf16, #tpu.memory_space<vmem>>, %arg3: memref<7x32x4xbf16, #tpu.memory_space<vmem>>, %arg4: memref<32x1xf32, #tpu.memory_space<vmem>>, %arg5: memref<32x2048xf32, #tpu.memory_space<vmem>>) attributes {dimension_semantics = [#tpu.dimension_semantics<parallel>], iteration_bounds = array<i64: 3>, scalar_prefetch = 0 : i64, scratch_operands = 0 : i64, tpu.core_type = #tpu.core_type<tc>, window_params = [{transform_indices = @transform_0, window_bounds = array<i64: 4, 16, 128>}, {pipeline_mode = #tpu.pipeline_mode<synchronous>, transform_indices = @transform_1, window_bounds = array<i64: 6, 128, 128>}, {pipeline_mode = #tpu.pipeline_mode<synchronous>, transform_indices = @transform_2, window_bounds = array<i64: 7, 32, 4>}, {pipeline_mode = #tpu.pipeline_mode<synchronous>, transform_indices = @transform_3, window_bounds = array<i64: 32, 1>}, {transform_indices = @transform_4, window_bounds = array<i64: 32, 2048>}]} {
    %c0 = arith.constant 0 : index
    %c0_0 = arith.constant 0 : index
    %c0_1 = arith.constant 0 : index
    %0 = vector.load %arg1[%c0, %c0_0, %c0_1] : memref<4x16x128xbf16, #tpu.memory_space<vmem>>, vector<4x16x128xbf16>
    %1 = vector.shape_cast %0 : vector<4x16x128xbf16> to vector<64x128xbf16>
    %cst = arith.constant 0.000000e+00 : f32
    %2 = vector.broadcast %cst : f32 to vector<32x2048xf32>
    %c0_2 = arith.constant 0 : index
    %c0_3 = arith.constant 0 : index
    %c0_4 = arith.constant 0 : index
    %3 = vector.load %arg3[%c0_2, %c0_3, %c0_4] : memref<7x32x4xbf16, #tpu.memory_space<vmem>>, vector<1x32x4xbf16>
    %4 = vector.shape_cast %3 : vector<1x32x4xbf16> to vector<32x4xbf16>
    %5 = vector.shape_cast %1 : vector<64x128xbf16> to vector<4x2048xbf16>
    %cst_5 = arith.constant dense<0.000000e+00> : vector<32x2048xf32>
    %6 = tpu.matmul %4, %5, %cst_5 {dimension_numbers = #tpu.dot_dimension_numbers<[1], [0], [0], [1], [0, 0, 1, 1], [], []>} : vector<32x4xbf16>, vector<4x2048xbf16>, vector<32x2048xf32> -> vector<32x2048xf32>
    %7 = arith.addf %2, %6 : vector<32x2048xf32>
    %c0_6 = arith.constant 0 : index
    %c0_7 = arith.constant 0 : index
    %c0_8 = arith.constant 0 : index
    %8 = vector.load %arg2[%c0_6, %c0_7, %c0_8] : memref<6x128x128xbf16, #tpu.memory_space<vmem>>, vector<1x128x128xbf16>
    %9 = vector.shape_cast %8 : vector<1x128x128xbf16> to vector<128x128xbf16>
    %cst_9 = arith.constant dense<0.000000e+00> : vector<64x128xf32>
    %10 = tpu.matmul %1, %9, %cst_9 {dimension_numbers = #tpu.dot_dimension_numbers<[1], [0], [0], [1], [0, 0, 1, 1], [], []>} : vector<64x128xbf16>, vector<128x128xbf16>, vector<64x128xf32> -> vector<64x128xf32>
    %11 = arith.truncf %10 : vector<64x128xf32> to vector<64x128xbf16>
    %c1 = arith.constant 1 : index
    %c0_10 = arith.constant 0 : index
    %c0_11 = arith.constant 0 : index
    %12 = vector.load %arg3[%c1, %c0_10, %c0_11] : memref<7x32x4xbf16, #tpu.memory_space<vmem>>, vector<1x32x4xbf16>
    %13 = vector.shape_cast %12 : vector<1x32x4xbf16> to vector<32x4xbf16>
    %14 = vector.shape_cast %11 : vector<64x128xbf16> to vector<4x2048xbf16>
    %cst_12 = arith.constant dense<0.000000e+00> : vector<32x2048xf32>
    %15 = tpu.matmul %13, %14, %cst_12 {dimension_numbers = #tpu.dot_dimension_numbers<[1], [0], [0], [1], [0, 0, 1, 1], [], []>} : vector<32x4xbf16>, vector<4x2048xbf16>, vector<32x2048xf32> -> vector<32x2048xf32>
    %16 = arith.addf %7, %15 : vector<32x2048xf32>
    %c1_13 = arith.constant 1 : index
    %c0_14 = arith.constant 0 : index
    %c0_15 = arith.constant 0 : index
    %17 = vector.load %arg2[%c1_13, %c0_14, %c0_15] : memref<6x128x128xbf16, #tpu.memory_space<vmem>>, vector<1x128x128xbf16>
    %18 = vector.shape_cast %17 : vector<1x128x128xbf16> to vector<128x128xbf16>
    %cst_16 = arith.constant dense<0.000000e+00> : vector<64x128xf32>
    %19 = tpu.matmul %1, %18, %cst_16 {dimension_numbers = #tpu.dot_dimension_numbers<[1], [0], [0], [1], [0, 0, 1, 1], [], []>} : vector<64x128xbf16>, vector<128x128xbf16>, vector<64x128xf32> -> vector<64x128xf32>
    %20 = arith.truncf %19 : vector<64x128xf32> to vector<64x128xbf16>
    %c2 = arith.constant 2 : index
    %c0_17 = arith.constant 0 : index
    %c0_18 = arith.constant 0 : index
    %21 = vector.load %arg3[%c2, %c0_17, %c0_18] : memref<7x32x4xbf16, #tpu.memory_space<vmem>>, vector<1x32x4xbf16>
    %22 = vector.shape_cast %21 : vector<1x32x4xbf16> to vector<32x4xbf16>
    %23 = vector.shape_cast %20 : vector<64x128xbf16> to vector<4x2048xbf16>
    %cst_19 = arith.constant dense<0.000000e+00> : vector<32x2048xf32>
    %24 = tpu.matmul %22, %23, %cst_19 {dimension_numbers = #tpu.dot_dimension_numbers<[1], [0], [0], [1], [0, 0, 1, 1], [], []>} : vector<32x4xbf16>, vector<4x2048xbf16>, vector<32x2048xf32> -> vector<32x2048xf32>
    %25 = arith.addf %16, %24 : vector<32x2048xf32>
    %c2_20 = arith.constant 2 : index
    %c0_21 = arith.constant 0 : index
    %c0_22 = arith.constant 0 : index
    %26 = vector.load %arg2[%c2_20, %c0_21, %c0_22] : memref<6x128x128xbf16, #tpu.memory_space<vmem>>, vector<1x128x128xbf16>
    %27 = vector.shape_cast %26 : vector<1x128x128xbf16> to vector<128x128xbf16>
    %cst_23 = arith.constant dense<0.000000e+00> : vector<64x128xf32>
    %28 = tpu.matmul %1, %27, %cst_23 {dimension_numbers = #tpu.dot_dimension_numbers<[1], [0], [0], [1], [0, 0, 1, 1], [], []>} : vector<64x128xbf16>, vector<128x128xbf16>, vector<64x128xf32> -> vector<64x128xf32>
    %29 = arith.truncf %28 : vector<64x128xf32> to vector<64x128xbf16>
    %c3 = arith.constant 3 : index
    %c0_24 = arith.constant 0 : index
    %c0_25 = arith.constant 0 : index
    %30 = vector.load %arg3[%c3, %c0_24, %c0_25] : memref<7x32x4xbf16, #tpu.memory_space<vmem>>, vector<1x32x4xbf16>
    %31 = vector.shape_cast %30 : vector<1x32x4xbf16> to vector<32x4xbf16>
    %32 = vector.shape_cast %29 : vector<64x128xbf16> to vector<4x2048xbf16>
    %cst_26 = arith.constant dense<0.000000e+00> : vector<32x2048xf32>
    %33 = tpu.matmul %31, %32, %cst_26 {dimension_numbers = #tpu.dot_dimension_numbers<[1], [0], [0], [1], [0, 0, 1, 1], [], []>} : vector<32x4xbf16>, vector<4x2048xbf16>, vector<32x2048xf32> -> vector<32x2048xf32>
    %34 = arith.addf %25, %33 : vector<32x2048xf32>
    %c3_27 = arith.constant 3 : index
    %c0_28 = arith.constant 0 : index
    %c0_29 = arith.constant 0 : index
    %35 = vector.load %arg2[%c3_27, %c0_28, %c0_29] : memref<6x128x128xbf16, #tpu.memory_space<vmem>>, vector<1x128x128xbf16>
    %36 = vector.shape_cast %35 : vector<1x128x128xbf16> to vector<128x128xbf16>
    %cst_30 = arith.constant dense<0.000000e+00> : vector<64x128xf32>
    %37 = tpu.matmul %1, %36, %cst_30 {dimension_numbers = #tpu.dot_dimension_numbers<[1], [0], [0], [1], [0, 0, 1, 1], [], []>} : vector<64x128xbf16>, vector<128x128xbf16>, vector<64x128xf32> -> vector<64x128xf32>
    %38 = arith.truncf %37 : vector<64x128xf32> to vector<64x128xbf16>
    %c4 = arith.constant 4 : index
    %c0_31 = arith.constant 0 : index
    %c0_32 = arith.constant 0 : index
    %39 = vector.load %arg3[%c4, %c0_31, %c0_32] : memref<7x32x4xbf16, #tpu.memory_space<vmem>>, vector<1x32x4xbf16>
    %40 = vector.shape_cast %39 : vector<1x32x4xbf16> to vector<32x4xbf16>
    %41 = vector.shape_cast %38 : vector<64x128xbf16> to vector<4x2048xbf16>
    %cst_33 = arith.constant dense<0.000000e+00> : vector<32x2048xf32>
    %42 = tpu.matmul %40, %41, %cst_33 {dimension_numbers = #tpu.dot_dimension_numbers<[1], [0], [0], [1], [0, 0, 1, 1], [], []>} : vector<32x4xbf16>, vector<4x2048xbf16>, vector<32x2048xf32> -> vector<32x2048xf32>
    %43 = arith.addf %34, %42 : vector<32x2048xf32>
    %c4_34 = arith.constant 4 : index
    %c0_35 = arith.constant 0 : index
    %c0_36 = arith.constant 0 : index
    %44 = vector.load %arg2[%c4_34, %c0_35, %c0_36] : memref<6x128x128xbf16, #tpu.memory_space<vmem>>, vector<1x128x128xbf16>
    %45 = vector.shape_cast %44 : vector<1x128x128xbf16> to vector<128x128xbf16>
    %cst_37 = arith.constant dense<0.000000e+00> : vector<64x128xf32>
    %46 = tpu.matmul %1, %45, %cst_37 {dimension_numbers = #tpu.dot_dimension_numbers<[1], [0], [0], [1], [0, 0, 1, 1], [], []>} : vector<64x128xbf16>, vector<128x128xbf16>, vector<64x128xf32> -> vector<64x128xf32>
    %47 = arith.truncf %46 : vector<64x128xf32> to vector<64x128xbf16>
    %c5 = arith.constant 5 : index
    %c0_38 = arith.constant 0 : index
    %c0_39 = arith.constant 0 : index
    %48 = vector.load %arg3[%c5, %c0_38, %c0_39] : memref<7x32x4xbf16, #tpu.memory_space<vmem>>, vector<1x32x4xbf16>
    %49 = vector.shape_cast %48 : vector<1x32x4xbf16> to vector<32x4xbf16>
    %50 = vector.shape_cast %47 : vector<64x128xbf16> to vector<4x2048xbf16>
    %cst_40 = arith.constant dense<0.000000e+00> : vector<32x2048xf32>
    %51 = tpu.matmul %49, %50, %cst_40 {dimension_numbers = #tpu.dot_dimension_numbers<[1], [0], [0], [1], [0, 0, 1, 1], [], []>} : vector<32x4xbf16>, vector<4x2048xbf16>, vector<32x2048xf32> -> vector<32x2048xf32>
    %52 = arith.addf %43, %51 : vector<32x2048xf32>
    %c5_41 = arith.constant 5 : index
    %c0_42 = arith.constant 0 : index
    %c0_43 = arith.constant 0 : index
    %53 = vector.load %arg2[%c5_41, %c0_42, %c0_43] : memref<6x128x128xbf16, #tpu.memory_space<vmem>>, vector<1x128x128xbf16>
    %54 = vector.shape_cast %53 : vector<1x128x128xbf16> to vector<128x128xbf16>
    %cst_44 = arith.constant dense<0.000000e+00> : vector<64x128xf32>
    %55 = tpu.matmul %1, %54, %cst_44 {dimension_numbers = #tpu.dot_dimension_numbers<[1], [0], [0], [1], [0, 0, 1, 1], [], []>} : vector<64x128xbf16>, vector<128x128xbf16>, vector<64x128xf32> -> vector<64x128xf32>
    %56 = arith.truncf %55 : vector<64x128xf32> to vector<64x128xbf16>
    %c6 = arith.constant 6 : index
    %c0_45 = arith.constant 0 : index
    %c0_46 = arith.constant 0 : index
    %57 = vector.load %arg3[%c6, %c0_45, %c0_46] : memref<7x32x4xbf16, #tpu.memory_space<vmem>>, vector<1x32x4xbf16>
    %58 = vector.shape_cast %57 : vector<1x32x4xbf16> to vector<32x4xbf16>
    %59 = vector.shape_cast %56 : vector<64x128xbf16> to vector<4x2048xbf16>
    %cst_47 = arith.constant dense<0.000000e+00> : vector<32x2048xf32>
    %60 = tpu.matmul %58, %59, %cst_47 {dimension_numbers = #tpu.dot_dimension_numbers<[1], [0], [0], [1], [0, 0, 1, 1], [], []>} : vector<32x4xbf16>, vector<4x2048xbf16>, vector<32x2048xf32> -> vector<32x2048xf32>
    %61 = arith.addf %52, %60 : vector<32x2048xf32>
    %c0_48 = arith.constant 0 : index
    %c0_49 = arith.constant 0 : index
    %62 = vector.load %arg4[%c0_48, %c0_49] : memref<32x1xf32, #tpu.memory_space<vmem>>, vector<32x1xf32>
    %63 = vector.broadcast %62 : vector<32x1xf32> to vector<32x2048xf32>
    %64 = arith.addf %61, %63 : vector<32x2048xf32>
    %c0_50 = arith.constant 0 : index
    %c0_51 = arith.constant 0 : index
    %65 = vector.load %arg5[%c0_50, %c0_51] : memref<32x2048xf32, #tpu.memory_space<vmem>>, vector<32x2048xf32>
    tpu.vector_store %arg5[%c0_50, %c0_51], %64 {strides = array<i32>} : memref<32x2048xf32, #tpu.memory_space<vmem>>, vector<32x2048xf32>,
    return
  }
  func.func @transform_0(%arg0: i32) -> (i32, i32, i32) {
    %c0_i32 = arith.constant 0 : i32
    %c0_i32_0 = arith.constant 0 : i32
    %c0_i32_1 = arith.constant 0 : i32
    return %c0_i32, %arg0, %c0_i32_0 : i32, i32, i32
  }
  func.func @transform_1(%arg0: i32) -> (i32, i32, i32) {
    %c0_i32 = arith.constant 0 : i32
    %c0_i32_0 = arith.constant 0 : i32
    %c0_i32_1 = arith.constant 0 : i32
    %c0_i32_2 = arith.constant 0 : i32
    return %c0_i32, %c0_i32_0, %c0_i32_1 : i32, i32, i32
  }
  func.func @transform_2(%arg0: i32) -> (i32, i32, i32) {
    %c0_i32 = arith.constant 0 : i32
    %c0_i32_0 = arith.constant 0 : i32
    %c0_i32_1 = arith.constant 0 : i32
    %c0_i32_2 = arith.constant 0 : i32
    return %c0_i32, %c0_i32_0, %c0_i32_1 : i32, i32, i32
  }
  func.func @transform_3(%arg0: i32) -> (i32, i32) {
    %c0_i32 = arith.constant 0 : i32
    %c0_i32_0 = arith.constant 0 : i32
    %c0_i32_1 = arith.constant 0 : i32
    return %c0_i32, %c0_i32_0 : i32, i32
  }
  func.func @transform_4(%arg0: i32) -> (i32, i32) {
    %c0_i32 = arith.constant 0 : i32
    %c0_i32_0 = arith.constant 0 : i32
    return %c0_i32, %arg0 : i32, i32
  }
}

</mosaic_0001>

<llo_original>
// kernel: tpu_custom_call.1
$region0: #{tpu_custom_call.1}
  #allocation0 [shape = 'u32[]', space=smem, size = 0x4, offset = 0x4, fixed_abs, tag = 'smem constant byte address 0x4 - core index']
  #allocation1 [shape = 'u32[144,128]{1,0:T(1,128)}', space=vmem, size = 0x12000, scoped, tag = 'internal scratch']
  %s0 = inlined_call_operand.vmem [shape: bf16[4,48,128], index: 0, kind: input, shape index: {}]
  %s1 = inlined_call_operand.hbm [shape: bf16[6,128,128], index: 1, kind: input, shape index: {}]
  %s2 = inlined_call_operand.vmem [shape: bf16[7,32,4], index: 2, kind: input, shape index: {}]
  %s3 = inlined_call_operand.vmem [shape: f32[32,1], index: 3, kind: input, shape index: {}]
  %s4 = inlined_call_operand.hbm [shape: f32[32,6144], index: 4, kind: output, shape index: {}]
  %s5 = sld [smem:[#allocation0]]
  $region94: #{tpu_custom_call.1} parent=0
    _
  %s7 = ssub.s32 1, %s5
  %s8 = scalar_select 0, %s7, %s5
  $region1: #{tpu_custom_call.1} parent=0
    #allocation2 [shape = 'u8[32768]{0}', space=vmem, size = 0x8000, scoped, tag = 'input window, operand 0']
    #allocation3 [shape = 'u8[196608]{0}', space=vmem, size = 0x30000, scoped, tag = 'input window, operand 1, single buffered']
    #allocation4 [shape = 's32[2]{0}', space=sflag, size = 0x8, scoped, tag = 'scoped memory for tpu_custom_call.1']
    #allocation5 [shape = 's32[2]{0}', space=sflag, size = 0x8, scoped, tag = 'scoped memory for tpu_custom_call.1']
    #allocation6 [shape = 'u8[524288]{0}', space=vmem, size = 0x80000, scoped, tag = 'output window, operand 0']
    %9 = vsyncpa [#allocation4], 0
    %10 = vsyncpa [#allocation5], 0
    %s11 = scalar_lea.sflag [#allocation5], 1
    %12 = vsyncpa %s11, 0
    loop: start=0, step=1, limit=5
    $region2: #{tpu_custom_call.1} parent=1 // loop_pre_header
      _
    $region3: #{tpu_custom_call.1} parent=1 // loop_header
      %s14 = sphi 0, %s18
      %p15 = scmp.ge.s32.totalorder %s14, 5
      %s24 = sphi 0, %s26
      %s27 = sphi 0, %s24
      %s28 = sphi 0, %s27
      %s44 = sphi 0, %s28
      %s48 = sphi 0, %s48
      %s50 = sphi 0, %s48
      %s51 = sphi 0, %s50
      %s65 = sphi 0, %s51
      %s69 = sphi 0, %s69
      %s71 = sphi 0, %s69
      %s72 = sphi 0, %s71
      %s86 = sphi 0, %s72
      %s90 = sphi 0, %s90
      %s92 = sphi 0, %s90
      %s93 = sphi 0, %s92
      %s107 = sphi 0, %s93
      %s113 = sphi 0, %s115
      %s116 = sphi 0, %s113
      %s117 = sphi 0, %s116
      %s133 = sphi 0, %s117
    $region4: #{tpu_custom_call.1} parent=1 // loop_header_branch
      %17 = sbr.rel (%p15) target = $region8
    $region5: #{tpu_custom_call.1} parent=1 // loop_body
      %s19 = ssub.s32 %s14, 1
      %s20 = ssub.s32 %s14, 2
      %s21 = sadd.s32 %s14, 1
      %s22 = ssub.s32 %s14, %s21
      %p23 = scmp.eq.s32.totalorder %s22, 0
      %s25 = sadd.s32 %s24, 1
      %s26 = scalar_select %p23, %s24, %s25
      %p29 = pneg %p23
      %p30 = scmp.eq.s32.totalorder %s14, 2
      %p31 = por %p29, %p30
      %p32 = scmp.ne.s32.totalorder %s24, %s27
      %p33 = scmp.eq.s32.totalorder %s14, 0
      %p34 = por %p32, %p33
      %p35 = scmp.ne.s32.totalorder %s24, %s27
      %p36 = scmp.eq.s32.totalorder %s19, 2
      %p37 = por %p35, %p36
      %p38 = scmp.ne.s32.totalorder %s27, %s28
      %p39 = scmp.eq.s32.totalorder %s19, 0
      %p40 = por %p38, %p39
      %p41 = scmp.ne.s32.totalorder %s27, %s28
      %p42 = scmp.eq.s32.totalorder %s20, 2
      %p43 = por %p41, %p42
      %p45 = scmp.ne.s32.totalorder %s28, %s44
      %p46 = scmp.eq.s32.totalorder %s20, 0
      %p47 = por %p45, %p46
      %s49 = sadd.s32 %s48, 1
      %p52 = scmp.eq.s32.totalorder %s14, 2
      %p53 = scmp.ne.s32.totalorder %s48, %s50
      %p54 = scmp.eq.s32.totalorder %s14, 0
      %p55 = por %p53, %p54
      %p56 = scmp.ne.s32.totalorder %s48, %s50
      %p57 = scmp.eq.s32.totalorder %s19, 2
      %p58 = por %p56, %p57
      %p59 = scmp.ne.s32.totalorder %s50, %s51
      %p60 = scmp.eq.s32.totalorder %s19, 0
      %p61 = por %p59, %p60
      %p62 = scmp.ne.s32.totalorder %s50, %s51
      %p63 = scmp.eq.s32.totalorder %s20, 2
      %p64 = por %p62, %p63
      %p66 = scmp.ne.s32.totalorder %s51, %s65
      %p67 = scmp.eq.s32.totalorder %s20, 0
      %p68 = por %p66, %p67
      %s70 = sadd.s32 %s69, 1
      %p73 = scmp.eq.s32.totalorder %s14, 2
      %p74 = scmp.ne.s32.totalorder %s69, %s71
      %p75 = scmp.eq.s32.totalorder %s14, 0
      %p76 = por %p74, %p75
      %p77 = scmp.ne.s32.totalorder %s69, %s71
      %p78 = scmp.eq.s32.totalorder %s19, 2
      %p79 = por %p77, %p78
      %p80 = scmp.ne.s32.totalorder %s71, %s72
      %p81 = scmp.eq.s32.totalorder %s19, 0
      %p82 = por %p80, %p81
      %p83 = scmp.ne.s32.totalorder %s71, %s72
      %p84 = scmp.eq.s32.totalorder %s20, 2
      %p85 = por %p83, %p84
      %p87 = scmp.ne.s32.totalorder %s72, %s86
      %p88 = scmp.eq.s32.totalorder %s20, 0
      %p89 = por %p87, %p88
      %s91 = sadd.s32 %s90, 1
      %p94 = scmp.eq.s32.totalorder %s14, 2
      %p95 = scmp.ne.s32.totalorder %s90, %s92
      %p96 = scmp.eq.s32.totalorder %s14, 0
      %p97 = por %p95, %p96
      %p98 = scmp.ne.s32.totalorder %s90, %s92
      %p99 = scmp.eq.s32.totalorder %s19, 2
      %p100 = por %p98, %p99
      %p101 = scmp.ne.s32.totalorder %s92, %s93
      %p102 = scmp.eq.s32.totalorder %s19, 0
      %p103 = por %p101, %p102
      %p104 = scmp.ne.s32.totalorder %s92, %s93
      %p105 = scmp.eq.s32.totalorder %s20, 2
      %p106 = por %p104, %p105
      %p108 = scmp.ne.s32.totalorder %s93, %s107
      %p109 = scmp.eq.s32.totalorder %s20, 0
      %p110 = por %p108, %p109
      %s111 = ssub.s32 %s14, %s21
      %p112 = scmp.eq.s32.totalorder %s111, 0
      %s114 = sadd.s32 %s113, 1
      %s115 = scalar_select %p112, %s113, %s114
      %p118 = pneg %p112
      %p119 = scmp.eq.s32.totalorder %s14, 2
      %p120 = por %p118, %p119
      %p121 = scmp.ne.s32.totalorder %s113, %s116
      %p122 = scmp.eq.s32.totalorder %s14, 0
      %p123 = por %p121, %p122
      %p124 = scmp.ne.s32.totalorder %s113, %s116
      %p125 = scmp.eq.s32.totalorder %s19, 2
      %p126 = por %p124, %p125
      %p127 = scmp.ne.s32.totalorder %s116, %s117
      %p128 = scmp.eq.s32.totalorder %s19, 0
      %p129 = por %p127, %p128
      %p130 = scmp.ne.s32.totalorder %s116, %s117
      %p131 = scmp.eq.s32.totalorder %s20, 2
      %p132 = por %p130, %p131
      %p134 = scmp.ne.s32.totalorder %s117, %s133
      %p135 = scmp.eq.s32.totalorder %s20, 0
      %p136 = por %p134, %p135
      %p137 = scmp.le.s32.totalorder 1, %s14
      %p138 = scmp.lt.s32.totalorder %s14, 4
      %p139 = pnand %p137, %p138
      %p140 = pneg %p139
      // Predicated region
      $region9: #{tpu_custom_call.1} parent=5 // pred_check
        _
      $region10: #{tpu_custom_call.1} parent=5 // pred_check_branch
        %142 = sbr.rel (%p139) target = $region12
      $region11: #{tpu_custom_call.1} parent=5 // pred_region
        %s143 = ssub.s32 %s14, 1
        // Predicated region
        $region13: #{tpu_custom_call.1} parent=11 // pred_check
          %p144 = pneg %p61
        $region14: #{tpu_custom_call.1} parent=11 // pred_check_branch
          %146 = sbr.rel (%p144) target = $region16
        $region15: #{tpu_custom_call.1} parent=11 // pred_region
          %s148 = ssub.s32 6144, 6144
          %149 = vsyncadd [#allocation4], %s148
          %s150 = sshll.u32 [#allocation3], 4
          %s151 = int_to_ptr.vmem [resolvable:$true] %s150
          %156 = dma.hbm_to_vmem [thread:$0]  %s1, 6144, %s151, [#allocation4], 64, 64, 4
        $region16: #{tpu_custom_call.1} parent=11 // pred_fallthru
          _
        // Predicated region
        $region17: #{tpu_custom_call.1} parent=11 // pred_check
          %p157 = pneg %p82
        $region18: #{tpu_custom_call.1} parent=11 // pred_check_branch
          %159 = sbr.rel (%p157) target = $region20
        $region19: #{tpu_custom_call.1} parent=11 // pred_region
          _
        $region20: #{tpu_custom_call.1} parent=11 // pred_fallthru
          _
        // Predicated region
        $region21: #{tpu_custom_call.1} parent=11 // pred_check
          %p160 = pneg %p103
        $region22: #{tpu_custom_call.1} parent=11 // pred_check_branch
          %162 = sbr.rel (%p160) target = $region24
        $region23: #{tpu_custom_call.1} parent=11 // pred_region
          _
        $region24: #{tpu_custom_call.1} parent=11 // pred_fallthru
          _
      $region12: #{tpu_custom_call.1} parent=5 // pred_fallthru
        _
      %p163 = scmp.lt.s32.totalorder %s14, 3
      // Predicated region
      $region25: #{tpu_custom_call.1} parent=5 // pred_check
        %p164 = pneg %p163
      $region26: #{tpu_custom_call.1} parent=5 // pred_check_branch
        %166 = sbr.rel (%p164) target = $region28
      $region27: #{tpu_custom_call.1} parent=5 // pred_region
        // Predicated region
        $region29: #{tpu_custom_call.1} parent=27 // pred_check
          %p167 = pneg %p34
        $region30: #{tpu_custom_call.1} parent=27 // pred_check_branch
          %169 = sbr.rel (%p167) target = $region32
        $region31: #{tpu_custom_call.1} parent=27 // pred_region
          %s170 = sand.u32 %s24, 1
          %s171 = sand.u32 %s24, 1
          %s172 = smul.addr %s171, 32
          %s173 = scalar_lea.vmem [#allocation2], %s172
          %s174 = smul.u32 2, %s14
          %s175 = smul.addr %s174, 4
          %s176 = scalar_lea.vmem %s0, %s175
          // Predicated region
          $region33: #{tpu_custom_call.1} parent=31 // pred_check
            _
          $region34: #{tpu_custom_call.1} parent=31 // pred_check_branch
            %178 = sbr.rel (0) target = $region36
          $region35: #{tpu_custom_call.1} parent=31 // pred_region
            // Predicated region
            $region37: #{tpu_custom_call.1} parent=35 // pred_check
              _
            $region38: #{tpu_custom_call.1} parent=35 // pred_check_branch
              %180 = sbr.rel target = $region40
            $region39: #{tpu_custom_call.1} parent=35 // pred_region
              // Predicated region
              $region52: #{tpu_custom_call.1} parent=39 // pred_check
                _
              $region53: #{tpu_custom_call.1} parent=39 // pred_check_branch
                %210 = sbr.rel (0) target = $region55
              $region54: #{tpu_custom_call.1} parent=39 // pred_region
                loop: start=0, step=1, limit=1
                $region56: #{tpu_custom_call.1} parent=54 // loop_pre_header
                  _
                $region57: #{tpu_custom_call.1} parent=54 // loop_header
                  %s212 = sphi 0, %s216
                  %p213 = scmp.ge.s32.totalorder %s212, 1
                  %s217 = sphi %s176, %s176
                  %s218 = sphi %s173, %s173
                $region58: #{tpu_custom_call.1} parent=54 // loop_header_branch
                  %215 = sbr.rel (%p213) target = $region62
                $region59: #{tpu_custom_call.1} parent=54 // loop_body
                  _
                $region60: #{tpu_custom_call.1} parent=54 // loop_footer
                  %s216 = sadd.s32 1, %s212
                $region61: #{tpu_custom_call.1} parent=54 // loop_footer_branch
                  %211 = sbr.rel target = $region57
                $region62: #{tpu_custom_call.1} parent=54 // loop_exit
                  _
                %s220 = ssub.s32 16, 1
                loop: start=0, step=1, limit=1
                $region63: #{tpu_custom_call.1} parent=54 // loop_pre_header
                  _
                $region64: #{tpu_custom_call.1} parent=54 // loop_header
                  %s222 = sphi 0, %s226
                  %p223 = scmp.ge.s32.totalorder %s222, 1
                  %s227 = sphi %s176, %s176
                  %s228 = sphi %s173, %s173
                $region65: #{tpu_custom_call.1} parent=54 // loop_header_branch
                  %225 = sbr.rel (%p223) target = $region69
                $region66: #{tpu_custom_call.1} parent=54 // loop_body
                  %v229 = vld [vmem:[%s227] sm:%s220]
                  %230 = vst [vmem:[%s228] sm:%s220] %v229
                  %v231 = vld [vmem:[%s227 + $0x4] sm:%s220]
                  %232 = vst [vmem:[%s228 + $0x4] sm:%s220] %v231
                  %v233 = vld [vmem:[%s227 + $0x18] sm:%s220]
                  %234 = vst [vmem:[%s228 + $0x8] sm:%s220] %v233
                  %v235 = vld [vmem:[%s227 + $0x1c] sm:%s220]
                  %236 = vst [vmem:[%s228 + $0xc] sm:%s220] %v235
                  %v237 = vld [vmem:[%s227 + $0x30] sm:%s220]
                  %238 = vst [vmem:[%s228 + $0x10] sm:%s220] %v237
                  %v239 = vld [vmem:[%s227 + $0x34] sm:%s220]
                  %240 = vst [vmem:[%s228 + $0x14] sm:%s220] %v239
                  %v241 = vld [vmem:[%s227 + $0x48] sm:%s220]
                  %242 = vst [vmem:[%s228 + $0x18] sm:%s220] %v241
                  %v243 = vld [vmem:[%s227 + $0x4c] sm:%s220]
                  %244 = vst [vmem:[%s228 + $0x1c] sm:%s220] %v243
                $region67: #{tpu_custom_call.1} parent=54 // loop_footer
                  %s226 = sadd.s32 1, %s222
                $region68: #{tpu_custom_call.1} parent=54 // loop_footer_branch
                  %221 = sbr.rel target = $region64
                $region69: #{tpu_custom_call.1} parent=54 // loop_exit
                  _
              $region55: #{tpu_custom_call.1} parent=39 // pred_fallthru
                _
            $region40: #{tpu_custom_call.1} parent=35 // pred_fallthru
              _
            // Predicated region
            $region41: #{tpu_custom_call.1} parent=35 // pred_check
              _
            $region42: #{tpu_custom_call.1} parent=35 // pred_check_branch
              %182 = sbr.rel (0) target = $region44
            $region43: #{tpu_custom_call.1} parent=35 // pred_region
              %s184 = ssub.s32 16, 1
              loop: start=0, step=1, limit=1
              $region45: #{tpu_custom_call.1} parent=43 // loop_pre_header
                _
              $region46: #{tpu_custom_call.1} parent=43 // loop_header
                %s186 = sphi 0, %s190
                %p187 = scmp.ge.s32.totalorder %s186, 1
                %s191 = sphi %s176, %s176
                %s192 = sphi %s173, %s173
              $region47: #{tpu_custom_call.1} parent=43 // loop_header_branch
                %189 = sbr.rel (%p187) target = $region51
              $region48: #{tpu_custom_call.1} parent=43 // loop_body
                %v193 = vld [vmem:[%s191] sm:%s184]
                %194 = vst [vmem:[%s192] sm:%s184] %v193
                %v195 = vld [vmem:[%s191 + $0x4] sm:%s184]
                %196 = vst [vmem:[%s192 + $0x4] sm:%s184] %v195
                %v197 = vld [vmem:[%s191 + $0x18] sm:%s184]
                %198 = vst [vmem:[%s192 + $0x8] sm:%s184] %v197
                %v199 = vld [vmem:[%s191 + $0x1c] sm:%s184]
                %200 = vst [vmem:[%s192 + $0xc] sm:%s184] %v199
                %v201 = vld [vmem:[%s191 + $0x30] sm:%s184]
                %202 = vst [vmem:[%s192 + $0x10] sm:%s184] %v201
                %v203 = vld [vmem:[%s191 + $0x34] sm:%s184]
                %204 = vst [vmem:[%s192 + $0x14] sm:%s184] %v203
                %v205 = vld [vmem:[%s191 + $0x48] sm:%s184]
                %206 = vst [vmem:[%s192 + $0x18] sm:%s184] %v205
                %v207 = vld [vmem:[%s191 + $0x4c] sm:%s184]
                %208 = vst [vmem:[%s192 + $0x1c] sm:%s184] %v207
              $region49: #{tpu_custom_call.1} parent=43 // loop_footer
                %s190 = sadd.s32 1, %s186
              $region50: #{tpu_custom_call.1} parent=43 // loop_footer_branch
                %185 = sbr.rel target = $region46
              $region51: #{tpu_custom_call.1} parent=43 // loop_exit
                _
            $region44: #{tpu_custom_call.1} parent=35 // pred_fallthru
              _
          $region36: #{tpu_custom_call.1} parent=31 // pred_fallthru
            _
          %245 = vnop
        $region32: #{tpu_custom_call.1} parent=27 // pred_fallthru
          _
      $region28: #{tpu_custom_call.1} parent=5 // pred_fallthru
        _
      %p246 = scmp.le.s32.totalorder 1, %s14
      %p247 = scmp.lt.s32.totalorder %s14, 4
      %p248 = pnand %p246, %p247
      %p249 = pneg %p248
      // Predicated region
      $region70: #{tpu_custom_call.1} parent=5 // pred_check
        _
      $region71: #{tpu_custom_call.1} parent=5 // pred_check_branch
        %251 = sbr.rel (%p248) target = $region73
      $region72: #{tpu_custom_call.1} parent=5 // pred_region
        %s252 = ssub.s32 %s14, 1
        %s253 = sand.u32 %s27, 1
        %s254 = sand.u32 %s27, 1
        %s255 = smul.addr %s254, 32
        %s256 = scalar_lea.vmem [#allocation2], %s255
        // Predicated region
        $region74: #{tpu_custom_call.1} parent=72 // pred_check
          %p257 = pneg %p40
        $region75: #{tpu_custom_call.1} parent=72 // pred_check_branch
          %259 = sbr.rel (%p257) target = $region77
        $region76: #{tpu_custom_call.1} parent=72 // pred_region
          _
        $region77: #{tpu_custom_call.1} parent=72 // pred_fallthru
          _
        // Predicated region
        $region78: #{tpu_custom_call.1} parent=72 // pred_check
          %p260 = pneg %p61
        $region79: #{tpu_custom_call.1} parent=72 // pred_check_branch
          %262 = sbr.rel (%p260) target = $region81
        $region80: #{tpu_custom_call.1} parent=72 // pred_region
          %263 = dma.done [#allocation4], 6144
        $region81: #{tpu_custom_call.1} parent=72 // pred_fallthru
          _
        %s264 = sand.u32 %s27, 1
        %s265 = sand.u32 %s27, 1
        %s266 = smul.addr %s265, 32
        %s267 = scalar_lea.vmem [#allocation2], %s266
        %p268 = pneg %p40
        %p269 = pneg %p37
        %p270 = pneg %p61
        %p271 = pneg %p58
        %p272 = pneg %p82
        %p273 = pneg %p79
        %p274 = pneg %p103
        %p275 = pneg %p100
        %p276 = pneg %p129
        %p277 = pneg %p126
        %s278 = sand.u32 %s116, 1
        %s279 = scalar_lea.sflag [#allocation5], %s278
        %s280 = sand.u32 %s116, 1
        %s281 = smul.addr %s280, 512
        %s282 = scalar_lea.vmem [#allocation6], %s281
        %s283 = smul.u32 2, %s19
        %s284 = smul.u32 16, %s19
        %v286 = vld [vmem:[%s256] sm:$0xf]
        %v287 = vld [vmem:[%s256 + $0x4] sm:$0xf]
        %v288 = vld [vmem:[%s256 + $0x8] sm:$0xf]
        %v289 = vld [vmem:[%s256 + $0xc] sm:$0xf]
        %v290 = vld [vmem:[%s256 + $0x10] sm:$0xf]
        %v291 = vld [vmem:[%s256 + $0x14] sm:$0xf]
        %v292 = vld [vmem:[%s256 + $0x18] sm:$0xf]
        %v293 = vld [vmem:[%s256 + $0x1c] sm:$0xf]
        %v294 = vld [vmem:[%s2] sm:$0xf]
        %v295 = vld [vmem:[%s2 + $0x4] sm:$0xf]
        %v296 = vld [vmem:[%s2 + $0x8] sm:$0xf]
        %v297 = vld [vmem:[%s2 + $0xc] sm:$0xf]
        %v298 = vld [vmem:[%s256] ss:$8 sm:$0xf]
        %v299 = vshrl.u32 %v298, 16
        %s300 = scalar_lea.vmem %s256, 1 [#allocation2]
        %v301 = vld [vmem:[%s300] ss:$8 sm:$0xf]
        %v302 = vshrl.u32 %v301, 16
        %s303 = scalar_lea.vmem %s256, 2 [#allocation2]
        %v304 = vld [vmem:[%s303] ss:$8 sm:$0xf]
        %v305 = vshrl.u32 %v304, 16
        %s306 = scalar_lea.vmem %s256, 3 [#allocation2]
        %v307 = vld [vmem:[%s306] ss:$8 sm:$0xf]
        %v308 = vshrl.u32 %v307, 16
        %s309 = scalar_lea.vmem %s256, 4 [#allocation2]
        %v310 = vld [vmem:[%s309] ss:$8 sm:$0xf]
        %v311 = vshrl.u32 %v310, 16
        %s312 = scalar_lea.vmem %s256, 5 [#allocation2]
        %v313 = vld [vmem:[%s312] ss:$8 sm:$0xf]
        %v314 = vshrl.u32 %v313, 16
        %s315 = scalar_lea.vmem %s256, 6 [#allocation2]
        %v316 = vld [vmem:[%s315] ss:$8 sm:$0xf]
        %v317 = vshrl.u32 %v316, 16
        %s318 = scalar_lea.vmem %s256, 7 [#allocation2]
        %v319 = vld [vmem:[%s318] ss:$8 sm:$0xf]
        %v320 = vshrl.u32 %v319, 16
        %v321 = vpack.c.b16 %v298, %v298
        %v322 = vpack.c.b16 %v299, %v299
        %v323 = vpack.c.b16 %v301, %v301
        %v324 = vpack.c.b16 %v302, %v302
        %v325 = vpack.c.b16 %v304, %v304
        %v326 = vpack.c.b16 %v305, %v305
        %v327 = vpack.c.b16 %v307, %v307
        %v328 = vpack.c.b16 %v308, %v308
        %v329 = vpack.c.b16 %v310, %v310
        %v330 = vpack.c.b16 %v311, %v311
        %v331 = vpack.c.b16 %v313, %v313
        %v332 = vpack.c.b16 %v314, %v314
        %v333 = vpack.c.b16 %v316, %v316
        %v334 = vpack.c.b16 %v317, %v317
        %v335 = vpack.c.b16 %v319, %v319
        %v336 = vpack.c.b16 %v320, %v320
        %v353 = vld [vmem:[#allocation3] sm:$0xf]
        %v354 = vld [vmem:[#allocation3 + $0x4] sm:$0xf]
        %v355 = vld [vmem:[#allocation3 + $0x8] sm:$0xf]
        %v356 = vld [vmem:[#allocation3 + $0xc] sm:$0xf]
        %v357 = vld [vmem:[#allocation3 + $0x10] sm:$0xf]
        %v358 = vld [vmem:[#allocation3 + $0x14] sm:$0xf]
        %v359 = vld [vmem:[#allocation3 + $0x18] sm:$0xf]
        %v360 = vld [vmem:[#allocation3 + $0x1c] sm:$0xf]
        %v361 = vld [vmem:[#allocation3 + $0x20] sm:$0xf]
        %v362 = vld [vmem:[#allocation3 + $0x24] sm:$0xf]
        %v363 = vld [vmem:[#allocation3 + $0x28] sm:$0xf]
        %v364 = vld [vmem:[#allocation3 + $0x2c] sm:$0xf]
        %v365 = vld [vmem:[#allocation3 + $0x30] sm:$0xf]
        %v366 = vld [vmem:[#allocation3 + $0x34] sm:$0xf]
        %v367 = vld [vmem:[#allocation3 + $0x38] sm:$0xf]
        %v368 = vld [vmem:[#allocation3 + $0x3c] sm:$0xf]
        %v377 = vunpack.c.l.b16 %v286
        %v378 = vunpack.c.l.b16 %v287
        %v379 = vunpack.c.l.b16 %v288
        %v380 = vunpack.c.l.b16 %v289
        %v381 = vunpack.c.l.b16 %v290
        %v382 = vunpack.c.l.b16 %v291
        %v383 = vunpack.c.l.b16 %v292
        %v384 = vunpack.c.l.b16 %v293
        %v385 = vpack.c.b16 %v378, %v377
        %v386 = vpack.c.b16 %v380, %v379
        %v387 = vpack.c.b16 %v382, %v381
        %v388 = vpack.c.b16 %v384, %v383
        %v409 = vunpack.c.l.b16 %v353
        %v410 = vunpack.c.l.b16 %v354
        %v411 = vunpack.c.l.b16 %v355
        %v412 = vunpack.c.l.b16 %v356
        %v413 = vunpack.c.l.b16 %v357
        %v414 = vunpack.c.l.b16 %v358
        %v415 = vunpack.c.l.b16 %v359
        %v416 = vunpack.c.l.b16 %v360
        %v417 = vunpack.c.l.b16 %v361
        %v418 = vunpack.c.l.b16 %v362
        %v419 = vunpack.c.l.b16 %v363
        %v420 = vunpack.c.l.b16 %v364
        %v421 = vunpack.c.l.b16 %v365
        %v422 = vunpack.c.l.b16 %v366
        %v423 = vunpack.c.l.b16 %v367
        %v424 = vunpack.c.l.b16 %v368
        %v425 = vpack.c.b16 %v410, %v409
        %v426 = vpack.c.b16 %v412, %v411
        %v427 = vpack.c.b16 %v414, %v413
        %v428 = vpack.c.b16 %v416, %v415
        %v429 = vpack.c.b16 %v418, %v417
        %v430 = vpack.c.b16 %v420, %v419
        %v431 = vpack.c.b16 %v422, %v421
        %v432 = vpack.c.b16 %v424, %v423
        %441 = vmatprep.subr.bf16.mxu0 0
        %442 = vmatpush1.bf16.msra.mxu0 %v432
        %443 = vmatprep.subr.bf16.mxu0 0
        %444 = vmatpush1.bf16.msra.mxu0 %v431
        %445 = vmatprep.subr.bf16.mxu0 0
        %446 = vmatpush1.bf16.msra.mxu0 %v430
        %447 = vmatprep.subr.bf16.mxu0 0
        %448 = vmatpush1.bf16.msra.mxu0 %v429
        %449 = vmatprep.subr.bf16.mxu0 0
        %450 = vmatpush1.bf16.msra.mxu0 %v428
        %451 = vmatprep.subr.bf16.mxu0 0
        %452 = vmatpush1.bf16.msra.mxu0 %v427
        %453 = vmatprep.subr.bf16.mxu0 0
        %454 = vmatpush1.bf16.msra.mxu0 %v426
        %455 = vmatprep.subr.bf16.mxu0 0
        %456 = vmatpush1.bf16.msra.mxu0 %v425
        %457 = vmatprep.subr.bf16.mxu0 0
        %458 = vmatpush2.bf16.msra.mxu0 0
        %459 = vmatprep.subr.bf16.mxu0 0
        %460 = vmatpush2.bf16.msra.mxu0 0
        %461 = vmatprep.subr.bf16.mxu0 0
        %462 = vmatpush2.bf16.msra.mxu0 0
        %463 = vmatprep.subr.bf16.mxu0 0
        %464 = vmatpush2.bf16.msra.mxu0 0
        %465 = vmatprep.subr.bf16.mxu0 0
        %466 = vmatpush2.bf16.msra.mxu0 0
        %467 = vmatprep.subr.bf16.mxu0 0
        %468 = vmatpush2.bf16.msra.mxu0 0
        %469 = vmatprep.subr.bf16.mxu0 0
        %470 = vmatpush2.bf16.msra.mxu0 0
        %471 = vmatprep.subr.bf16.mxu0 0
        %472 = vmatpush2.bf16.msra.mxu0 0
        %473 = vmatprep.mubr.bf16.mxu0 0
        %474 = vmatmul.mubr.bf16.gmra.mxu0 %v385
        %v475 = vpop.f32.mrf.mxu0
        %v476 = vadd.f32 0.0, %v475
        %v477 = vpop.f32.mrf.mxu0
        %v478 = vpop.f32.mrf.mxu0
        %v479 = vadd.f32 0.0, %v478
        %v480 = vpop.f32.mrf.mxu0
        %481 = vmatprep.mubr.bf16.mxu0 0
        %482 = vmatmul.mubr.bf16.gmra.mxu0 %v386
        %v483 = vpop.f32.mrf.mxu0
        %v484 = vadd.f32 0.0, %v483
        %v485 = vpop.f32.mrf.mxu0
        %v486 = vpop.f32.mrf.mxu0
        %v487 = vadd.f32 0.0, %v486
        %v488 = vpop.f32.mrf.mxu0
        %489 = vmatprep.mubr.bf16.mxu0 0
        %490 = vmatmul.mubr.bf16.gmra.mxu0 %v387
        %v491 = vpop.f32.mrf.mxu0
        %v492 = vadd.f32 0.0, %v491
        %v493 = vpop.f32.mrf.mxu0
        %v494 = vpop.f32.mrf.mxu0
        %v495 = vadd.f32 0.0, %v494
        %v496 = vpop.f32.mrf.mxu0
        %497 = vmatprep.mubr.bf16.mxu0 0
        %498 = vmatmul.mubr.bf16.gmra.mxu0 %v388
        %v499 = vpop.f32.mrf.mxu0
        %v500 = vadd.f32 0.0, %v499
        %v501 = vpop.f32.mrf.mxu0
        %v502 = vpop.f32.mrf.mxu0
        %v503 = vadd.f32 0.0, %v502
        %v504 = vpop.f32.mrf.mxu0
        %505 = vdwg.mxu0
        %v506 = vpack.c.bf16 %v479, %v476
        %v507 = vpack.c.bf16 %v487, %v484
        %v508 = vpack.c.bf16 %v495, %v492
        %v509 = vpack.c.bf16 %v503, %v500
        %s510 = scalar_lea.vmem %s2, 16
        %v511 = vld [vmem:[%s510] sm:$0xf]
        %v512 = vld [vmem:[%s510 + $0x4] sm:$0xf]
        %v513 = vld [vmem:[%s510 + $0x8] sm:$0xf]
        %v514 = vld [vmem:[%s510 + $0xc] sm:$0xf]
        %v519 = vunpack.c.l.b16 %v511
        %v520 = vunpack.c.l.b16 %v512
        %v521 = vunpack.c.l.b16 %v513
        %v522 = vunpack.c.l.b16 %v514
        %v523 = vpack.c.b16 %v520, %v519
        %v524 = vpack.c.b16 %v522, %v521
        %v529 = vunpack.c.l.b16 %v506
        %v530 = vunpack.c.h.b16 %v506
        %v531 = vunpack.c.l.b16 %v507
        %v532 = vunpack.c.h.b16 %v507
        %v533 = vunpack.c.l.b16 %v508
        %v534 = vunpack.c.h.b16 %v508
        %v535 = vunpack.c.l.b16 %v509
        %v536 = vunpack.c.h.b16 %v509
        %v537 = vpack.i.b16 %v531, %v529
        %v538 = vpack.i.b16 %v532, %v530
        %v539 = vpack.i.b16 %v535, %v533
        %v540 = vpack.i.b16 %v536, %v534
        %v541 = vcombine.low %v537, %v539
        %v542 = vcombine.high %v537, %v539
        %v544 = vunpack.c.l.s4 1966171168
        %v545 = vunpack.c.0.s8 %v544
        %v546 = vlaneseq
        %v547 = vshrl.u32 %v546, 7
        %v548 = vsub.s32 %v545, %v547
        %v549 = vrot.slane %v541, %v548
        %v551 = vunpack.c.l.s4 1966171168
        %v552 = vunpack.c.0.s8 %v551
        %v553 = vlaneseq
        %v554 = vshrl.u32 %v553, 7
        %v555 = vsub.s32 %v552, %v554
        %v556 = vrot.slane %v542, %v555
        %v557 = vcombine.high %v549, %v549
        %v558 = vcombine.high %v556, %v556
        %v560 = vunpack.c.l.s4 1966171168
        %v561 = vunpack.c.0.s8 %v560
        %v562 = vlaneseq
        %v563 = vshrl.u32 %v562, 7
        %v564 = vsub.s32 %v561, %v563
        %v565 = vrot.slane %v549, %v564
        %v567 = vunpack.c.l.s4 1966171168
        %v568 = vunpack.c.0.s8 %v567
        %v569 = vlaneseq
        %v570 = vshrl.u32 %v569, 7
        %v571 = vsub.s32 %v568, %v570
        %v572 = vrot.slane %v556, %v571
        %v574 = vunpack.c.l.s4 1966171168
        %v575 = vunpack.c.0.s8 %v574
        %v576 = vlaneseq
        %v577 = vshrl.u32 %v576, 7
        %v578 = vsub.s32 %v575, %v577
        %v579 = vrot.slane %v557, %v578
        %v581 = vunpack.c.l.s4 1966171168
        %v582 = vunpack.c.0.s8 %v581
        %v583 = vlaneseq
        %v584 = vshrl.u32 %v583, 7
        %v585 = vsub.s32 %v582, %v584
        %v586 = vrot.slane %v558, %v585
        %v587 = vcombine.high %v565, %v565
        %v588 = vcombine.high %v572, %v572
        %v589 = vcombine.high %v579, %v579
        %v590 = vcombine.high %v586, %v586
        %v591 = vcombine.low %v538, %v540
        %v592 = vcombine.high %v538, %v540
        %v594 = vunpack.c.l.s4 1966171168
        %v595 = vunpack.c.0.s8 %v594
        %v596 = vlaneseq
        %v597 = vshrl.u32 %v596, 7
        %v598 = vsub.s32 %v595, %v597
        %v599 = vrot.slane %v591, %v598
        %v601 = vunpack.c.l.s4 1966171168
        %v602 = vunpack.c.0.s8 %v601
        %v603 = vlaneseq
        %v604 = vshrl.u32 %v603, 7
        %v605 = vsub.s32 %v602, %v604
        %v606 = vrot.slane %v592, %v605
        %v607 = vcombine.high %v599, %v599
        %v608 = vcombine.high %v606, %v606
        %v610 = vunpack.c.l.s4 1966171168
        %v611 = vunpack.c.0.s8 %v610
        %v612 = vlaneseq
        %v613 = vshrl.u32 %v612, 7
        %v614 = vsub.s32 %v611, %v613
        %v615 = vrot.slane %v599, %v614
        %v617 = vunpack.c.l.s4 1966171168
        %v618 = vunpack.c.0.s8 %v617
        %v619 = vlaneseq
        %v620 = vshrl.u32 %v619, 7
        %v621 = vsub.s32 %v618, %v620
        %v622 = vrot.slane %v606, %v621
        %v624 = vunpack.c.l.s4 1966171168
        %v625 = vunpack.c.0.s8 %v624
        %v626 = vlaneseq
        %v627 = vshrl.u32 %v626, 7
        %v628 = vsub.s32 %v625, %v627
        %v629 = vrot.slane %v607, %v628
        %v631 = vunpack.c.l.s4 1966171168
        %v632 = vunpack.c.0.s8 %v631
        %v633 = vlaneseq
        %v634 = vshrl.u32 %v633, 7
        %v635 = vsub.s32 %v632, %v634
        %v636 = vrot.slane %v608, %v635
        %v637 = vcombine.high %v615, %v615
        %v638 = vcombine.high %v622, %v622
        %v639 = vcombine.high %v629, %v629
        %v640 = vcombine.high %v636, %v636
        %vm641 = vcmask 31744
        %v643 = vsel %vm641, %v523, 0
        %v646 = vsel %vm641, %v524, 0
        %vm648 = vcmask 1041408
        %v650 = vsel %vm648, %v565, 0
        %v653 = vsel %vm648, %v579, 0
        %v656 = vsel %vm648, %v587, 0
        %v659 = vsel %vm648, %v589, 0
        %v662 = vsel %vm648, %v572, 0
        %v665 = vsel %vm648, %v586, 0
        %v668 = vsel %vm648, %v588, 0
        %v671 = vsel %vm648, %v590, 0
        %v674 = vsel %vm648, %v615, 0
        %v677 = vsel %vm648, %v629, 0
        %v680 = vsel %vm648, %v637, 0
        %v683 = vsel %vm648, %v639, 0
        %v686 = vsel %vm648, %v622, 0
        %v689 = vsel %vm648, %v636, 0
        %v692 = vsel %vm648, %v638, 0
        %v695 = vsel %vm648, %v640, 0
        %697 = vmatprep.subr.bf16.mxu0 0
        %698 = vmatpush1.bf16.msra.mxu0 0
        %699 = vmatprep.subr.bf16.mxu0 0
        %700 = vmatpush1.bf16.msra.mxu0 0
        %701 = vmatprep.subr.bf16.mxu0 0
        %702 = vmatpush1.bf16.msra.mxu0 0
        %703 = vmatprep.subr.bf16.mxu0 0
        %704 = vmatpush1.bf16.msra.mxu0 0
        %705 = vmatprep.subr.bf16.mxu0 0
        %706 = vmatpush1.bf16.msra.mxu0 0
        %707 = vmatprep.subr.bf16.mxu0 0
        %708 = vmatpush1.bf16.msra.mxu0 0
        %709 = vmatprep.subr.bf16.mxu0 0
        %710 = vmatpush1.bf16.msra.mxu0 0
        %711 = vmatprep.subr.bf16.mxu0 %v653
        %712 = vmatpush1.bf16.msra.mxu0 %v650
        %713 = vmatprep.subr.bf16.mxu0 0
        %714 = vmatpush2.bf16.msra.mxu0 0
        %715 = vmatprep.subr.bf16.mxu0 0
        %716 = vmatpush2.bf16.msra.mxu0 0
        %717 = vmatprep.subr.bf16.mxu0 0
        %718 = vmatpush2.bf16.msra.mxu0 0
        %719 = vmatprep.subr.bf16.mxu0 0
        %720 = vmatpush2.bf16.msra.mxu0 0
        %721 = vmatprep.subr.bf16.mxu0 0
        %722 = vmatpush2.bf16.msra.mxu0 0
        %723 = vmatprep.subr.bf16.mxu0 0
        %724 = vmatpush2.bf16.msra.mxu0 0
        %725 = vmatprep.subr.bf16.mxu0 0
        %726 = vmatpush2.bf16.msra.mxu0 0
        %727 = vmatprep.subr.bf16.mxu0 0
        %728 = vmatpush2.bf16.msra.mxu0 0
        %729 = vmatprep.mubr.bf16.mxu0 0
        %730 = vmatmul.mubr.bf16.gmra.mxu0 %v643
        %v731 = vpop.f32.mrf.mxu0
        %v732 = vadd.f32 0.0, %v731
        %v733 = vpop.f32.mrf.mxu0
        %v734 = vadd.f32 0.0, %v733
        %v735 = vpop.f32.mrf.mxu0
        %v736 = vadd.f32 0.0, %v735
        %v737 = vpop.f32.mrf.mxu0
        %v738 = vadd.f32 0.0, %v737
        %739 = vmatprep.mubr.bf16.mxu0 0
        %740 = vmatmul.mubr.bf16.gmra.mxu0 %v646
        %v741 = vpop.f32.mrf.mxu0
        %v742 = vadd.f32 0.0, %v741
        %v743 = vpop.f32.mrf.mxu0
        %v744 = vadd.f32 0.0, %v743
        %v745 = vpop.f32.mrf.mxu0
        %v746 = vadd.f32 0.0, %v745
        %v747 = vpop.f32.mrf.mxu0
        %v748 = vadd.f32 0.0, %v747
        %749 = vdwg.mxu0
        %750 = vmatprep.subr.bf16.mxu0 0
        %751 = vmatpush1.bf16.msra.mxu0 0
        %752 = vmatprep.subr.bf16.mxu0 0
        %753 = vmatpush1.bf16.msra.mxu0 0
        %754 = vmatprep.subr.bf16.mxu0 0
        %755 = vmatpush1.bf16.msra.mxu0 0
        %756 = vmatprep.subr.bf16.mxu0 0
        %757 = vmatpush1.bf16.msra.mxu0 0
        %758 = vmatprep.subr.bf16.mxu0 0
        %759 = vmatpush1.bf16.msra.mxu0 0
        %760 = vmatprep.subr.bf16.mxu0 0
        %761 = vmatpush1.bf16.msra.mxu0 0
        %762 = vmatprep.subr.bf16.mxu0 0
        %763 = vmatpush1.bf16.msra.mxu0 0
        %764 = vmatprep.subr.bf16.mxu0 %v659
        %765 = vmatpush1.bf16.msra.mxu0 %v656
        %766 = vmatprep.subr.bf16.mxu0 0
        %767 = vmatpush2.bf16.msra.mxu0 0
        %768 = vmatprep.subr.bf16.mxu0 0
        %769 = vmatpush2.bf16.msra.mxu0 0
        %770 = vmatprep.subr.bf16.mxu0 0
        %771 = vmatpush2.bf16.msra.mxu0 0
        %772 = vmatprep.subr.bf16.mxu0 0
        %773 = vmatpush2.bf16.msra.mxu0 0
        %774 = vmatprep.subr.bf16.mxu0 0
        %775 = vmatpush2.bf16.msra.mxu0 0
        %776 = vmatprep.subr.bf16.mxu0 0
        %777 = vmatpush2.bf16.msra.mxu0 0
        %778 = vmatprep.subr.bf16.mxu0 0
        %779 = vmatpush2.bf16.msra.mxu0 0
        %780 = vmatprep.subr.bf16.mxu0 0
        %781 = vmatpush2.bf16.msra.mxu0 0
        %782 = vmatprep.mubr.bf16.mxu0 0
        %783 = vmatmul.mubr.bf16.gmra.mxu0 %v643
        %v784 = vpop.f32.mrf.mxu0
        %v785 = vadd.f32 0.0, %v784
        %v786 = vpop.f32.mrf.mxu0
        %v787 = vadd.f32 0.0, %v786
        %v788 = vpop.f32.mrf.mxu0
        %v789 = vadd.f32 0.0, %v788
        %v790 = vpop.f32.mrf.mxu0
        %v791 = vadd.f32 0.0, %v790
        %792 = vmatprep.mubr.bf16.mxu0 0
        %793 = vmatmul.mubr.bf16.gmra.mxu0 %v646
        %v794 = vpop.f32.mrf.mxu0
        %v795 = vadd.f32 0.0, %v794
        %v796 = vpop.f32.mrf.mxu0
        %v797 = vadd.f32 0.0, %v796
        %v798 = vpop.f32.mrf.mxu0
        %v799 = vadd.f32 0.0, %v798
        %v800 = vpop.f32.mrf.mxu0
        %v801 = vadd.f32 0.0, %v800
        %802 = vdwg.mxu0
        %803 = vmatprep.subr.bf16.mxu0 0
        %804 = vmatpush1.bf16.msra.mxu0 0
        %805 = vmatprep.subr.bf16.mxu0 0
        %806 = vmatpush1.bf16.msra.mxu0 0
        %807 = vmatprep.subr.bf16.mxu0 0
        %808 = vmatpush1.bf16.msra.mxu0 0
        %809 = vmatprep.subr.bf16.mxu0 0
        %810 = vmatpush1.bf16.msra.mxu0 0
        %811 = vmatprep.subr.bf16.mxu0 0
        %812 = vmatpush1.bf16.msra.mxu0 0
        %813 = vmatprep.subr.bf16.mxu0 0
        %814 = vmatpush1.bf16.msra.mxu0 0
        %815 = vmatprep.subr.bf16.mxu0 0
        %816 = vmatpush1.bf16.msra.mxu0 0
        %817 = vmatprep.subr.bf16.mxu0 %v665
        %818 = vmatpush1.bf16.msra.mxu0 %v662
        %819 = vmatprep.subr.bf16.mxu0 0
        %820 = vmatpush2.bf16.msra.mxu0 0
        %821 = vmatprep.subr.bf16.mxu0 0
        %822 = vmatpush2.bf16.msra.mxu0 0
        %823 = vmatprep.subr.bf16.mxu0 0
        %824 = vmatpush2.bf16.msra.mxu0 0
        %825 = vmatprep.subr.bf16.mxu0 0
        %826 = vmatpush2.bf16.msra.mxu0 0
        %827 = vmatprep.subr.bf16.mxu0 0
        %828 = vmatpush2.bf16.msra.mxu0 0
        %829 = vmatprep.subr.bf16.mxu0 0
        %830 = vmatpush2.bf16.msra.mxu0 0
        %831 = vmatprep.subr.bf16.mxu0 0
        %832 = vmatpush2.bf16.msra.mxu0 0
        %833 = vmatprep.subr.bf16.mxu0 0
        %834 = vmatpush2.bf16.msra.mxu0 0
        %835 = vmatprep.mubr.bf16.mxu0 0
        %836 = vmatmul.mubr.bf16.gmra.mxu0 %v643
        %v837 = vpop.f32.mrf.mxu0
        %v838 = vadd.f32 0.0, %v837
        %v839 = vpop.f32.mrf.mxu0
        %v840 = vadd.f32 0.0, %v839
        %v841 = vpop.f32.mrf.mxu0
        %v842 = vadd.f32 0.0, %v841
        %v843 = vpop.f32.mrf.mxu0
        %v844 = vadd.f32 0.0, %v843
        %845 = vmatprep.mubr.bf16.mxu0 0
        %846 = vmatmul.mubr.bf16.gmra.mxu0 %v646
        %v847 = vpop.f32.mrf.mxu0
        %v848 = vadd.f32 0.0, %v847
        %v849 = vpop.f32.mrf.mxu0
        %v850 = vadd.f32 0.0, %v849
        %v851 = vpop.f32.mrf.mxu0
        %v852 = vadd.f32 0.0, %v851
        %v853 = vpop.f32.mrf.mxu0
        %v854 = vadd.f32 0.0, %v853
        %855 = vdwg.mxu0
        %856 = vmatprep.subr.bf16.mxu0 0
        %857 = vmatpush1.bf16.msra.mxu0 0
        %858 = vmatprep.subr.bf16.mxu0 0
        %859 = vmatpush1.bf16.msra.mxu0 0
        %860 = vmatprep.subr.bf16.mxu0 0
        %861 = vmatpush1.bf16.msra.mxu0 0
        %862 = vmatprep.subr.bf16.mxu0 0
        %863 = vmatpush1.bf16.msra.mxu0 0
        %864 = vmatprep.subr.bf16.mxu0 0
        %865 = vmatpush1.bf16.msra.mxu0 0
        %866 = vmatprep.subr.bf16.mxu0 0
        %867 = vmatpush1.bf16.msra.mxu0 0
        %868 = vmatprep.subr.bf16.mxu0 0
        %869 = vmatpush1.bf16.msra.mxu0 0
        %870 = vmatprep.subr.bf16.mxu0 %v671
        %871 = vmatpush1.bf16.msra.mxu0 %v668
        %872 = vmatprep.subr.bf16.mxu0 0
        %873 = vmatpush2.bf16.msra.mxu0 0
        %874 = vmatprep.subr.bf16.mxu0 0
        %875 = vmatpush2.bf16.msra.mxu0 0
        %876 = vmatprep.subr.bf16.mxu0 0
        %877 = vmatpush2.bf16.msra.mxu0 0
        %878 = vmatprep.subr.bf16.mxu0 0
        %879 = vmatpush2.bf16.msra.mxu0 0
        %880 = vmatprep.subr.bf16.mxu0 0
        %881 = vmatpush2.bf16.msra.mxu0 0
        %882 = vmatprep.subr.bf16.mxu0 0
        %883 = vmatpush2.bf16.msra.mxu0 0
        %884 = vmatprep.subr.bf16.mxu0 0
        %885 = vmatpush2.bf16.msra.mxu0 0
        %886 = vmatprep.subr.bf16.mxu0 0
        %887 = vmatpush2.bf16.msra.mxu0 0
        %888 = vmatprep.mubr.bf16.mxu0 0
        %889 = vmatmul.mubr.bf16.gmra.mxu0 %v643
        %v890 = vpop.f32.mrf.mxu0
        %v891 = vadd.f32 0.0, %v890
        %v892 = vpop.f32.mrf.mxu0
        %v893 = vadd.f32 0.0, %v892
        %v894 = vpop.f32.mrf.mxu0
        %v895 = vadd.f32 0.0, %v894
        %v896 = vpop.f32.mrf.mxu0
        %v897 = vadd.f32 0.0, %v896
        %898 = vmatprep.mubr.bf16.mxu0 0
        %899 = vmatmul.mubr.bf16.gmra.mxu0 %v646
        %v900 = vpop.f32.mrf.mxu0
        %v901 = vadd.f32 0.0, %v900
        %v902 = vpop.f32.mrf.mxu0
        %v903 = vadd.f32 0.0, %v902
        %v904 = vpop.f32.mrf.mxu0
        %v905 = vadd.f32 0.0, %v904
        %v906 = vpop.f32.mrf.mxu0
        %v907 = vadd.f32 0.0, %v906
        %908 = vdwg.mxu0
        %909 = vmatprep.subr.bf16.mxu0 0
        %910 = vmatpush1.bf16.msra.mxu0 0
        %911 = vmatprep.subr.bf16.mxu0 0
        %912 = vmatpush1.bf16.msra.mxu0 0
        %913 = vmatprep.subr.bf16.mxu0 0
        %914 = vmatpush1.bf16.msra.mxu0 0
        %915 = vmatprep.subr.bf16.mxu0 0
        %916 = vmatpush1.bf16.msra.mxu0 0
        %917 = vmatprep.subr.bf16.mxu0 0
        %918 = vmatpush1.bf16.msra.mxu0 0
        %919 = vmatprep.subr.bf16.mxu0 0
        %920 = vmatpush1.bf16.msra.mxu0 0
        %921 = vmatprep.subr.bf16.mxu0 0
        %922 = vmatpush1.bf16.msra.mxu0 0
        %923 = vmatprep.subr.bf16.mxu0 %v677
        %924 = vmatpush1.bf16.msra.mxu0 %v674
        %925 = vmatprep.subr.bf16.mxu0 0
        %926 = vmatpush2.bf16.msra.mxu0 0
        %927 = vmatprep.subr.bf16.mxu0 0
        %928 = vmatpush2.bf16.msra.mxu0 0
        %929 = vmatprep.subr.bf16.mxu0 0
        %930 = vmatpush2.bf16.msra.mxu0 0
        %931 = vmatprep.subr.bf16.mxu0 0
        %932 = vmatpush2.bf16.msra.mxu0 0
        %933 = vmatprep.subr.bf16.mxu0 0
        %934 = vmatpush2.bf16.msra.mxu0 0
        %935 = vmatprep.subr.bf16.mxu0 0
        %936 = vmatpush2.bf16.msra.mxu0 0
        %937 = vmatprep.subr.bf16.mxu0 0
        %938 = vmatpush2.bf16.msra.mxu0 0
        %939 = vmatprep.subr.bf16.mxu0 0
        %940 = vmatpush2.bf16.msra.mxu0 0
        %941 = vmatprep.mubr.bf16.mxu0 0
        %942 = vmatmul.mubr.bf16.gmra.mxu0 %v643
        %v943 = vpop.f32.mrf.mxu0
        %v944 = vadd.f32 0.0, %v943
        %v945 = vpop.f32.mrf.mxu0
        %v946 = vadd.f32 0.0, %v945
        %v947 = vpop.f32.mrf.mxu0
        %v948 = vadd.f32 0.0, %v947
        %v949 = vpop.f32.mrf.mxu0
        %v950 = vadd.f32 0.0, %v949
        %951 = vmatprep.mubr.bf16.mxu0 0
        %952 = vmatmul.mubr.bf16.gmra.mxu0 %v646
        %v953 = vpop.f32.mrf.mxu0
        %v954 = vadd.f32 0.0, %v953
        %v955 = vpop.f32.mrf.mxu0
        %v956 = vadd.f32 0.0, %v955
        %v957 = vpop.f32.mrf.mxu0
        %v958 = vadd.f32 0.0, %v957
        %v959 = vpop.f32.mrf.mxu0
        %v960 = vadd.f32 0.0, %v959
        %961 = vdwg.mxu0
        %962 = vmatprep.subr.bf16.mxu0 0
        %963 = vmatpush1.bf16.msra.mxu0 0
        %964 = vmatprep.subr.bf16.mxu0 0
        %965 = vmatpush1.bf16.msra.mxu0 0
        %966 = vmatprep.subr.bf16.mxu0 0
        %967 = vmatpush1.bf16.msra.mxu0 0
        %968 = vmatprep.subr.bf16.mxu0 0
        %969 = vmatpush1.bf16.msra.mxu0 0
        %970 = vmatprep.subr.bf16.mxu0 0
        %971 = vmatpush1.bf16.msra.mxu0 0
        %972 = vmatprep.subr.bf16.mxu0 0
        %973 = vmatpush1.bf16.msra.mxu0 0
        %974 = vmatprep.subr.bf16.mxu0 0
        %975 = vmatpush1.bf16.msra.mxu0 0
        %976 = vmatprep.subr.bf16.mxu0 %v683
        %977 = vmatpush1.bf16.msra.mxu0 %v680
        %978 = vmatprep.subr.bf16.mxu0 0
        %979 = vmatpush2.bf16.msra.mxu0 0
        %980 = vmatprep.subr.bf16.mxu0 0
        %981 = vmatpush2.bf16.msra.mxu0 0
        %982 = vmatprep.subr.bf16.mxu0 0
        %983 = vmatpush2.bf16.msra.mxu0 0
        %984 = vmatprep.subr.bf16.mxu0 0
        %985 = vmatpush2.bf16.msra.mxu0 0
        %986 = vmatprep.subr.bf16.mxu0 0
        %987 = vmatpush2.bf16.msra.mxu0 0
        %988 = vmatprep.subr.bf16.mxu0 0
        %989 = vmatpush2.bf16.msra.mxu0 0
        %990 = vmatprep.subr.bf16.mxu0 0
        %991 = vmatpush2.bf16.msra.mxu0 0
        %992 = vmatprep.subr.bf16.mxu0 0
        %993 = vmatpush2.bf16.msra.mxu0 0
        %994 = vmatprep.mubr.bf16.mxu0 0
        %995 = vmatmul.mubr.bf16.gmra.mxu0 %v643
        %v996 = vpop.f32.mrf.mxu0
        %v997 = vadd.f32 0.0, %v996
        %v998 = vpop.f32.mrf.mxu0
        %v999 = vadd.f32 0.0, %v998
        %v1000 = vpop.f32.mrf.mxu0
        %v1001 = vadd.f32 0.0, %v1000
        %v1002 = vpop.f32.mrf.mxu0
        %v1003 = vadd.f32 0.0, %v1002
        %1004 = vmatprep.mubr.bf16.mxu0 0
        %1005 = vmatmul.mubr.bf16.gmra.mxu0 %v646
        %v1006 = vpop.f32.mrf.mxu0
        %v1007 = vadd.f32 0.0, %v1006
        %v1008 = vpop.f32.mrf.mxu0
        %v1009 = vadd.f32 0.0, %v1008
        %v1010 = vpop.f32.mrf.mxu0
        %v1011 = vadd.f32 0.0, %v1010
        %v1012 = vpop.f32.mrf.mxu0
        %v1013 = vadd.f32 0.0, %v1012
        %1014 = vdwg.mxu0
        %1015 = vmatprep.subr.bf16.mxu0 0
        %1016 = vmatpush1.bf16.msra.mxu0 0
        %1017 = vmatprep.subr.bf16.mxu0 0
        %1018 = vmatpush1.bf16.msra.mxu0 0
        %1019 = vmatprep.subr.bf16.mxu0 0
        %1020 = vmatpush1.bf16.msra.mxu0 0
        %1021 = vmatprep.subr.bf16.mxu0 0
        %1022 = vmatpush1.bf16.msra.mxu0 0
        %1023 = vmatprep.subr.bf16.mxu0 0
        %1024 = vmatpush1.bf16.msra.mxu0 0
        %1025 = vmatprep.subr.bf16.mxu0 0
        %1026 = vmatpush1.bf16.msra.mxu0 0
        %1027 = vmatprep.subr.bf16.mxu0 0
        %1028 = vmatpush1.bf16.msra.mxu0 0
        %1029 = vmatprep.subr.bf16.mxu0 %v689
        %1030 = vmatpush1.bf16.msra.mxu0 %v686
        %1031 = vmatprep.subr.bf16.mxu0 0
        %1032 = vmatpush2.bf16.msra.mxu0 0
        %1033 = vmatprep.subr.bf16.mxu0 0
        %1034 = vmatpush2.bf16.msra.mxu0 0
        %1035 = vmatprep.subr.bf16.mxu0 0
        %1036 = vmatpush2.bf16.msra.mxu0 0
        %1037 = vmatprep.subr.bf16.mxu0 0
        %1038 = vmatpush2.bf16.msra.mxu0 0
        %1039 = vmatprep.subr.bf16.mxu0 0
        %1040 = vmatpush2.bf16.msra.mxu0 0
        %1041 = vmatprep.subr.bf16.mxu0 0
        %1042 = vmatpush2.bf16.msra.mxu0 0
        %1043 = vmatprep.subr.bf16.mxu0 0
        %1044 = vmatpush2.bf16.msra.mxu0 0
        %1045 = vmatprep.subr.bf16.mxu0 0
        %1046 = vmatpush2.bf16.msra.mxu0 0
        %1047 = vmatprep.mubr.bf16.mxu0 0
        %1048 = vmatmul.mubr.bf16.gmra.mxu0 %v643
        %v1049 = vpop.f32.mrf.mxu0
        %v1050 = vadd.f32 0.0, %v1049
        %v1051 = vpop.f32.mrf.mxu0
        %v1052 = vadd.f32 0.0, %v1051
        %v1053 = vpop.f32.mrf.mxu0
        %v1054 = vadd.f32 0.0, %v1053
        %v1055 = vpop.f32.mrf.mxu0
        %v1056 = vadd.f32 0.0, %v1055
        %1057 = vmatprep.mubr.bf16.mxu0 0
        %1058 = vmatmul.mubr.bf16.gmra.mxu0 %v646
        %v1059 = vpop.f32.mrf.mxu0
        %v1060 = vadd.f32 0.0, %v1059
        %v1061 = vpop.f32.mrf.mxu0
        %v1062 = vadd.f32 0.0, %v1061
        %v1063 = vpop.f32.mrf.mxu0
        %v1064 = vadd.f32 0.0, %v1063
        %v1065 = vpop.f32.mrf.mxu0
        %v1066 = vadd.f32 0.0, %v1065
        %1067 = vdwg.mxu0
        %1068 = vmatprep.subr.bf16.mxu0 0
        %1069 = vmatpush1.bf16.msra.mxu0 0
        %1070 = vmatprep.subr.bf16.mxu0 0
        %1071 = vmatpush1.bf16.msra.mxu0 0
        %1072 = vmatprep.subr.bf16.mxu0 0
        %1073 = vmatpush1.bf16.msra.mxu0 0
        %1074 = vmatprep.subr.bf16.mxu0 0
        %1075 = vmatpush1.bf16.msra.mxu0 0
        %1076 = vmatprep.subr.bf16.mxu0 0
        %1077 = vmatpush1.bf16.msra.mxu0 0
        %1078 = vmatprep.subr.bf16.mxu0 0
        %1079 = vmatpush1.bf16.msra.mxu0 0
        %1080 = vmatprep.subr.bf16.mxu0 0
        %1081 = vmatpush1.bf16.msra.mxu0 0
        %1082 = vmatprep.subr.bf16.mxu0 %v695
        %1083 = vmatpush1.bf16.msra.mxu0 %v692
        %1084 = vmatprep.subr.bf16.mxu0 0
        %1085 = vmatpush2.bf16.msra.mxu0 0
        %1086 = vmatprep.subr.bf16.mxu0 0
        %1087 = vmatpush2.bf16.msra.mxu0 0
        %1088 = vmatprep.subr.bf16.mxu0 0
        %1089 = vmatpush2.bf16.msra.mxu0 0
        %1090 = vmatprep.subr.bf16.mxu0 0
        %1091 = vmatpush2.bf16.msra.mxu0 0
        %1092 = vmatprep.subr.bf16.mxu0 0
        %1093 = vmatpush2.bf16.msra.mxu0 0
        %1094 = vmatprep.subr.bf16.mxu0 0
        %1095 = vmatpush2.bf16.msra.mxu0 0
        %1096 = vmatprep.subr.bf16.mxu0 0
        %1097 = vmatpush2.bf16.msra.mxu0 0
        %1098 = vmatprep.subr.bf16.mxu0 0
        %1099 = vmatpush2.bf16.msra.mxu0 0
        %1100 = vmatprep.mubr.bf16.mxu0 0
        %1101 = vmatmul.mubr.bf16.gmra.mxu0 %v643
        %v1102 = vpop.f32.mrf.mxu0
        %v1103 = vadd.f32 0.0, %v1102
        %v1104 = vpop.f32.mrf.mxu0
        %v1105 = vadd.f32 0.0, %v1104
        %v1106 = vpop.f32.mrf.mxu0
        %v1107 = vadd.f32 0.0, %v1106
        %v1108 = vpop.f32.mrf.mxu0
        %v1109 = vadd.f32 0.0, %v1108
        %1110 = vmatprep.mubr.bf16.mxu0 0
        %1111 = vmatmul.mubr.bf16.gmra.mxu0 %v646
        %v1112 = vpop.f32.mrf.mxu0
        %v1113 = vadd.f32 0.0, %v1112
        %v1114 = vpop.f32.mrf.mxu0
        %v1115 = vadd.f32 0.0, %v1114
        %v1116 = vpop.f32.mrf.mxu0
        %v1117 = vadd.f32 0.0, %v1116
        %v1118 = vpop.f32.mrf.mxu0
        %v1119 = vadd.f32 0.0, %v1118
        %1120 = vdwg.mxu0
        %v1125 = vunpack.c.l.b16 %v294
        %v1126 = vunpack.c.l.b16 %v295
        %v1127 = vunpack.c.l.b16 %v296
        %v1128 = vunpack.c.l.b16 %v297
        %v1129 = vpack.c.b16 %v1126, %v1125
        %v1130 = vpack.c.b16 %v1128, %v1127
        %v1132 = vsel %vm641, %v1129, 0
        %v1135 = vsel %vm641, %v1130, 0
        %v1138 = vsel %vm648, %v321, 0
        %v1141 = vsel %vm648, %v322, 0
        %v1144 = vsel %vm648, %v323, 0
        %v1147 = vsel %vm648, %v324, 0
        %v1150 = vsel %vm648, %v325, 0
        %v1153 = vsel %vm648, %v326, 0
        %v1156 = vsel %vm648, %v327, 0
        %v1159 = vsel %vm648, %v328, 0
        %v1162 = vsel %vm648, %v329, 0
        %v1165 = vsel %vm648, %v330, 0
        %v1168 = vsel %vm648, %v331, 0
        %v1171 = vsel %vm648, %v332, 0
        %v1174 = vsel %vm648, %v333, 0
        %v1177 = vsel %vm648, %v334, 0
        %v1180 = vsel %vm648, %v335, 0
        %v1183 = vsel %vm648, %v336, 0
        %1185 = vmatprep.subr.bf16.mxu0 0
        %1186 = vmatpush1.bf16.msra.mxu0 0
        %1187 = vmatprep.subr.bf16.mxu0 0
        %1188 = vmatpush1.bf16.msra.mxu0 0
        %1189 = vmatprep.subr.bf16.mxu0 0
        %1190 = vmatpush1.bf16.msra.mxu0 0
        %1191 = vmatprep.subr.bf16.mxu0 0
        %1192 = vmatpush1.bf16.msra.mxu0 0
        %1193 = vmatprep.subr.bf16.mxu0 0
        %1194 = vmatpush1.bf16.msra.mxu0 0
        %1195 = vmatprep.subr.bf16.mxu0 0
        %1196 = vmatpush1.bf16.msra.mxu0 0
        %1197 = vmatprep.subr.bf16.mxu0 0
        %1198 = vmatpush1.bf16.msra.mxu0 0
        %1199 = vmatprep.subr.bf16.mxu0 %v1141
        %1200 = vmatpush1.bf16.msra.mxu0 %v1138
        %1201 = vmatprep.subr.bf16.mxu0 0
        %1202 = vmatpush2.bf16.msra.mxu0 0
        %1203 = vmatprep.subr.bf16.mxu0 0
        %1204 = vmatpush2.bf16.msra.mxu0 0
        %1205 = vmatprep.subr.bf16.mxu0 0
        %1206 = vmatpush2.bf16.msra.mxu0 0
        %1207 = vmatprep.subr.bf16.mxu0 0
        %1208 = vmatpush2.bf16.msra.mxu0 0
        %1209 = vmatprep.subr.bf16.mxu0 0
        %1210 = vmatpush2.bf16.msra.mxu0 0
        %1211 = vmatprep.subr.bf16.mxu0 0
        %1212 = vmatpush2.bf16.msra.mxu0 0
        %1213 = vmatprep.subr.bf16.mxu0 0
        %1214 = vmatpush2.bf16.msra.mxu0 0
        %1215 = vmatprep.subr.bf16.mxu0 0
        %1216 = vmatpush2.bf16.msra.mxu0 0
        %1217 = vmatprep.mubr.bf16.mxu0 0
        %1218 = vmatmul.mubr.bf16.gmra.mxu0 %v1132
        %v1219 = vpop.f32.mrf.mxu0
        %v1220 = vadd.f32 %v732, %v1219
        %v1221 = vpop.f32.mrf.mxu0
        %v1222 = vadd.f32 %v734, %v1221
        %v1223 = vpop.f32.mrf.mxu0
        %v1224 = vadd.f32 %v736, %v1223
        %v1225 = vpop.f32.mrf.mxu0
        %v1226 = vadd.f32 %v738, %v1225
        %1227 = vmatprep.mubr.bf16.mxu0 0
        %1228 = vmatmul.mubr.bf16.gmra.mxu0 %v1135
        %v1229 = vpop.f32.mrf.mxu0
        %v1230 = vadd.f32 %v742, %v1229
        %v1231 = vpop.f32.mrf.mxu0
        %v1232 = vadd.f32 %v744, %v1231
        %v1233 = vpop.f32.mrf.mxu0
        %v1234 = vadd.f32 %v746, %v1233
        %v1235 = vpop.f32.mrf.mxu0
        %v1236 = vadd.f32 %v748, %v1235
        %1237 = vdwg.mxu0
        %1238 = vmatprep.subr.bf16.mxu0 0
        %1239 = vmatpush1.bf16.msra.mxu0 0
        %1240 = vmatprep.subr.bf16.mxu0 0
        %1241 = vmatpush1.bf16.msra.mxu0 0
        %1242 = vmatprep.subr.bf16.mxu0 0
        %1243 = vmatpush1.bf16.msra.mxu0 0
        %1244 = vmatprep.subr.bf16.mxu0 0
        %1245 = vmatpush1.bf16.msra.mxu0 0
        %1246 = vmatprep.subr.bf16.mxu0 0
        %1247 = vmatpush1.bf16.msra.mxu0 0
        %1248 = vmatprep.subr.bf16.mxu0 0
        %1249 = vmatpush1.bf16.msra.mxu0 0
        %1250 = vmatprep.subr.bf16.mxu0 0
        %1251 = vmatpush1.bf16.msra.mxu0 0
        %1252 = vmatprep.subr.bf16.mxu0 %v1147
        %1253 = vmatpush1.bf16.msra.mxu0 %v1144
        %1254 = vmatprep.subr.bf16.mxu0 0
        %1255 = vmatpush2.bf16.msra.mxu0 0
        %1256 = vmatprep.subr.bf16.mxu0 0
        %1257 = vmatpush2.bf16.msra.mxu0 0
        %1258 = vmatprep.subr.bf16.mxu0 0
        %1259 = vmatpush2.bf16.msra.mxu0 0
        %1260 = vmatprep.subr.bf16.mxu0 0
        %1261 = vmatpush2.bf16.msra.mxu0 0
        %1262 = vmatprep.subr.bf16.mxu0 0
        %1263 = vmatpush2.bf16.msra.mxu0 0
        %1264 = vmatprep.subr.bf16.mxu0 0
        %1265 = vmatpush2.bf16.msra.mxu0 0
        %1266 = vmatprep.subr.bf16.mxu0 0
        %1267 = vmatpush2.bf16.msra.mxu0 0
        %1268 = vmatprep.subr.bf16.mxu0 0
        %1269 = vmatpush2.bf16.msra.mxu0 0
        %1270 = vmatprep.mubr.bf16.mxu0 0
        %1271 = vmatmul.mubr.bf16.gmra.mxu0 %v1132
        %v1272 = vpop.f32.mrf.mxu0
        %v1273 = vadd.f32 %v785, %v1272
        %v1274 = vpop.f32.mrf.mxu0
        %v1275 = vadd.f32 %v787, %v1274
        %v1276 = vpop.f32.mrf.mxu0
        %v1277 = vadd.f32 %v789, %v1276
        %v1278 = vpop.f32.mrf.mxu0
        %v1279 = vadd.f32 %v791, %v1278
        %1280 = vmatprep.mubr.bf16.mxu0 0
        %1281 = vmatmul.mubr.bf16.gmra.mxu0 %v1135
        %v1282 = vpop.f32.mrf.mxu0
        %v1283 = vadd.f32 %v795, %v1282
        %v1284 = vpop.f32.mrf.mxu0
        %v1285 = vadd.f32 %v797, %v1284
        %v1286 = vpop.f32.mrf.mxu0
        %v1287 = vadd.f32 %v799, %v1286
        %v1288 = vpop.f32.mrf.mxu0
        %v1289 = vadd.f32 %v801, %v1288
        %1290 = vdwg.mxu0
        %1291 = vmatprep.subr.bf16.mxu0 0
        %1292 = vmatpush1.bf16.msra.mxu0 0
        %1293 = vmatprep.subr.bf16.mxu0 0
        %1294 = vmatpush1.bf16.msra.mxu0 0
        %1295 = vmatprep.subr.bf16.mxu0 0
        %1296 = vmatpush1.bf16.msra.mxu0 0
        %1297 = vmatprep.subr.bf16.mxu0 0
        %1298 = vmatpush1.bf16.msra.mxu0 0
        %1299 = vmatprep.subr.bf16.mxu0 0
        %1300 = vmatpush1.bf16.msra.mxu0 0
        %1301 = vmatprep.subr.bf16.mxu0 0
        %1302 = vmatpush1.bf16.msra.mxu0 0
        %1303 = vmatprep.subr.bf16.mxu0 0
        %1304 = vmatpush1.bf16.msra.mxu0 0
        %1305 = vmatprep.subr.bf16.mxu0 %v1153
        %1306 = vmatpush1.bf16.msra.mxu0 %v1150
        %1307 = vmatprep.subr.bf16.mxu0 0
        %1308 = vmatpush2.bf16.msra.mxu0 0
        %1309 = vmatprep.subr.bf16.mxu0 0
        %1310 = vmatpush2.bf16.msra.mxu0 0
        %1311 = vmatprep.subr.bf16.mxu0 0
        %1312 = vmatpush2.bf16.msra.mxu0 0
        %1313 = vmatprep.subr.bf16.mxu0 0
        %1314 = vmatpush2.bf16.msra.mxu0 0
        %1315 = vmatprep.subr.bf16.mxu0 0
        %1316 = vmatpush2.bf16.msra.mxu0 0
        %1317 = vmatprep.subr.bf16.mxu0 0
        %1318 = vmatpush2.bf16.msra.mxu0 0
        %1319 = vmatprep.subr.bf16.mxu0 0
        %1320 = vmatpush2.bf16.msra.mxu0 0
        %1321 = vmatprep.subr.bf16.mxu0 0
        %1322 = vmatpush2.bf16.msra.mxu0 0
        %1323 = vmatprep.mubr.bf16.mxu0 0
        %1324 = vmatmul.mubr.bf16.gmra.mxu0 %v1132
        %v1325 = vpop.f32.mrf.mxu0
        %v1326 = vadd.f32 %v838, %v1325
        %v1327 = vpop.f32.mrf.mxu0
        %v1328 = vadd.f32 %v840, %v1327
        %v1329 = vpop.f32.mrf.mxu0
        %v1330 = vadd.f32 %v842, %v1329
        %v1331 = vpop.f32.mrf.mxu0
        %v1332 = vadd.f32 %v844, %v1331
        %1333 = vmatprep.mubr.bf16.mxu0 0
        %1334 = vmatmul.mubr.bf16.gmra.mxu0 %v1135
        %v1335 = vpop.f32.mrf.mxu0
        %v1336 = vadd.f32 %v848, %v1335
        %v1337 = vpop.f32.mrf.mxu0
        %v1338 = vadd.f32 %v850, %v1337
        %v1339 = vpop.f32.mrf.mxu0
        %v1340 = vadd.f32 %v852, %v1339
        %v1341 = vpop.f32.mrf.mxu0
        %v1342 = vadd.f32 %v854, %v1341
        %1343 = vdwg.mxu0
        %1344 = vmatprep.subr.bf16.mxu0 0
        %1345 = vmatpush1.bf16.msra.mxu0 0
        %1346 = vmatprep.subr.bf16.mxu0 0
        %1347 = vmatpush1.bf16.msra.mxu0 0
        %1348 = vmatprep.subr.bf16.mxu0 0
        %1349 = vmatpush1.bf16.msra.mxu0 0
        %1350 = vmatprep.subr.bf16.mxu0 0
        %1351 = vmatpush1.bf16.msra.mxu0 0
        %1352 = vmatprep.subr.bf16.mxu0 0
        %1353 = vmatpush1.bf16.msra.mxu0 0
        %1354 = vmatprep.subr.bf16.mxu0 0
        %1355 = vmatpush1.bf16.msra.mxu0 0
        %1356 = vmatprep.subr.bf16.mxu0 0
        %1357 = vmatpush1.bf16.msra.mxu0 0
        %1358 = vmatprep.subr.bf16.mxu0 %v1159
        %1359 = vmatpush1.bf16.msra.mxu0 %v1156
        %1360 = vmatprep.subr.bf16.mxu0 0
        %1361 = vmatpush2.bf16.msra.mxu0 0
        %1362 = vmatprep.subr.bf16.mxu0 0
        %1363 = vmatpush2.bf16.msra.mxu0 0
        %1364 = vmatprep.subr.bf16.mxu0 0
        %1365 = vmatpush2.bf16.msra.mxu0 0
        %1366 = vmatprep.subr.bf16.mxu0 0
        %1367 = vmatpush2.bf16.msra.mxu0 0
        %1368 = vmatprep.subr.bf16.mxu0 0
        %1369 = vmatpush2.bf16.msra.mxu0 0
        %1370 = vmatprep.subr.bf16.mxu0 0
        %1371 = vmatpush2.bf16.msra.mxu0 0
        %1372 = vmatprep.subr.bf16.mxu0 0
        %1373 = vmatpush2.bf16.msra.mxu0 0
        %1374 = vmatprep.subr.bf16.mxu0 0
        %1375 = vmatpush2.bf16.msra.mxu0 0
        %1376 = vmatprep.mubr.bf16.mxu0 0
        %1377 = vmatmul.mubr.bf16.gmra.mxu0 %v1132
        %v1378 = vpop.f32.mrf.mxu0
        %v1379 = vadd.f32 %v891, %v1378
        %v1380 = vpop.f32.mrf.mxu0
        %v1381 = vadd.f32 %v893, %v1380
        %v1382 = vpop.f32.mrf.mxu0
        %v1383 = vadd.f32 %v895, %v1382
        %v1384 = vpop.f32.mrf.mxu0
        %v1385 = vadd.f32 %v897, %v1384
        %1386 = vmatprep.mubr.bf16.mxu0 0
        %1387 = vmatmul.mubr.bf16.gmra.mxu0 %v1135
        %v1388 = vpop.f32.mrf.mxu0
        %v1389 = vadd.f32 %v901, %v1388
        %v1390 = vpop.f32.mrf.mxu0
        %v1391 = vadd.f32 %v903, %v1390
        %v1392 = vpop.f32.mrf.mxu0
        %v1393 = vadd.f32 %v905, %v1392
        %v1394 = vpop.f32.mrf.mxu0
        %v1395 = vadd.f32 %v907, %v1394
        %1396 = vdwg.mxu0
        %1397 = vmatprep.subr.bf16.mxu0 0
        %1398 = vmatpush1.bf16.msra.mxu0 0
        %1399 = vmatprep.subr.bf16.mxu0 0
        %1400 = vmatpush1.bf16.msra.mxu0 0
        %1401 = vmatprep.subr.bf16.mxu0 0
        %1402 = vmatpush1.bf16.msra.mxu0 0
        %1403 = vmatprep.subr.bf16.mxu0 0
        %1404 = vmatpush1.bf16.msra.mxu0 0
        %1405 = vmatprep.subr.bf16.mxu0 0
        %1406 = vmatpush1.bf16.msra.mxu0 0
        %1407 = vmatprep.subr.bf16.mxu0 0
        %1408 = vmatpush1.bf16.msra.mxu0 0
        %1409 = vmatprep.subr.bf16.mxu0 0
        %1410 = vmatpush1.bf16.msra.mxu0 0
        %1411 = vmatprep.subr.bf16.mxu0 %v1165
        %1412 = vmatpush1.bf16.msra.mxu0 %v1162
        %1413 = vmatprep.subr.bf16.mxu0 0
        %1414 = vmatpush2.bf16.msra.mxu0 0
        %1415 = vmatprep.subr.bf16.mxu0 0
        %1416 = vmatpush2.bf16.msra.mxu0 0
        %1417 = vmatprep.subr.bf16.mxu0 0
        %1418 = vmatpush2.bf16.msra.mxu0 0
        %1419 = vmatprep.subr.bf16.mxu0 0
        %1420 = vmatpush2.bf16.msra.mxu0 0
        %1421 = vmatprep.subr.bf16.mxu0 0
        %1422 = vmatpush2.bf16.msra.mxu0 0
        %1423 = vmatprep.subr.bf16.mxu0 0
        %1424 = vmatpush2.bf16.msra.mxu0 0
        %1425 = vmatprep.subr.bf16.mxu0 0
        %1426 = vmatpush2.bf16.msra.mxu0 0
        %1427 = vmatprep.subr.bf16.mxu0 0
        %1428 = vmatpush2.bf16.msra.mxu0 0
        %1429 = vmatprep.mubr.bf16.mxu0 0
        %1430 = vmatmul.mubr.bf16.gmra.mxu0 %v1132
        %v1431 = vpop.f32.mrf.mxu0
        %v1432 = vadd.f32 %v944, %v1431
        %v1433 = vpop.f32.mrf.mxu0
        %v1434 = vadd.f32 %v946, %v1433
        %v1435 = vpop.f32.mrf.mxu0
        %v1436 = vadd.f32 %v948, %v1435
        %v1437 = vpop.f32.mrf.mxu0
        %v1438 = vadd.f32 %v950, %v1437
        %1439 = vmatprep.mubr.bf16.mxu0 0
        %1440 = vmatmul.mubr.bf16.gmra.mxu0 %v1135
        %v1441 = vpop.f32.mrf.mxu0
        %v1442 = vadd.f32 %v954, %v1441
        %v1443 = vpop.f32.mrf.mxu0
        %v1444 = vadd.f32 %v956, %v1443
        %v1445 = vpop.f32.mrf.mxu0
        %v1446 = vadd.f32 %v958, %v1445
        %v1447 = vpop.f32.mrf.mxu0
        %v1448 = vadd.f32 %v960, %v1447
        %1449 = vdwg.mxu0
        %1450 = vmatprep.subr.bf16.mxu0 0
        %1451 = vmatpush1.bf16.msra.mxu0 0
        %1452 = vmatprep.subr.bf16.mxu0 0
        %1453 = vmatpush1.bf16.msra.mxu0 0
        %1454 = vmatprep.subr.bf16.mxu0 0
        %1455 = vmatpush1.bf16.msra.mxu0 0
        %1456 = vmatprep.subr.bf16.mxu0 0
        %1457 = vmatpush1.bf16.msra.mxu0 0
        %1458 = vmatprep.subr.bf16.mxu0 0
        %1459 = vmatpush1.bf16.msra.mxu0 0
        %1460 = vmatprep.subr.bf16.mxu0 0
        %1461 = vmatpush1.bf16.msra.mxu0 0
        %1462 = vmatprep.subr.bf16.mxu0 0
        %1463 = vmatpush1.bf16.msra.mxu0 0
        %1464 = vmatprep.subr.bf16.mxu0 %v1171
        %1465 = vmatpush1.bf16.msra.mxu0 %v1168
        %1466 = vmatprep.subr.bf16.mxu0 0
        %1467 = vmatpush2.bf16.msra.mxu0 0
        %1468 = vmatprep.subr.bf16.mxu0 0
        %1469 = vmatpush2.bf16.msra.mxu0 0
        %1470 = vmatprep.subr.bf16.mxu0 0
        %1471 = vmatpush2.bf16.msra.mxu0 0
        %1472 = vmatprep.subr.bf16.mxu0 0
        %1473 = vmatpush2.bf16.msra.mxu0 0
        %1474 = vmatprep.subr.bf16.mxu0 0
        %1475 = vmatpush2.bf16.msra.mxu0 0
        %1476 = vmatprep.subr.bf16.mxu0 0
        %1477 = vmatpush2.bf16.msra.mxu0 0
        %1478 = vmatprep.subr.bf16.mxu0 0
        %1479 = vmatpush2.bf16.msra.mxu0 0
        %1480 = vmatprep.subr.bf16.mxu0 0
        %1481 = vmatpush2.bf16.msra.mxu0 0
        %1482 = vmatprep.mubr.bf16.mxu0 0
        %1483 = vmatmul.mubr.bf16.gmra.mxu0 %v1132
        %v1484 = vpop.f32.mrf.mxu0
        %v1485 = vadd.f32 %v997, %v1484
        %v1486 = vpop.f32.mrf.mxu0
        %v1487 = vadd.f32 %v999, %v1486
        %v1488 = vpop.f32.mrf.mxu0
        %v1489 = vadd.f32 %v1001, %v1488
        %v1490 = vpop.f32.mrf.mxu0
        %v1491 = vadd.f32 %v1003, %v1490
        %1492 = vmatprep.mubr.bf16.mxu0 0
        %1493 = vmatmul.mubr.bf16.gmra.mxu0 %v1135
        %v1494 = vpop.f32.mrf.mxu0
        %v1495 = vadd.f32 %v1007, %v1494
        %v1496 = vpop.f32.mrf.mxu0
        %v1497 = vadd.f32 %v1009, %v1496
        %v1498 = vpop.f32.mrf.mxu0
        %v1499 = vadd.f32 %v1011, %v1498
        %v1500 = vpop.f32.mrf.mxu0
        %v1501 = vadd.f32 %v1013, %v1500
        %1502 = vdwg.mxu0
        %1503 = vmatprep.subr.bf16.mxu0 0
        %1504 = vmatpush1.bf16.msra.mxu0 0
        %1505 = vmatprep.subr.bf16.mxu0 0
        %1506 = vmatpush1.bf16.msra.mxu0 0
        %1507 = vmatprep.subr.bf16.mxu0 0
        %1508 = vmatpush1.bf16.msra.mxu0 0
        %1509 = vmatprep.subr.bf16.mxu0 0
        %1510 = vmatpush1.bf16.msra.mxu0 0
        %1511 = vmatprep.subr.bf16.mxu0 0
        %1512 = vmatpush1.bf16.msra.mxu0 0
        %1513 = vmatprep.subr.bf16.mxu0 0
        %1514 = vmatpush1.bf16.msra.mxu0 0
        %1515 = vmatprep.subr.bf16.mxu0 0
        %1516 = vmatpush1.bf16.msra.mxu0 0
        %1517 = vmatprep.subr.bf16.mxu0 %v1177
        %1518 = vmatpush1.bf16.msra.mxu0 %v1174
        %1519 = vmatprep.subr.bf16.mxu0 0
        %1520 = vmatpush2.bf16.msra.mxu0 0
        %1521 = vmatprep.subr.bf16.mxu0 0
        %1522 = vmatpush2.bf16.msra.mxu0 0
        %1523 = vmatprep.subr.bf16.mxu0 0
        %1524 = vmatpush2.bf16.msra.mxu0 0
        %1525 = vmatprep.subr.bf16.mxu0 0
        %1526 = vmatpush2.bf16.msra.mxu0 0
        %1527 = vmatprep.subr.bf16.mxu0 0
        %1528 = vmatpush2.bf16.msra.mxu0 0
        %1529 = vmatprep.subr.bf16.mxu0 0
        %1530 = vmatpush2.bf16.msra.mxu0 0
        %1531 = vmatprep.subr.bf16.mxu0 0
        %1532 = vmatpush2.bf16.msra.mxu0 0
        %1533 = vmatprep.subr.bf16.mxu0 0
        %1534 = vmatpush2.bf16.msra.mxu0 0
        %1535 = vmatprep.mubr.bf16.mxu0 0
        %1536 = vmatmul.mubr.bf16.gmra.mxu0 %v1132
        %v1537 = vpop.f32.mrf.mxu0
        %v1538 = vadd.f32 %v1050, %v1537
        %v1539 = vpop.f32.mrf.mxu0
        %v1540 = vadd.f32 %v1052, %v1539
        %v1541 = vpop.f32.mrf.mxu0
        %v1542 = vadd.f32 %v1054, %v1541
        %v1543 = vpop.f32.mrf.mxu0
        %v1544 = vadd.f32 %v1056, %v1543
        %1545 = vmatprep.mubr.bf16.mxu0 0
        %1546 = vmatmul.mubr.bf16.gmra.mxu0 %v1135
        %v1547 = vpop.f32.mrf.mxu0
        %v1548 = vadd.f32 %v1060, %v1547
        %v1549 = vpop.f32.mrf.mxu0
        %v1550 = vadd.f32 %v1062, %v1549
        %v1551 = vpop.f32.mrf.mxu0
        %v1552 = vadd.f32 %v1064, %v1551
        %v1553 = vpop.f32.mrf.mxu0
        %v1554 = vadd.f32 %v1066, %v1553
        %1555 = vdwg.mxu0
        %1556 = vmatprep.subr.bf16.mxu0 0
        %1557 = vmatpush1.bf16.msra.mxu0 0
        %1558 = vmatprep.subr.bf16.mxu0 0
        %1559 = vmatpush1.bf16.msra.mxu0 0
        %1560 = vmatprep.subr.bf16.mxu0 0
        %1561 = vmatpush1.bf16.msra.mxu0 0
        %1562 = vmatprep.subr.bf16.mxu0 0
        %1563 = vmatpush1.bf16.msra.mxu0 0
        %1564 = vmatprep.subr.bf16.mxu0 0
        %1565 = vmatpush1.bf16.msra.mxu0 0
        %1566 = vmatprep.subr.bf16.mxu0 0
        %1567 = vmatpush1.bf16.msra.mxu0 0
        %1568 = vmatprep.subr.bf16.mxu0 0
        %1569 = vmatpush1.bf16.msra.mxu0 0
        %1570 = vmatprep.subr.bf16.mxu0 %v1183
        %1571 = vmatpush1.bf16.msra.mxu0 %v1180
        %1572 = vmatprep.subr.bf16.mxu0 0
        %1573 = vmatpush2.bf16.msra.mxu0 0
        %1574 = vmatprep.subr.bf16.mxu0 0
        %1575 = vmatpush2.bf16.msra.mxu0 0
        %1576 = vmatprep.subr.bf16.mxu0 0
        %1577 = vmatpush2.bf16.msra.mxu0 0
        %1578 = vmatprep.subr.bf16.mxu0 0
        %1579 = vmatpush2.bf16.msra.mxu0 0
        %1580 = vmatprep.subr.bf16.mxu0 0
        %1581 = vmatpush2.bf16.msra.mxu0 0
        %1582 = vmatprep.subr.bf16.mxu0 0
        %1583 = vmatpush2.bf16.msra.mxu0 0
        %1584 = vmatprep.subr.bf16.mxu0 0
        %1585 = vmatpush2.bf16.msra.mxu0 0
        %1586 = vmatprep.subr.bf16.mxu0 0
        %1587 = vmatpush2.bf16.msra.mxu0 0
        %1588 = vmatprep.mubr.bf16.mxu0 0
        %1589 = vmatmul.mubr.bf16.gmra.mxu0 %v1132
        %v1590 = vpop.f32.mrf.mxu0
        %v1591 = vadd.f32 %v1103, %v1590
        %v1592 = vpop.f32.mrf.mxu0
        %v1593 = vadd.f32 %v1105, %v1592
        %v1594 = vpop.f32.mrf.mxu0
        %v1595 = vadd.f32 %v1107, %v1594
        %v1596 = vpop.f32.mrf.mxu0
        %v1597 = vadd.f32 %v1109, %v1596
        %1598 = vmatprep.mubr.bf16.mxu0 0
        %1599 = vmatmul.mubr.bf16.gmra.mxu0 %v1135
        %v1600 = vpop.f32.mrf.mxu0
        %v1601 = vadd.f32 %v1113, %v1600
        %v1602 = vpop.f32.mrf.mxu0
        %v1603 = vadd.f32 %v1115, %v1602
        %v1604 = vpop.f32.mrf.mxu0
        %v1605 = vadd.f32 %v1117, %v1604
        %v1606 = vpop.f32.mrf.mxu0
        %v1607 = vadd.f32 %v1119, %v1606
        %1608 = vdwg.mxu0
        %s1609 = scalar_lea.vmem [#allocation3], 64
        %v1610 = vld [vmem:[%s1609] sm:$0xf]
        %v1611 = vld [vmem:[%s1609 + $0x4] sm:$0xf]
        %v1612 = vld [vmem:[%s1609 + $0x8] sm:$0xf]
        %v1613 = vld [vmem:[%s1609 + $0xc] sm:$0xf]
        %v1614 = vld [vmem:[%s1609 + $0x10] sm:$0xf]
        %v1615 = vld [vmem:[%s1609 + $0x14] sm:$0xf]
        %v1616 = vld [vmem:[%s1609 + $0x18] sm:$0xf]
        %v1617 = vld [vmem:[%s1609 + $0x1c] sm:$0xf]
        %v1618 = vld [vmem:[%s1609 + $0x20] sm:$0xf]
        %v1619 = vld [vmem:[%s1609 + $0x24] sm:$0xf]
        %v1620 = vld [vmem:[%s1609 + $0x28] sm:$0xf]
        %v1621 = vld [vmem:[%s1609 + $0x2c] sm:$0xf]
        %v1622 = vld [vmem:[%s1609 + $0x30] sm:$0xf]
        %v1623 = vld [vmem:[%s1609 + $0x34] sm:$0xf]
        %v1624 = vld [vmem:[%s1609 + $0x38] sm:$0xf]
        %v1625 = vld [vmem:[%s1609 + $0x3c] sm:$0xf]
        %v1642 = vunpack.c.l.b16 %v1610
        %v1643 = vunpack.c.l.b16 %v1611
        %v1644 = vunpack.c.l.b16 %v1612
        %v1645 = vunpack.c.l.b16 %v1613
        %v1646 = vunpack.c.l.b16 %v1614
        %v1647 = vunpack.c.l.b16 %v1615
        %v1648 = vunpack.c.l.b16 %v1616
        %v1649 = vunpack.c.l.b16 %v1617
        %v1650 = vunpack.c.l.b16 %v1618
        %v1651 = vunpack.c.l.b16 %v1619
        %v1652 = vunpack.c.l.b16 %v1620
        %v1653 = vunpack.c.l.b16 %v1621
        %v1654 = vunpack.c.l.b16 %v1622
        %v1655 = vunpack.c.l.b16 %v1623
        %v1656 = vunpack.c.l.b16 %v1624
        %v1657 = vunpack.c.l.b16 %v1625
        %v1658 = vpack.c.b16 %v1643, %v1642
        %v1659 = vpack.c.b16 %v1645, %v1644
        %v1660 = vpack.c.b16 %v1647, %v1646
        %v1661 = vpack.c.b16 %v1649, %v1648
        %v1662 = vpack.c.b16 %v1651, %v1650
        %v1663 = vpack.c.b16 %v1653, %v1652
        %v1664 = vpack.c.b16 %v1655, %v1654
        %v1665 = vpack.c.b16 %v1657, %v1656
        %1674 = vmatprep.subr.bf16.mxu0 0
        %1675 = vmatpush1.bf16.msra.mxu0 %v1665
        %1676 = vmatprep.subr.bf16.mxu0 0
        %1677 = vmatpush1.bf16.msra.mxu0 %v1664
        %1678 = vmatprep.subr.bf16.mxu0 0
        %1679 = vmatpush1.bf16.msra.mxu0 %v1663
        %1680 = vmatprep.subr.bf16.mxu0 0
        %1681 = vmatpush1.bf16.msra.mxu0 %v1662
        %1682 = vmatprep.subr.bf16.mxu0 0
        %1683 = vmatpush1.bf16.msra.mxu0 %v1661
        %1684 = vmatprep.subr.bf16.mxu0 0
        %1685 = vmatpush1.bf16.msra.mxu0 %v1660
        %1686 = vmatprep.subr.bf16.mxu0 0
        %1687 = vmatpush1.bf16.msra.mxu0 %v1659
        %1688 = vmatprep.subr.bf16.mxu0 0
        %1689 = vmatpush1.bf16.msra.mxu0 %v1658
        %1690 = vmatprep.subr.bf16.mxu0 0
        %1691 = vmatpush2.bf16.msra.mxu0 0
        %1692 = vmatprep.subr.bf16.mxu0 0
        %1693 = vmatpush2.bf16.msra.mxu0 0
        %1694 = vmatprep.subr.bf16.mxu0 0
        %1695 = vmatpush2.bf16.msra.mxu0 0
        %1696 = vmatprep.subr.bf16.mxu0 0
        %1697 = vmatpush2.bf16.msra.mxu0 0
        %1698 = vmatprep.subr.bf16.mxu0 0
        %1699 = vmatpush2.bf16.msra.mxu0 0
        %1700 = vmatprep.subr.bf16.mxu0 0
        %1701 = vmatpush2.bf16.msra.mxu0 0
        %1702 = vmatprep.subr.bf16.mxu0 0
        %1703 = vmatpush2.bf16.msra.mxu0 0
        %1704 = vmatprep.subr.bf16.mxu0 0
        %1705 = vmatpush2.bf16.msra.mxu0 0
        %1706 = vmatprep.mubr.bf16.mxu0 0
        %1707 = vmatmul.mubr.bf16.gmra.mxu0 %v385
        %v1708 = vpop.f32.mrf.mxu0
        %v1709 = vadd.f32 0.0, %v1708
        %v1710 = vpop.f32.mrf.mxu0
        %v1711 = vpop.f32.mrf.mxu0
        %v1712 = vadd.f32 0.0, %v1711
        %v1713 = vpop.f32.mrf.mxu0
        %1714 = vmatprep.mubr.bf16.mxu0 0
        %1715 = vmatmul.mubr.bf16.gmra.mxu0 %v386
        %v1716 = vpop.f32.mrf.mxu0
        %v1717 = vadd.f32 0.0, %v1716
        %v1718 = vpop.f32.mrf.mxu0
        %v1719 = vpop.f32.mrf.mxu0
        %v1720 = vadd.f32 0.0, %v1719
        %v1721 = vpop.f32.mrf.mxu0
        %1722 = vmatprep.mubr.bf16.mxu0 0
        %1723 = vmatmul.mubr.bf16.gmra.mxu0 %v387
        %v1724 = vpop.f32.mrf.mxu0
        %v1725 = vadd.f32 0.0, %v1724
        %v1726 = vpop.f32.mrf.mxu0
        %v1727 = vpop.f32.mrf.mxu0
        %v1728 = vadd.f32 0.0, %v1727
        %v1729 = vpop.f32.mrf.mxu0
        %1730 = vmatprep.mubr.bf16.mxu0 0
        %1731 = vmatmul.mubr.bf16.gmra.mxu0 %v388
        %v1732 = vpop.f32.mrf.mxu0
        %v1733 = vadd.f32 0.0, %v1732
        %v1734 = vpop.f32.mrf.mxu0
        %v1735 = vpop.f32.mrf.mxu0
        %v1736 = vadd.f32 0.0, %v1735
        %v1737 = vpop.f32.mrf.mxu0
        %1738 = vdwg.mxu0
        %v1739 = vpack.c.bf16 %v1712, %v1709
        %v1740 = vpack.c.bf16 %v1720, %v1717
        %v1741 = vpack.c.bf16 %v1728, %v1725
        %v1742 = vpack.c.bf16 %v1736, %v1733
        %s1743 = scalar_lea.vmem %s2, 32
        %v1744 = vld [vmem:[%s1743] sm:$0xf]
        %v1745 = vld [vmem:[%s1743 + $0x4] sm:$0xf]
        %v1746 = vld [vmem:[%s1743 + $0x8] sm:$0xf]
        %v1747 = vld [vmem:[%s1743 + $0xc] sm:$0xf]
        %v1752 = vunpack.c.l.b16 %v1744
        %v1753 = vunpack.c.l.b16 %v1745
        %v1754 = vunpack.c.l.b16 %v1746
        %v1755 = vunpack.c.l.b16 %v1747
        %v1756 = vpack.c.b16 %v1753, %v1752
        %v1757 = vpack.c.b16 %v1755, %v1754
        %v1762 = vunpack.c.l.b16 %v1739
        %v1763 = vunpack.c.h.b16 %v1739
        %v1764 = vunpack.c.l.b16 %v1740
        %v1765 = vunpack.c.h.b16 %v1740
        %v1766 = vunpack.c.l.b16 %v1741
        %v1767 = vunpack.c.h.b16 %v1741
        %v1768 = vunpack.c.l.b16 %v1742
        %v1769 = vunpack.c.h.b16 %v1742
        %v1770 = vpack.i.b16 %v1764, %v1762
        %v1771 = vpack.i.b16 %v1765, %v1763
        %v1772 = vpack.i.b16 %v1768, %v1766
        %v1773 = vpack.i.b16 %v1769, %v1767
        %v1774 = vcombine.low %v1770, %v1772
        %v1775 = vcombine.high %v1770, %v1772
        %v1777 = vunpack.c.l.s4 1966171168
        %v1778 = vunpack.c.0.s8 %v1777
        %v1779 = vlaneseq
        %v1780 = vshrl.u32 %v1779, 7
        %v1781 = vsub.s32 %v1778, %v1780
        %v1782 = vrot.slane %v1774, %v1781
        %v1784 = vunpack.c.l.s4 1966171168
        %v1785 = vunpack.c.0.s8 %v1784
        %v1786 = vlaneseq
        %v1787 = vshrl.u32 %v1786, 7
        %v1788 = vsub.s32 %v1785, %v1787
        %v1789 = vrot.slane %v1775, %v1788
        %v1790 = vcombine.high %v1782, %v1782
        %v1791 = vcombine.high %v1789, %v1789
        %v1793 = vunpack.c.l.s4 1966171168
        %v1794 = vunpack.c.0.s8 %v1793
        %v1795 = vlaneseq
        %v1796 = vshrl.u32 %v1795, 7
        %v1797 = vsub.s32 %v1794, %v1796
        %v1798 = vrot.slane %v1782, %v1797
        %v1800 = vunpack.c.l.s4 1966171168
        %v1801 = vunpack.c.0.s8 %v1800
        %v1802 = vlaneseq
        %v1803 = vshrl.u32 %v1802, 7
        %v1804 = vsub.s32 %v1801, %v1803
        %v1805 = vrot.slane %v1789, %v1804
        %v1807 = vunpack.c.l.s4 1966171168
        %v1808 = vunpack.c.0.s8 %v1807
        %v1809 = vlaneseq
        %v1810 = vshrl.u32 %v1809, 7
        %v1811 = vsub.s32 %v1808, %v1810
        %v1812 = vrot.slane %v1790, %v1811
        %v1814 = vunpack.c.l.s4 1966171168
        %v1815 = vunpack.c.0.s8 %v1814
        %v1816 = vlaneseq
        %v1817 = vshrl.u32 %v1816, 7
        %v1818 = vsub.s32 %v1815, %v1817
        %v1819 = vrot.slane %v1791, %v1818
        %v1820 = vcombine.high %v1798, %v1798
        %v1821 = vcombine.high %v1805, %v1805
        %v1822 = vcombine.high %v1812, %v1812
        %v1823 = vcombine.high %v1819, %v1819
        %v1824 = vcombine.low %v1771, %v1773
        %v1825 = vcombine.high %v1771, %v1773
        %v1827 = vunpack.c.l.s4 1966171168
        %v1828 = vunpack.c.0.s8 %v1827
        %v1829 = vlaneseq
        %v1830 = vshrl.u32 %v1829, 7
        %v1831 = vsub.s32 %v1828, %v1830
        %v1832 = vrot.slane %v1824, %v1831
        %v1834 = vunpack.c.l.s4 1966171168
        %v1835 = vunpack.c.0.s8 %v1834
        %v1836 = vlaneseq
        %v1837 = vshrl.u32 %v1836, 7
        %v1838 = vsub.s32 %v1835, %v1837
        %v1839 = vrot.slane %v1825, %v1838
        %v1840 = vcombine.high %v1832, %v1832
        %v1841 = vcombine.high %v1839, %v1839
        %v1843 = vunpack.c.l.s4 1966171168
        %v1844 = vunpack.c.0.s8 %v1843
        %v1845 = vlaneseq
        %v1846 = vshrl.u32 %v1845, 7
        %v1847 = vsub.s32 %v1844, %v1846
        %v1848 = vrot.slane %v1832, %v1847
        %v1850 = vunpack.c.l.s4 1966171168
        %v1851 = vunpack.c.0.s8 %v1850
        %v1852 = vlaneseq
        %v1853 = vshrl.u32 %v1852, 7
        %v1854 = vsub.s32 %v1851, %v1853
        %v1855 = vrot.slane %v1839, %v1854
        %v1857 = vunpack.c.l.s4 1966171168
        %v1858 = vunpack.c.0.s8 %v1857
        %v1859 = vlaneseq
        %v1860 = vshrl.u32 %v1859, 7
        %v1861 = vsub.s32 %v1858, %v1860
        %v1862 = vrot.slane %v1840, %v1861
        %v1864 = vunpack.c.l.s4 1966171168
        %v1865 = vunpack.c.0.s8 %v1864
        %v1866 = vlaneseq
        %v1867 = vshrl.u32 %v1866, 7
        %v1868 = vsub.s32 %v1865, %v1867
        %v1869 = vrot.slane %v1841, %v1868
        %v1870 = vcombine.high %v1848, %v1848
        %v1871 = vcombine.high %v1855, %v1855
        %v1872 = vcombine.high %v1862, %v1862
        %v1873 = vcombine.high %v1869, %v1869
        %v1875 = vsel %vm641, %v1756, 0
        %v1878 = vsel %vm641, %v1757, 0
        %v1881 = vsel %vm648, %v1798, 0
        %v1884 = vsel %vm648, %v1812, 0
        %v1887 = vsel %vm648, %v1820, 0
        %v1890 = vsel %vm648, %v1822, 0
        %v1893 = vsel %vm648, %v1805, 0
        %v1896 = vsel %vm648, %v1819, 0
        %v1899 = vsel %vm648, %v1821, 0
        %v1902 = vsel %vm648, %v1823, 0
        %v1905 = vsel %vm648, %v1848, 0
        %v1908 = vsel %vm648, %v1862, 0
        %v1911 = vsel %vm648, %v1870, 0
        %v1914 = vsel %vm648, %v1872, 0
        %v1917 = vsel %vm648, %v1855, 0
        %v1920 = vsel %vm648, %v1869, 0
        %v1923 = vsel %vm648, %v1871, 0
        %v1926 = vsel %vm648, %v1873, 0
        %1928 = vmatprep.subr.bf16.mxu0 0
        %1929 = vmatpush1.bf16.msra.mxu0 0
        %1930 = vmatprep.subr.bf16.mxu0 0
        %1931 = vmatpush1.bf16.msra.mxu0 0
        %1932 = vmatprep.subr.bf16.mxu0 0
        %1933 = vmatpush1.bf16.msra.mxu0 0
        %1934 = vmatprep.subr.bf16.mxu0 0
        %1935 = vmatpush1.bf16.msra.mxu0 0
        %1936 = vmatprep.subr.bf16.mxu0 0
        %1937 = vmatpush1.bf16.msra.mxu0 0
        %1938 = vmatprep.subr.bf16.mxu0 0
        %1939 = vmatpush1.bf16.msra.mxu0 0
        %1940 = vmatprep.subr.bf16.mxu0 0
        %1941 = vmatpush1.bf16.msra.mxu0 0
        %1942 = vmatprep.subr.bf16.mxu0 %v1884
        %1943 = vmatpush1.bf16.msra.mxu0 %v1881
        %1944 = vmatprep.subr.bf16.mxu0 0
        %1945 = vmatpush2.bf16.msra.mxu0 0
        %1946 = vmatprep.subr.bf16.mxu0 0
        %1947 = vmatpush2.bf16.msra.mxu0 0
        %1948 = vmatprep.subr.bf16.mxu0 0
        %1949 = vmatpush2.bf16.msra.mxu0 0
        %1950 = vmatprep.subr.bf16.mxu0 0
        %1951 = vmatpush2.bf16.msra.mxu0 0
        %1952 = vmatprep.subr.bf16.mxu0 0
        %1953 = vmatpush2.bf16.msra.mxu0 0
        %1954 = vmatprep.subr.bf16.mxu0 0
        %1955 = vmatpush2.bf16.msra.mxu0 0
        %1956 = vmatprep.subr.bf16.mxu0 0
        %1957 = vmatpush2.bf16.msra.mxu0 0
        %1958 = vmatprep.subr.bf16.mxu0 0
        %1959 = vmatpush2.bf16.msra.mxu0 0
        %1960 = vmatprep.mubr.bf16.mxu0 0
        %1961 = vmatmul.mubr.bf16.gmra.mxu0 %v1875
        %v1962 = vpop.f32.mrf.mxu0
        %v1963 = vadd.f32 0.0, %v1962
        %v1964 = vpop.f32.mrf.mxu0
        %v1965 = vadd.f32 0.0, %v1964
        %v1966 = vpop.f32.mrf.mxu0
        %v1967 = vadd.f32 0.0, %v1966
        %v1968 = vpop.f32.mrf.mxu0
        %v1969 = vadd.f32 0.0, %v1968
        %1970 = vmatprep.mubr.bf16.mxu0 0
        %1971 = vmatmul.mubr.bf16.gmra.mxu0 %v1878
        %v1972 = vpop.f32.mrf.mxu0
        %v1973 = vadd.f32 0.0, %v1972
        %v1974 = vpop.f32.mrf.mxu0
        %v1975 = vadd.f32 0.0, %v1974
        %v1976 = vpop.f32.mrf.mxu0
        %v1977 = vadd.f32 0.0, %v1976
        %v1978 = vpop.f32.mrf.mxu0
        %v1979 = vadd.f32 0.0, %v1978
        %1980 = vdwg.mxu0
        %1981 = vmatprep.subr.bf16.mxu0 0
        %1982 = vmatpush1.bf16.msra.mxu0 0
        %1983 = vmatprep.subr.bf16.mxu0 0
        %1984 = vmatpush1.bf16.msra.mxu0 0
        %1985 = vmatprep.subr.bf16.mxu0 0
        %1986 = vmatpush1.bf16.msra.mxu0 0
        %1987 = vmatprep.subr.bf16.mxu0 0
        %1988 = vmatpush1.bf16.msra.mxu0 0
        %1989 = vmatprep.subr.bf16.mxu0 0
        %1990 = vmatpush1.bf16.msra.mxu0 0
        %1991 = vmatprep.subr.bf16.mxu0 0
        %1992 = vmatpush1.bf16.msra.mxu0 0
        %1993 = vmatprep.subr.bf16.mxu0 0
        %1994 = vmatpush1.bf16.msra.mxu0 0
        %1995 = vmatprep.subr.bf16.mxu0 %v1890
        %1996 = vmatpush1.bf16.msra.mxu0 %v1887
        %1997 = vmatprep.subr.bf16.mxu0 0
        %1998 = vmatpush2.bf16.msra.mxu0 0
        %1999 = vmatprep.subr.bf16.mxu0 0
        %2000 = vmatpush2.bf16.msra.mxu0 0
        %2001 = vmatprep.subr.bf16.mxu0 0
        %2002 = vmatpush2.bf16.msra.mxu0 0
        %2003 = vmatprep.subr.bf16.mxu0 0
        %2004 = vmatpush2.bf16.msra.mxu0 0
        %2005 = vmatprep.subr.bf16.mxu0 0
        %2006 = vmatpush2.bf16.msra.mxu0 0
        %2007 = vmatprep.subr.bf16.mxu0 0
        %2008 = vmatpush2.bf16.msra.mxu0 0
        %2009 = vmatprep.subr.bf16.mxu0 0
        %2010 = vmatpush2.bf16.msra.mxu0 0
        %2011 = vmatprep.subr.bf16.mxu0 0
        %2012 = vmatpush2.bf16.msra.mxu0 0
        %2013 = vmatprep.mubr.bf16.mxu0 0
        %2014 = vmatmul.mubr.bf16.gmra.mxu0 %v1875
        %v2015 = vpop.f32.mrf.mxu0
        %v2016 = vadd.f32 0.0, %v2015
        %v2017 = vpop.f32.mrf.mxu0
        %v2018 = vadd.f32 0.0, %v2017
        %v2019 = vpop.f32.mrf.mxu0
        %v2020 = vadd.f32 0.0, %v2019
        %v2021 = vpop.f32.mrf.mxu0
        %v2022 = vadd.f32 0.0, %v2021
        %2023 = vmatprep.mubr.bf16.mxu0 0
        %2024 = vmatmul.mubr.bf16.gmra.mxu0 %v1878
        %v2025 = vpop.f32.mrf.mxu0
        %v2026 = vadd.f32 0.0, %v2025
        %v2027 = vpop.f32.mrf.mxu0
        %v2028 = vadd.f32 0.0, %v2027
        %v2029 = vpop.f32.mrf.mxu0
        %v2030 = vadd.f32 0.0, %v2029
        %v2031 = vpop.f32.mrf.mxu0
        %v2032 = vadd.f32 0.0, %v2031
        %2033 = vdwg.mxu0
        %2034 = vmatprep.subr.bf16.mxu0 0
        %2035 = vmatpush1.bf16.msra.mxu0 0
        %2036 = vmatprep.subr.bf16.mxu0 0
        %2037 = vmatpush1.bf16.msra.mxu0 0
        %2038 = vmatprep.subr.bf16.mxu0 0
        %2039 = vmatpush1.bf16.msra.mxu0 0
        %2040 = vmatprep.subr.bf16.mxu0 0
        %2041 = vmatpush1.bf16.msra.mxu0 0
        %2042 = vmatprep.subr.bf16.mxu0 0
        %2043 = vmatpush1.bf16.msra.mxu0 0
        %2044 = vmatprep.subr.bf16.mxu0 0
        %2045 = vmatpush1.bf16.msra.mxu0 0
        %2046 = vmatprep.subr.bf16.mxu0 0
        %2047 = vmatpush1.bf16.msra.mxu0 0
        %2048 = vmatprep.subr.bf16.mxu0 %v1896
        %2049 = vmatpush1.bf16.msra.mxu0 %v1893
        %2050 = vmatprep.subr.bf16.mxu0 0
        %2051 = vmatpush2.bf16.msra.mxu0 0
        %2052 = vmatprep.subr.bf16.mxu0 0
        %2053 = vmatpush2.bf16.msra.mxu0 0
        %2054 = vmatprep.subr.bf16.mxu0 0
        %2055 = vmatpush2.bf16.msra.mxu0 0
        %2056 = vmatprep.subr.bf16.mxu0 0
        %2057 = vmatpush2.bf16.msra.mxu0 0
        %2058 = vmatprep.subr.bf16.mxu0 0
        %2059 = vmatpush2.bf16.msra.mxu0 0
        %2060 = vmatprep.subr.bf16.mxu0 0
        %2061 = vmatpush2.bf16.msra.mxu0 0
        %2062 = vmatprep.subr.bf16.mxu0 0
        %2063 = vmatpush2.bf16.msra.mxu0 0
        %2064 = vmatprep.subr.bf16.mxu0 0
        %2065 = vmatpush2.bf16.msra.mxu0 0
        %2066 = vmatprep.mubr.bf16.mxu0 0
        %2067 = vmatmul.mubr.bf16.gmra.mxu0 %v1875
        %v2068 = vpop.f32.mrf.mxu0
        %v2069 = vadd.f32 0.0, %v2068
        %v2070 = vpop.f32.mrf.mxu0
        %v2071 = vadd.f32 0.0, %v2070
        %v2072 = vpop.f32.mrf.mxu0
        %v2073 = vadd.f32 0.0, %v2072
        %v2074 = vpop.f32.mrf.mxu0
        %v2075 = vadd.f32 0.0, %v2074
        %2076 = vmatprep.mubr.bf16.mxu0 0
        %2077 = vmatmul.mubr.bf16.gmra.mxu0 %v1878
        %v2078 = vpop.f32.mrf.mxu0
        %v2079 = vadd.f32 0.0, %v2078
        %v2080 = vpop.f32.mrf.mxu0
        %v2081 = vadd.f32 0.0, %v2080
        %v2082 = vpop.f32.mrf.mxu0
        %v2083 = vadd.f32 0.0, %v2082
        %v2084 = vpop.f32.mrf.mxu0
        %v2085 = vadd.f32 0.0, %v2084
        %2086 = vdwg.mxu0
        %2087 = vmatprep.subr.bf16.mxu0 0
        %2088 = vmatpush1.bf16.msra.mxu0 0
        %2089 = vmatprep.subr.bf16.mxu0 0
        %2090 = vmatpush1.bf16.msra.mxu0 0
        %2091 = vmatprep.subr.bf16.mxu0 0
        %2092 = vmatpush1.bf16.msra.mxu0 0
        %2093 = vmatprep.subr.bf16.mxu0 0
        %2094 = vmatpush1.bf16.msra.mxu0 0
        %2095 = vmatprep.subr.bf16.mxu0 0
        %2096 = vmatpush1.bf16.msra.mxu0 0
        %2097 = vmatprep.subr.bf16.mxu0 0
        %2098 = vmatpush1.bf16.msra.mxu0 0
        %2099 = vmatprep.subr.bf16.mxu0 0
        %2100 = vmatpush1.bf16.msra.mxu0 0
        %2101 = vmatprep.subr.bf16.mxu0 %v1902
        %2102 = vmatpush1.bf16.msra.mxu0 %v1899
        %2103 = vmatprep.subr.bf16.mxu0 0
        %2104 = vmatpush2.bf16.msra.mxu0 0
        %2105 = vmatprep.subr.bf16.mxu0 0
        %2106 = vmatpush2.bf16.msra.mxu0 0
        %2107 = vmatprep.subr.bf16.mxu0 0
        %2108 = vmatpush2.bf16.msra.mxu0 0
        %2109 = vmatprep.subr.bf16.mxu0 0
        %2110 = vmatpush2.bf16.msra.mxu0 0
        %2111 = vmatprep.subr.bf16.mxu0 0
        %2112 = vmatpush2.bf16.msra.mxu0 0
        %2113 = vmatprep.subr.bf16.mxu0 0
        %2114 = vmatpush2.bf16.msra.mxu0 0
        %2115 = vmatprep.subr.bf16.mxu0 0
        %2116 = vmatpush2.bf16.msra.mxu0 0
        %2117 = vmatprep.subr.bf16.mxu0 0
        %2118 = vmatpush2.bf16.msra.mxu0 0
        %2119 = vmatprep.mubr.bf16.mxu0 0
        %2120 = vmatmul.mubr.bf16.gmra.mxu0 %v1875
        %v2121 = vpop.f32.mrf.mxu0
        %v2122 = vadd.f32 0.0, %v2121
        %v2123 = vpop.f32.mrf.mxu0
        %v2124 = vadd.f32 0.0, %v2123
        %v2125 = vpop.f32.mrf.mxu0
        %v2126 = vadd.f32 0.0, %v2125
        %v2127 = vpop.f32.mrf.mxu0
        %v2128 = vadd.f32 0.0, %v2127
        %2129 = vmatprep.mubr.bf16.mxu0 0
        %2130 = vmatmul.mubr.bf16.gmra.mxu0 %v1878
        %v2131 = vpop.f32.mrf.mxu0
        %v2132 = vadd.f32 0.0, %v2131
        %v2133 = vpop.f32.mrf.mxu0
        %v2134 = vadd.f32 0.0, %v2133
        %v2135 = vpop.f32.mrf.mxu0
        %v2136 = vadd.f32 0.0, %v2135
        %v2137 = vpop.f32.mrf.mxu0
        %v2138 = vadd.f32 0.0, %v2137
        %2139 = vdwg.mxu0
        %2140 = vmatprep.subr.bf16.mxu0 0
        %2141 = vmatpush1.bf16.msra.mxu0 0
        %2142 = vmatprep.subr.bf16.mxu0 0
        %2143 = vmatpush1.bf16.msra.mxu0 0
        %2144 = vmatprep.subr.bf16.mxu0 0
        %2145 = vmatpush1.bf16.msra.mxu0 0
        %2146 = vmatprep.subr.bf16.mxu0 0
        %2147 = vmatpush1.bf16.msra.mxu0 0
        %2148 = vmatprep.subr.bf16.mxu0 0
        %2149 = vmatpush1.bf16.msra.mxu0 0
        %2150 = vmatprep.subr.bf16.mxu0 0
        %2151 = vmatpush1.bf16.msra.mxu0 0
        %2152 = vmatprep.subr.bf16.mxu0 0
        %2153 = vmatpush1.bf16.msra.mxu0 0
        %2154 = vmatprep.subr.bf16.mxu0 %v1908
        %2155 = vmatpush1.bf16.msra.mxu0 %v1905
        %2156 = vmatprep.subr.bf16.mxu0 0
        %2157 = vmatpush2.bf16.msra.mxu0 0
        %2158 = vmatprep.subr.bf16.mxu0 0
        %2159 = vmatpush2.bf16.msra.mxu0 0
        %2160 = vmatprep.subr.bf16.mxu0 0
        %2161 = vmatpush2.bf16.msra.mxu0 0
        %2162 = vmatprep.subr.bf16.mxu0 0
        %2163 = vmatpush2.bf16.msra.mxu0 0
        %2164 = vmatprep.subr.bf16.mxu0 0
        %2165 = vmatpush2.bf16.msra.mxu0 0
        %2166 = vmatprep.subr.bf16.mxu0 0
        %2167 = vmatpush2.bf16.msra.mxu0 0
        %2168 = vmatprep.subr.bf16.mxu0 0
        %2169 = vmatpush2.bf16.msra.mxu0 0
        %2170 = vmatprep.subr.bf16.mxu0 0
        %2171 = vmatpush2.bf16.msra.mxu0 0
        %2172 = vmatprep.mubr.bf16.mxu0 0
        %2173 = vmatmul.mubr.bf16.gmra.mxu0 %v1875
        %v2174 = vpop.f32.mrf.mxu0
        %v2175 = vadd.f32 0.0, %v2174
        %v2176 = vpop.f32.mrf.mxu0
        %v2177 = vadd.f32 0.0, %v2176
        %v2178 = vpop.f32.mrf.mxu0
        %v2179 = vadd.f32 0.0, %v2178
        %v2180 = vpop.f32.mrf.mxu0
        %v2181 = vadd.f32 0.0, %v2180
        %2182 = vmatprep.mubr.bf16.mxu0 0
        %2183 = vmatmul.mubr.bf16.gmra.mxu0 %v1878
        %v2184 = vpop.f32.mrf.mxu0
        %v2185 = vadd.f32 0.0, %v2184
        %v2186 = vpop.f32.mrf.mxu0
        %v2187 = vadd.f32 0.0, %v2186
        %v2188 = vpop.f32.mrf.mxu0
        %v2189 = vadd.f32 0.0, %v2188
        %v2190 = vpop.f32.mrf.mxu0
        %v2191 = vadd.f32 0.0, %v2190
        %2192 = vdwg.mxu0
        %2193 = vmatprep.subr.bf16.mxu0 0
        %2194 = vmatpush1.bf16.msra.mxu0 0
        %2195 = vmatprep.subr.bf16.mxu0 0
        %2196 = vmatpush1.bf16.msra.mxu0 0
        %2197 = vmatprep.subr.bf16.mxu0 0
        %2198 = vmatpush1.bf16.msra.mxu0 0
        %2199 = vmatprep.subr.bf16.mxu0 0
        %2200 = vmatpush1.bf16.msra.mxu0 0
        %2201 = vmatprep.subr.bf16.mxu0 0
        %2202 = vmatpush1.bf16.msra.mxu0 0
        %2203 = vmatprep.subr.bf16.mxu0 0
        %2204 = vmatpush1.bf16.msra.mxu0 0
        %2205 = vmatprep.subr.bf16.mxu0 0
        %2206 = vmatpush1.bf16.msra.mxu0 0
        %2207 = vmatprep.subr.bf16.mxu0 %v1914
        %2208 = vmatpush1.bf16.msra.mxu0 %v1911
        %2209 = vmatprep.subr.bf16.mxu0 0
        %2210 = vmatpush2.bf16.msra.mxu0 0
        %2211 = vmatprep.subr.bf16.mxu0 0
        %2212 = vmatpush2.bf16.msra.mxu0 0
        %2213 = vmatprep.subr.bf16.mxu0 0
        %2214 = vmatpush2.bf16.msra.mxu0 0
        %2215 = vmatprep.subr.bf16.mxu0 0
        %2216 = vmatpush2.bf16.msra.mxu0 0
        %2217 = vmatprep.subr.bf16.mxu0 0
        %2218 = vmatpush2.bf16.msra.mxu0 0
        %2219 = vmatprep.subr.bf16.mxu0 0
        %2220 = vmatpush2.bf16.msra.mxu0 0
        %2221 = vmatprep.subr.bf16.mxu0 0
        %2222 = vmatpush2.bf16.msra.mxu0 0
        %2223 = vmatprep.subr.bf16.mxu0 0
        %2224 = vmatpush2.bf16.msra.mxu0 0
        %2225 = vmatprep.mubr.bf16.mxu0 0
        %2226 = vmatmul.mubr.bf16.gmra.mxu0 %v1875
        %v2227 = vpop.f32.mrf.mxu0
        %v2228 = vadd.f32 0.0, %v2227
        %v2229 = vpop.f32.mrf.mxu0
        %v2230 = vadd.f32 0.0, %v2229
        %v2231 = vpop.f32.mrf.mxu0
        %v2232 = vadd.f32 0.0, %v2231
        %v2233 = vpop.f32.mrf.mxu0
        %v2234 = vadd.f32 0.0, %v2233
        %2235 = vmatprep.mubr.bf16.mxu0 0
        %2236 = vmatmul.mubr.bf16.gmra.mxu0 %v1878
        %v2237 = vpop.f32.mrf.mxu0
        %v2238 = vadd.f32 0.0, %v2237
        %v2239 = vpop.f32.mrf.mxu0
        %v2240 = vadd.f32 0.0, %v2239
        %v2241 = vpop.f32.mrf.mxu0
        %v2242 = vadd.f32 0.0, %v2241
        %v2243 = vpop.f32.mrf.mxu0
        %v2244 = vadd.f32 0.0, %v2243
        %2245 = vdwg.mxu0
        %2246 = vmatprep.subr.bf16.mxu0 0
        %2247 = vmatpush1.bf16.msra.mxu0 0
        %2248 = vmatprep.subr.bf16.mxu0 0
        %2249 = vmatpush1.bf16.msra.mxu0 0
        %2250 = vmatprep.subr.bf16.mxu0 0
        %2251 = vmatpush1.bf16.msra.mxu0 0
        %2252 = vmatprep.subr.bf16.mxu0 0
        %2253 = vmatpush1.bf16.msra.mxu0 0
        %2254 = vmatprep.subr.bf16.mxu0 0
        %2255 = vmatpush1.bf16.msra.mxu0 0
        %2256 = vmatprep.subr.bf16.mxu0 0
        %2257 = vmatpush1.bf16.msra.mxu0 0
        %2258 = vmatprep.subr.bf16.mxu0 0
        %2259 = vmatpush1.bf16.msra.mxu0 0
        %2260 = vmatprep.subr.bf16.mxu0 %v1920
        %2261 = vmatpush1.bf16.msra.mxu0 %v1917
        %2262 = vmatprep.subr.bf16.mxu0 0
        %2263 = vmatpush2.bf16.msra.mxu0 0
        %2264 = vmatprep.subr.bf16.mxu0 0
        %2265 = vmatpush2.bf16.msra.mxu0 0
        %2266 = vmatprep.subr.bf16.mxu0 0
        %2267 = vmatpush2.bf16.msra.mxu0 0
        %2268 = vmatprep.subr.bf16.mxu0 0
        %2269 = vmatpush2.bf16.msra.mxu0 0
        %2270 = vmatprep.subr.bf16.mxu0 0
        %2271 = vmatpush2.bf16.msra.mxu0 0
        %2272 = vmatprep.subr.bf16.mxu0 0
        %2273 = vmatpush2.bf16.msra.mxu0 0
        %2274 = vmatprep.subr.bf16.mxu0 0
        %2275 = vmatpush2.bf16.msra.mxu0 0
        %2276 = vmatprep.subr.bf16.mxu0 0
        %2277 = vmatpush2.bf16.msra.mxu0 0
        %2278 = vmatprep.mubr.bf16.mxu0 0
        %2279 = vmatmul.mubr.bf16.gmra.mxu0 %v1875
        %v2280 = vpop.f32.mrf.mxu0
        %v2281 = vadd.f32 0.0, %v2280
        %v2282 = vpop.f32.mrf.mxu0
        %v2283 = vadd.f32 0.0, %v2282
        %v2284 = vpop.f32.mrf.mxu0
        %v2285 = vadd.f32 0.0, %v2284
        %v2286 = vpop.f32.mrf.mxu0
        %v2287 = vadd.f32 0.0, %v2286
        %2288 = vmatprep.mubr.bf16.mxu0 0
        %2289 = vmatmul.mubr.bf16.gmra.mxu0 %v1878
        %v2290 = vpop.f32.mrf.mxu0
        %v2291 = vadd.f32 0.0, %v2290
        %v2292 = vpop.f32.mrf.mxu0
        %v2293 = vadd.f32 0.0, %v2292
        %v2294 = vpop.f32.mrf.mxu0
        %v2295 = vadd.f32 0.0, %v2294
        %v2296 = vpop.f32.mrf.mxu0
        %v2297 = vadd.f32 0.0, %v2296
        %2298 = vdwg.mxu0
        %2299 = vmatprep.subr.bf16.mxu0 0
        %2300 = vmatpush1.bf16.msra.mxu0 0
        %2301 = vmatprep.subr.bf16.mxu0 0
        %2302 = vmatpush1.bf16.msra.mxu0 0
        %2303 = vmatprep.subr.bf16.mxu0 0
        %2304 = vmatpush1.bf16.msra.mxu0 0
        %2305 = vmatprep.subr.bf16.mxu0 0
        %2306 = vmatpush1.bf16.msra.mxu0 0
        %2307 = vmatprep.subr.bf16.mxu0 0
        %2308 = vmatpush1.bf16.msra.mxu0 0
        %2309 = vmatprep.subr.bf16.mxu0 0
        %2310 = vmatpush1.bf16.msra.mxu0 0
        %2311 = vmatprep.subr.bf16.mxu0 0
        %2312 = vmatpush1.bf16.msra.mxu0 0
        %2313 = vmatprep.subr.bf16.mxu0 %v1926
        %2314 = vmatpush1.bf16.msra.mxu0 %v1923
        %2315 = vmatprep.subr.bf16.mxu0 0
        %2316 = vmatpush2.bf16.msra.mxu0 0
        %2317 = vmatprep.subr.bf16.mxu0 0
        %2318 = vmatpush2.bf16.msra.mxu0 0
        %2319 = vmatprep.subr.bf16.mxu0 0
        %2320 = vmatpush2.bf16.msra.mxu0 0
        %2321 = vmatprep.subr.bf16.mxu0 0
        %2322 = vmatpush2.bf16.msra.mxu0 0
        %2323 = vmatprep.subr.bf16.mxu0 0
        %2324 = vmatpush2.bf16.msra.mxu0 0
        %2325 = vmatprep.subr.bf16.mxu0 0
        %2326 = vmatpush2.bf16.msra.mxu0 0
        %2327 = vmatprep.subr.bf16.mxu0 0
        %2328 = vmatpush2.bf16.msra.mxu0 0
        %2329 = vmatprep.subr.bf16.mxu0 0
        %2330 = vmatpush2.bf16.msra.mxu0 0
        %2331 = vmatprep.mubr.bf16.mxu0 0
        %2332 = vmatmul.mubr.bf16.gmra.mxu0 %v1875
        %v2333 = vpop.f32.mrf.mxu0
        %v2334 = vadd.f32 0.0, %v2333
        %v2335 = vpop.f32.mrf.mxu0
        %v2336 = vadd.f32 0.0, %v2335
        %v2337 = vpop.f32.mrf.mxu0
        %v2338 = vadd.f32 0.0, %v2337
        %v2339 = vpop.f32.mrf.mxu0
        %v2340 = vadd.f32 0.0, %v2339
        %2341 = vmatprep.mubr.bf16.mxu0 0
        %2342 = vmatmul.mubr.bf16.gmra.mxu0 %v1878
        %v2343 = vpop.f32.mrf.mxu0
        %v2344 = vadd.f32 0.0, %v2343
        %v2345 = vpop.f32.mrf.mxu0
        %v2346 = vadd.f32 0.0, %v2345
        %v2347 = vpop.f32.mrf.mxu0
        %v2348 = vadd.f32 0.0, %v2347
        %v2349 = vpop.f32.mrf.mxu0
        %v2350 = vadd.f32 0.0, %v2349
        %2351 = vdwg.mxu0
        %v2352 = vadd.f32 %v1220, %v1963
        %v2353 = vadd.f32 %v1222, %v1965
        %v2354 = vadd.f32 %v1273, %v2016
        %v2355 = vadd.f32 %v1275, %v2018
        %v2356 = vadd.f32 %v1326, %v2069
        %v2357 = vadd.f32 %v1328, %v2071
        %v2358 = vadd.f32 %v1379, %v2122
        %v2359 = vadd.f32 %v1381, %v2124
        %v2360 = vadd.f32 %v1432, %v2175
        %v2361 = vadd.f32 %v1434, %v2177
        %v2362 = vadd.f32 %v1485, %v2228
        %v2363 = vadd.f32 %v1487, %v2230
        %v2364 = vadd.f32 %v1538, %v2281
        %v2365 = vadd.f32 %v1540, %v2283
        %v2366 = vadd.f32 %v1591, %v2334
        %v2367 = vadd.f32 %v1593, %v2336
        %v2368 = vadd.f32 %v1224, %v1967
        %v2369 = vadd.f32 %v1226, %v1969
        %v2370 = vadd.f32 %v1277, %v2020
        %v2371 = vadd.f32 %v1279, %v2022
        %v2372 = vadd.f32 %v1330, %v2073
        %v2373 = vadd.f32 %v1332, %v2075
        %v2374 = vadd.f32 %v1383, %v2126
        %v2375 = vadd.f32 %v1385, %v2128
        %v2376 = vadd.f32 %v1436, %v2179
        %v2377 = vadd.f32 %v1438, %v2181
        %v2378 = vadd.f32 %v1489, %v2232
        %v2379 = vadd.f32 %v1491, %v2234
        %v2380 = vadd.f32 %v1542, %v2285
        %v2381 = vadd.f32 %v1544, %v2287
        %v2382 = vadd.f32 %v1595, %v2338
        %v2383 = vadd.f32 %v1597, %v2340
        %v2384 = vadd.f32 %v1230, %v1973
        %v2385 = vadd.f32 %v1232, %v1975
        %v2386 = vadd.f32 %v1283, %v2026
        %v2387 = vadd.f32 %v1285, %v2028
        %v2388 = vadd.f32 %v1336, %v2079
        %v2389 = vadd.f32 %v1338, %v2081
        %v2390 = vadd.f32 %v1389, %v2132
        %v2391 = vadd.f32 %v1391, %v2134
        %v2392 = vadd.f32 %v1442, %v2185
        %v2393 = vadd.f32 %v1444, %v2187
        %v2394 = vadd.f32 %v1495, %v2238
        %v2395 = vadd.f32 %v1497, %v2240
        %v2396 = vadd.f32 %v1548, %v2291
        %v2397 = vadd.f32 %v1550, %v2293
        %v2398 = vadd.f32 %v1601, %v2344
        %v2399 = vadd.f32 %v1603, %v2346
        %v2400 = vadd.f32 %v1234, %v1977
        %v2401 = vadd.f32 %v1236, %v1979
        %v2402 = vadd.f32 %v1287, %v2030
        %v2403 = vadd.f32 %v1289, %v2032
        %v2404 = vadd.f32 %v1340, %v2083
        %v2405 = vadd.f32 %v1342, %v2085
        %v2406 = vadd.f32 %v1393, %v2136
        %v2407 = vadd.f32 %v1395, %v2138
        %v2408 = vadd.f32 %v1446, %v2189
        %v2409 = vadd.f32 %v1448, %v2191
        %v2410 = vadd.f32 %v1499, %v2242
        %v2411 = vadd.f32 %v1501, %v2244
        %v2412 = vadd.f32 %v1552, %v2295
        %v2413 = vadd.f32 %v1554, %v2297
        %v2414 = vadd.f32 %v1605, %v2348
        %v2415 = vadd.f32 %v1607, %v2350
        %s2416 = scalar_lea.vmem [#allocation3], 128
        %v2417 = vld [vmem:[%s2416] sm:$0xf]
        %v2418 = vld [vmem:[%s2416 + $0x4] sm:$0xf]
        %v2419 = vld [vmem:[%s2416 + $0x8] sm:$0xf]
        %v2420 = vld [vmem:[%s2416 + $0xc] sm:$0xf]
        %v2421 = vld [vmem:[%s2416 + $0x10] sm:$0xf]
        %v2422 = vld [vmem:[%s2416 + $0x14] sm:$0xf]
        %v2423 = vld [vmem:[%s2416 + $0x18] sm:$0xf]
        %v2424 = vld [vmem:[%s2416 + $0x1c] sm:$0xf]
        %v2425 = vld [vmem:[%s2416 + $0x20] sm:$0xf]
        %v2426 = vld [vmem:[%s2416 + $0x24] sm:$0xf]
        %v2427 = vld [vmem:[%s2416 + $0x28] sm:$0xf]
        %v2428 = vld [vmem:[%s2416 + $0x2c] sm:$0xf]
        %v2429 = vld [vmem:[%s2416 + $0x30] sm:$0xf]
        %v2430 = vld [vmem:[%s2416 + $0x34] sm:$0xf]
        %v2431 = vld [vmem:[%s2416 + $0x38] sm:$0xf]
        %v2432 = vld [vmem:[%s2416 + $0x3c] sm:$0xf]
        %v2449 = vunpack.c.l.b16 %v2417
        %v2450 = vunpack.c.l.b16 %v2418
        %v2451 = vunpack.c.l.b16 %v2419
        %v2452 = vunpack.c.l.b16 %v2420
        %v2453 = vunpack.c.l.b16 %v2421
        %v2454 = vunpack.c.l.b16 %v2422
        %v2455 = vunpack.c.l.b16 %v2423
        %v2456 = vunpack.c.l.b16 %v2424
        %v2457 = vunpack.c.l.b16 %v2425
        %v2458 = vunpack.c.l.b16 %v2426
        %v2459 = vunpack.c.l.b16 %v2427
        %v2460 = vunpack.c.l.b16 %v2428
        %v2461 = vunpack.c.l.b16 %v2429
        %v2462 = vunpack.c.l.b16 %v2430
        %v2463 = vunpack.c.l.b16 %v2431
        %v2464 = vunpack.c.l.b16 %v2432
        %v2465 = vpack.c.b16 %v2450, %v2449
        %v2466 = vpack.c.b16 %v2452, %v2451
        %v2467 = vpack.c.b16 %v2454, %v2453
        %v2468 = vpack.c.b16 %v2456, %v2455
        %v2469 = vpack.c.b16 %v2458, %v2457
        %v2470 = vpack.c.b16 %v2460, %v2459
        %v2471 = vpack.c.b16 %v2462, %v2461
        %v2472 = vpack.c.b16 %v2464, %v2463
        %2481 = vmatprep.subr.bf16.mxu0 0
        %2482 = vmatpush1.bf16.msra.mxu0 %v2472
        %2483 = vmatprep.subr.bf16.mxu0 0
        %2484 = vmatpush1.bf16.msra.mxu0 %v2471
        %2485 = vmatprep.subr.bf16.mxu0 0
        %2486 = vmatpush1.bf16.msra.mxu0 %v2470
        %2487 = vmatprep.subr.bf16.mxu0 0
        %2488 = vmatpush1.bf16.msra.mxu0 %v2469
        %2489 = vmatprep.subr.bf16.mxu0 0
        %2490 = vmatpush1.bf16.msra.mxu0 %v2468
        %2491 = vmatprep.subr.bf16.mxu0 0
        %2492 = vmatpush1.bf16.msra.mxu0 %v2467
        %2493 = vmatprep.subr.bf16.mxu0 0
        %2494 = vmatpush1.bf16.msra.mxu0 %v2466
        %2495 = vmatprep.subr.bf16.mxu0 0
        %2496 = vmatpush1.bf16.msra.mxu0 %v2465
        %2497 = vmatprep.subr.bf16.mxu0 0
        %2498 = vmatpush2.bf16.msra.mxu0 0
        %2499 = vmatprep.subr.bf16.mxu0 0
        %2500 = vmatpush2.bf16.msra.mxu0 0
        %2501 = vmatprep.subr.bf16.mxu0 0
        %2502 = vmatpush2.bf16.msra.mxu0 0
        %2503 = vmatprep.subr.bf16.mxu0 0
        %2504 = vmatpush2.bf16.msra.mxu0 0
        %2505 = vmatprep.subr.bf16.mxu0 0
        %2506 = vmatpush2.bf16.msra.mxu0 0
        %2507 = vmatprep.subr.bf16.mxu0 0
        %2508 = vmatpush2.bf16.msra.mxu0 0
        %2509 = vmatprep.subr.bf16.mxu0 0
        %2510 = vmatpush2.bf16.msra.mxu0 0
        %2511 = vmatprep.subr.bf16.mxu0 0
        %2512 = vmatpush2.bf16.msra.mxu0 0
        %2513 = vmatprep.mubr.bf16.mxu0 0
        %2514 = vmatmul.mubr.bf16.gmra.mxu0 %v385
        %v2515 = vpop.f32.mrf.mxu0
        %v2516 = vadd.f32 0.0, %v2515
        %v2517 = vpop.f32.mrf.mxu0
        %v2518 = vpop.f32.mrf.mxu0
        %v2519 = vadd.f32 0.0, %v2518
        %v2520 = vpop.f32.mrf.mxu0
        %2521 = vmatprep.mubr.bf16.mxu0 0
        %2522 = vmatmul.mubr.bf16.gmra.mxu0 %v386
        %v2523 = vpop.f32.mrf.mxu0
        %v2524 = vadd.f32 0.0, %v2523
        %v2525 = vpop.f32.mrf.mxu0
        %v2526 = vpop.f32.mrf.mxu0
        %v2527 = vadd.f32 0.0, %v2526
        %v2528 = vpop.f32.mrf.mxu0
        %2529 = vmatprep.mubr.bf16.mxu0 0
        %2530 = vmatmul.mubr.bf16.gmra.mxu0 %v387
        %v2531 = vpop.f32.mrf.mxu0
        %v2532 = vadd.f32 0.0, %v2531
        %v2533 = vpop.f32.mrf.mxu0
        %v2534 = vpop.f32.mrf.mxu0
        %v2535 = vadd.f32 0.0, %v2534
        %v2536 = vpop.f32.mrf.mxu0
        %2537 = vmatprep.mubr.bf16.mxu0 0
        %2538 = vmatmul.mubr.bf16.gmra.mxu0 %v388
        %v2539 = vpop.f32.mrf.mxu0
        %v2540 = vadd.f32 0.0, %v2539
        %v2541 = vpop.f32.mrf.mxu0
        %v2542 = vpop.f32.mrf.mxu0
        %v2543 = vadd.f32 0.0, %v2542
        %v2544 = vpop.f32.mrf.mxu0
        %2545 = vdwg.mxu0
        %v2546 = vpack.c.bf16 %v2519, %v2516
        %v2547 = vpack.c.bf16 %v2527, %v2524
        %v2548 = vpack.c.bf16 %v2535, %v2532
        %v2549 = vpack.c.bf16 %v2543, %v2540
        %s2550 = scalar_lea.vmem %s2, 48
        %v2551 = vld [vmem:[%s2550] sm:$0xf]
        %v2552 = vld [vmem:[%s2550 + $0x4] sm:$0xf]
        %v2553 = vld [vmem:[%s2550 + $0x8] sm:$0xf]
        %v2554 = vld [vmem:[%s2550 + $0xc] sm:$0xf]
        %v2559 = vunpack.c.l.b16 %v2551
        %v2560 = vunpack.c.l.b16 %v2552
        %v2561 = vunpack.c.l.b16 %v2553
        %v2562 = vunpack.c.l.b16 %v2554
        %v2563 = vpack.c.b16 %v2560, %v2559
        %v2564 = vpack.c.b16 %v2562, %v2561
        %v2569 = vunpack.c.l.b16 %v2546
        %v2570 = vunpack.c.h.b16 %v2546
        %v2571 = vunpack.c.l.b16 %v2547
        %v2572 = vunpack.c.h.b16 %v2547
        %v2573 = vunpack.c.l.b16 %v2548
        %v2574 = vunpack.c.h.b16 %v2548
        %v2575 = vunpack.c.l.b16 %v2549
        %v2576 = vunpack.c.h.b16 %v2549
        %v2577 = vpack.i.b16 %v2571, %v2569
        %v2578 = vpack.i.b16 %v2572, %v2570
        %v2579 = vpack.i.b16 %v2575, %v2573
        %v2580 = vpack.i.b16 %v2576, %v2574
        %v2581 = vcombine.low %v2577, %v2579
        %v2582 = vcombine.high %v2577, %v2579
        %v2584 = vunpack.c.l.s4 1966171168
        %v2585 = vunpack.c.0.s8 %v2584
        %v2586 = vlaneseq
        %v2587 = vshrl.u32 %v2586, 7
        %v2588 = vsub.s32 %v2585, %v2587
        %v2589 = vrot.slane %v2581, %v2588
        %v2591 = vunpack.c.l.s4 1966171168
        %v2592 = vunpack.c.0.s8 %v2591
        %v2593 = vlaneseq
        %v2594 = vshrl.u32 %v2593, 7
        %v2595 = vsub.s32 %v2592, %v2594
        %v2596 = vrot.slane %v2582, %v2595
        %v2597 = vcombine.high %v2589, %v2589
        %v2598 = vcombine.high %v2596, %v2596
        %v2600 = vunpack.c.l.s4 1966171168
        %v2601 = vunpack.c.0.s8 %v2600
        %v2602 = vlaneseq
        %v2603 = vshrl.u32 %v2602, 7
        %v2604 = vsub.s32 %v2601, %v2603
        %v2605 = vrot.slane %v2589, %v2604
        %v2607 = vunpack.c.l.s4 1966171168
        %v2608 = vunpack.c.0.s8 %v2607
        %v2609 = vlaneseq
        %v2610 = vshrl.u32 %v2609, 7
        %v2611 = vsub.s32 %v2608, %v2610
        %v2612 = vrot.slane %v2596, %v2611
        %v2614 = vunpack.c.l.s4 1966171168
        %v2615 = vunpack.c.0.s8 %v2614
        %v2616 = vlaneseq
        %v2617 = vshrl.u32 %v2616, 7
        %v2618 = vsub.s32 %v2615, %v2617
        %v2619 = vrot.slane %v2597, %v2618
        %v2621 = vunpack.c.l.s4 1966171168
        %v2622 = vunpack.c.0.s8 %v2621
        %v2623 = vlaneseq
        %v2624 = vshrl.u32 %v2623, 7
        %v2625 = vsub.s32 %v2622, %v2624
        %v2626 = vrot.slane %v2598, %v2625
        %v2627 = vcombine.high %v2605, %v2605
        %v2628 = vcombine.high %v2612, %v2612
        %v2629 = vcombine.high %v2619, %v2619
        %v2630 = vcombine.high %v2626, %v2626
        %v2631 = vcombine.low %v2578, %v2580
        %v2632 = vcombine.high %v2578, %v2580
        %v2634 = vunpack.c.l.s4 1966171168
        %v2635 = vunpack.c.0.s8 %v2634
        %v2636 = vlaneseq
        %v2637 = vshrl.u32 %v2636, 7
        %v2638 = vsub.s32 %v2635, %v2637
        %v2639 = vrot.slane %v2631, %v2638
        %v2641 = vunpack.c.l.s4 1966171168
        %v2642 = vunpack.c.0.s8 %v2641
        %v2643 = vlaneseq
        %v2644 = vshrl.u32 %v2643, 7
        %v2645 = vsub.s32 %v2642, %v2644
        %v2646 = vrot.slane %v2632, %v2645
        %v2647 = vcombine.high %v2639, %v2639
        %v2648 = vcombine.high %v2646, %v2646
        %v2650 = vunpack.c.l.s4 1966171168
        %v2651 = vunpack.c.0.s8 %v2650
        %v2652 = vlaneseq
        %v2653 = vshrl.u32 %v2652, 7
        %v2654 = vsub.s32 %v2651, %v2653
        %v2655 = vrot.slane %v2639, %v2654
        %v2657 = vunpack.c.l.s4 1966171168
        %v2658 = vunpack.c.0.s8 %v2657
        %v2659 = vlaneseq
        %v2660 = vshrl.u32 %v2659, 7
        %v2661 = vsub.s32 %v2658, %v2660
        %v2662 = vrot.slane %v2646, %v2661
        %v2664 = vunpack.c.l.s4 1966171168
        %v2665 = vunpack.c.0.s8 %v2664
        %v2666 = vlaneseq
        %v2667 = vshrl.u32 %v2666, 7
        %v2668 = vsub.s32 %v2665, %v2667
        %v2669 = vrot.slane %v2647, %v2668
        %v2671 = vunpack.c.l.s4 1966171168
        %v2672 = vunpack.c.0.s8 %v2671
        %v2673 = vlaneseq
        %v2674 = vshrl.u32 %v2673, 7
        %v2675 = vsub.s32 %v2672, %v2674
        %v2676 = vrot.slane %v2648, %v2675
        %v2677 = vcombine.high %v2655, %v2655
        %v2678 = vcombine.high %v2662, %v2662
        %v2679 = vcombine.high %v2669, %v2669
        %v2680 = vcombine.high %v2676, %v2676
        %v2682 = vsel %vm641, %v2563, 0
        %v2685 = vsel %vm641, %v2564, 0
        %v2688 = vsel %vm648, %v2605, 0
        %v2691 = vsel %vm648, %v2619, 0
        %v2694 = vsel %vm648, %v2627, 0
        %v2697 = vsel %vm648, %v2629, 0
        %v2700 = vsel %vm648, %v2612, 0
        %v2703 = vsel %vm648, %v2626, 0
        %v2706 = vsel %vm648, %v2628, 0
        %v2709 = vsel %vm648, %v2630, 0
        %v2712 = vsel %vm648, %v2655, 0
        %v2715 = vsel %vm648, %v2669, 0
        %v2718 = vsel %vm648, %v2677, 0
        %v2721 = vsel %vm648, %v2679, 0
        %v2724 = vsel %vm648, %v2662, 0
        %v2727 = vsel %vm648, %v2676, 0
        %v2730 = vsel %vm648, %v2678, 0
        %v2733 = vsel %vm648, %v2680, 0
        %2735 = vmatprep.subr.bf16.mxu0 0
        %2736 = vmatpush1.bf16.msra.mxu0 0
        %2737 = vmatprep.subr.bf16.mxu0 0
        %2738 = vmatpush1.bf16.msra.mxu0 0
        %2739 = vmatprep.subr.bf16.mxu0 0
        %2740 = vmatpush1.bf16.msra.mxu0 0
        %2741 = vmatprep.subr.bf16.mxu0 0
        %2742 = vmatpush1.bf16.msra.mxu0 0
        %2743 = vmatprep.subr.bf16.mxu0 0
        %2744 = vmatpush1.bf16.msra.mxu0 0
        %2745 = vmatprep.subr.bf16.mxu0 0
        %2746 = vmatpush1.bf16.msra.mxu0 0
        %2747 = vmatprep.subr.bf16.mxu0 0
        %2748 = vmatpush1.bf16.msra.mxu0 0
        %2749 = vmatprep.subr.bf16.mxu0 %v2691
        %2750 = vmatpush1.bf16.msra.mxu0 %v2688
        %2751 = vmatprep.subr.bf16.mxu0 0
        %2752 = vmatpush2.bf16.msra.mxu0 0
        %2753 = vmatprep.subr.bf16.mxu0 0
        %2754 = vmatpush2.bf16.msra.mxu0 0
        %2755 = vmatprep.subr.bf16.mxu0 0
        %2756 = vmatpush2.bf16.msra.mxu0 0
        %2757 = vmatprep.subr.bf16.mxu0 0
        %2758 = vmatpush2.bf16.msra.mxu0 0
        %2759 = vmatprep.subr.bf16.mxu0 0
        %2760 = vmatpush2.bf16.msra.mxu0 0
        %2761 = vmatprep.subr.bf16.mxu0 0
        %2762 = vmatpush2.bf16.msra.mxu0 0
        %2763 = vmatprep.subr.bf16.mxu0 0
        %2764 = vmatpush2.bf16.msra.mxu0 0
        %2765 = vmatprep.subr.bf16.mxu0 0
        %2766 = vmatpush2.bf16.msra.mxu0 0
        %2767 = vmatprep.mubr.bf16.mxu0 0
        %2768 = vmatmul.mubr.bf16.gmra.mxu0 %v2682
        %v2769 = vpop.f32.mrf.mxu0
        %v2770 = vadd.f32 0.0, %v2769
        %v2771 = vpop.f32.mrf.mxu0
        %v2772 = vadd.f32 0.0, %v2771
        %v2773 = vpop.f32.mrf.mxu0
        %v2774 = vadd.f32 0.0, %v2773
        %v2775 = vpop.f32.mrf.mxu0
        %v2776 = vadd.f32 0.0, %v2775
        %2777 = vmatprep.mubr.bf16.mxu0 0
        %2778 = vmatmul.mubr.bf16.gmra.mxu0 %v2685
        %v2779 = vpop.f32.mrf.mxu0
        %v2780 = vadd.f32 0.0, %v2779
        %v2781 = vpop.f32.mrf.mxu0
        %v2782 = vadd.f32 0.0, %v2781
        %v2783 = vpop.f32.mrf.mxu0
        %v2784 = vadd.f32 0.0, %v2783
        %v2785 = vpop.f32.mrf.mxu0
        %v2786 = vadd.f32 0.0, %v2785
        %2787 = vdwg.mxu0
        %2788 = vmatprep.subr.bf16.mxu0 0
        %2789 = vmatpush1.bf16.msra.mxu0 0
        %2790 = vmatprep.subr.bf16.mxu0 0
        %2791 = vmatpush1.bf16.msra.mxu0 0
        %2792 = vmatprep.subr.bf16.mxu0 0
        %2793 = vmatpush1.bf16.msra.mxu0 0
        %2794 = vmatprep.subr.bf16.mxu0 0
        %2795 = vmatpush1.bf16.msra.mxu0 0
        %2796 = vmatprep.subr.bf16.mxu0 0
        %2797 = vmatpush1.bf16.msra.mxu0 0
        %2798 = vmatprep.subr.bf16.mxu0 0
        %2799 = vmatpush1.bf16.msra.mxu0 0
        %2800 = vmatprep.subr.bf16.mxu0 0
        %2801 = vmatpush1.bf16.msra.mxu0 0
        %2802 = vmatprep.subr.bf16.mxu0 %v2697
        %2803 = vmatpush1.bf16.msra.mxu0 %v2694
        %2804 = vmatprep.subr.bf16.mxu0 0
        %2805 = vmatpush2.bf16.msra.mxu0 0
        %2806 = vmatprep.subr.bf16.mxu0 0
        %2807 = vmatpush2.bf16.msra.mxu0 0
        %2808 = vmatprep.subr.bf16.mxu0 0
        %2809 = vmatpush2.bf16.msra.mxu0 0
        %2810 = vmatprep.subr.bf16.mxu0 0
        %2811 = vmatpush2.bf16.msra.mxu0 0
        %2812 = vmatprep.subr.bf16.mxu0 0
        %2813 = vmatpush2.bf16.msra.mxu0 0
        %2814 = vmatprep.subr.bf16.mxu0 0
        %2815 = vmatpush2.bf16.msra.mxu0 0
        %2816 = vmatprep.subr.bf16.mxu0 0
        %2817 = vmatpush2.bf16.msra.mxu0 0
        %2818 = vmatprep.subr.bf16.mxu0 0
        %2819 = vmatpush2.bf16.msra.mxu0 0
        %2820 = vmatprep.mubr.bf16.mxu0 0
        %2821 = vmatmul.mubr.bf16.gmra.mxu0 %v2682
        %v2822 = vpop.f32.mrf.mxu0
        %v2823 = vadd.f32 0.0, %v2822
        %v2824 = vpop.f32.mrf.mxu0
        %v2825 = vadd.f32 0.0, %v2824
        %v2826 = vpop.f32.mrf.mxu0
        %v2827 = vadd.f32 0.0, %v2826
        %v2828 = vpop.f32.mrf.mxu0
        %v2829 = vadd.f32 0.0, %v2828
        %2830 = vmatprep.mubr.bf16.mxu0 0
        %2831 = vmatmul.mubr.bf16.gmra.mxu0 %v2685
        %v2832 = vpop.f32.mrf.mxu0
        %v2833 = vadd.f32 0.0, %v2832
        %v2834 = vpop.f32.mrf.mxu0
        %v2835 = vadd.f32 0.0, %v2834
        %v2836 = vpop.f32.mrf.mxu0
        %v2837 = vadd.f32 0.0, %v2836
        %v2838 = vpop.f32.mrf.mxu0
        %v2839 = vadd.f32 0.0, %v2838
        %2840 = vdwg.mxu0
        %2841 = vmatprep.subr.bf16.mxu0 0
        %2842 = vmatpush1.bf16.msra.mxu0 0
        %2843 = vmatprep.subr.bf16.mxu0 0
        %2844 = vmatpush1.bf16.msra.mxu0 0
        %2845 = vmatprep.subr.bf16.mxu0 0
        %2846 = vmatpush1.bf16.msra.mxu0 0
        %2847 = vmatprep.subr.bf16.mxu0 0
        %2848 = vmatpush1.bf16.msra.mxu0 0
        %2849 = vmatprep.subr.bf16.mxu0 0
        %2850 = vmatpush1.bf16.msra.mxu0 0
        %2851 = vmatprep.subr.bf16.mxu0 0
        %2852 = vmatpush1.bf16.msra.mxu0 0
        %2853 = vmatprep.subr.bf16.mxu0 0
        %2854 = vmatpush1.bf16.msra.mxu0 0
        %2855 = vmatprep.subr.bf16.mxu0 %v2703
        %2856 = vmatpush1.bf16.msra.mxu0 %v2700
        %2857 = vmatprep.subr.bf16.mxu0 0
        %2858 = vmatpush2.bf16.msra.mxu0 0
        %2859 = vmatprep.subr.bf16.mxu0 0
        %2860 = vmatpush2.bf16.msra.mxu0 0
        %2861 = vmatprep.subr.bf16.mxu0 0
        %2862 = vmatpush2.bf16.msra.mxu0 0
        %2863 = vmatprep.subr.bf16.mxu0 0
        %2864 = vmatpush2.bf16.msra.mxu0 0
        %2865 = vmatprep.subr.bf16.mxu0 0
        %2866 = vmatpush2.bf16.msra.mxu0 0
        %2867 = vmatprep.subr.bf16.mxu0 0
        %2868 = vmatpush2.bf16.msra.mxu0 0
        %2869 = vmatprep.subr.bf16.mxu0 0
        %2870 = vmatpush2.bf16.msra.mxu0 0
        %2871 = vmatprep.subr.bf16.mxu0 0
        %2872 = vmatpush2.bf16.msra.mxu0 0
        %2873 = vmatprep.mubr.bf16.mxu0 0
        %2874 = vmatmul.mubr.bf16.gmra.mxu0 %v2682
        %v2875 = vpop.f32.mrf.mxu0
        %v2876 = vadd.f32 0.0, %v2875
        %v2877 = vpop.f32.mrf.mxu0
        %v2878 = vadd.f32 0.0, %v2877
        %v2879 = vpop.f32.mrf.mxu0
        %v2880 = vadd.f32 0.0, %v2879
        %v2881 = vpop.f32.mrf.mxu0
        %v2882 = vadd.f32 0.0, %v2881
        %2883 = vmatprep.mubr.bf16.mxu0 0
        %2884 = vmatmul.mubr.bf16.gmra.mxu0 %v2685
        %v2885 = vpop.f32.mrf.mxu0
        %v2886 = vadd.f32 0.0, %v2885
        %v2887 = vpop.f32.mrf.mxu0
        %v2888 = vadd.f32 0.0, %v2887
        %v2889 = vpop.f32.mrf.mxu0
        %v2890 = vadd.f32 0.0, %v2889
        %v2891 = vpop.f32.mrf.mxu0
        %v2892 = vadd.f32 0.0, %v2891
        %2893 = vdwg.mxu0
        %2894 = vmatprep.subr.bf16.mxu0 0
        %2895 = vmatpush1.bf16.msra.mxu0 0
        %2896 = vmatprep.subr.bf16.mxu0 0
        %2897 = vmatpush1.bf16.msra.mxu0 0
        %2898 = vmatprep.subr.bf16.mxu0 0
        %2899 = vmatpush1.bf16.msra.mxu0 0
        %2900 = vmatprep.subr.bf16.mxu0 0
        %2901 = vmatpush1.bf16.msra.mxu0 0
        %2902 = vmatprep.subr.bf16.mxu0 0
        %2903 = vmatpush1.bf16.msra.mxu0 0
        %2904 = vmatprep.subr.bf16.mxu0 0
        %2905 = vmatpush1.bf16.msra.mxu0 0
        %2906 = vmatprep.subr.bf16.mxu0 0
        %2907 = vmatpush1.bf16.msra.mxu0 0
        %2908 = vmatprep.subr.bf16.mxu0 %v2709
        %2909 = vmatpush1.bf16.msra.mxu0 %v2706
        %2910 = vmatprep.subr.bf16.mxu0 0
        %2911 = vmatpush2.bf16.msra.mxu0 0
        %2912 = vmatprep.subr.bf16.mxu0 0
        %2913 = vmatpush2.bf16.msra.mxu0 0
        %2914 = vmatprep.subr.bf16.mxu0 0
        %2915 = vmatpush2.bf16.msra.mxu0 0
        %2916 = vmatprep.subr.bf16.mxu0 0
        %2917 = vmatpush2.bf16.msra.mxu0 0
        %2918 = vmatprep.subr.bf16.mxu0 0
        %2919 = vmatpush2.bf16.msra.mxu0 0
        %2920 = vmatprep.subr.bf16.mxu0 0
        %2921 = vmatpush2.bf16.msra.mxu0 0
        %2922 = vmatprep.subr.bf16.mxu0 0
        %2923 = vmatpush2.bf16.msra.mxu0 0
        %2924 = vmatprep.subr.bf16.mxu0 0
        %2925 = vmatpush2.bf16.msra.mxu0 0
        %2926 = vmatprep.mubr.bf16.mxu0 0
        %2927 = vmatmul.mubr.bf16.gmra.mxu0 %v2682
        %v2928 = vpop.f32.mrf.mxu0
        %v2929 = vadd.f32 0.0, %v2928
        %v2930 = vpop.f32.mrf.mxu0
        %v2931 = vadd.f32 0.0, %v2930
        %v2932 = vpop.f32.mrf.mxu0
        %v2933 = vadd.f32 0.0, %v2932
        %v2934 = vpop.f32.mrf.mxu0
        %v2935 = vadd.f32 0.0, %v2934
        %2936 = vmatprep.mubr.bf16.mxu0 0
        %2937 = vmatmul.mubr.bf16.gmra.mxu0 %v2685
        %v2938 = vpop.f32.mrf.mxu0
        %v2939 = vadd.f32 0.0, %v2938
        %v2940 = vpop.f32.mrf.mxu0
        %v2941 = vadd.f32 0.0, %v2940
        %v2942 = vpop.f32.mrf.mxu0
        %v2943 = vadd.f32 0.0, %v2942
        %v2944 = vpop.f32.mrf.mxu0
        %v2945 = vadd.f32 0.0, %v2944
        %2946 = vdwg.mxu0
        %2947 = vmatprep.subr.bf16.mxu0 0
        %2948 = vmatpush1.bf16.msra.mxu0 0
        %2949 = vmatprep.subr.bf16.mxu0 0
        %2950 = vmatpush1.bf16.msra.mxu0 0
        %2951 = vmatprep.subr.bf16.mxu0 0
        %2952 = vmatpush1.bf16.msra.mxu0 0
        %2953 = vmatprep.subr.bf16.mxu0 0
        %2954 = vmatpush1.bf16.msra.mxu0 0
        %2955 = vmatprep.subr.bf16.mxu0 0
        %2956 = vmatpush1.bf16.msra.mxu0 0
        %2957 = vmatprep.subr.bf16.mxu0 0
        %2958 = vmatpush1.bf16.msra.mxu0 0
        %2959 = vmatprep.subr.bf16.mxu0 0
        %2960 = vmatpush1.bf16.msra.mxu0 0
        %2961 = vmatprep.subr.bf16.mxu0 %v2715
        %2962 = vmatpush1.bf16.msra.mxu0 %v2712
        %2963 = vmatprep.subr.bf16.mxu0 0
        %2964 = vmatpush2.bf16.msra.mxu0 0
        %2965 = vmatprep.subr.bf16.mxu0 0
        %2966 = vmatpush2.bf16.msra.mxu0 0
        %2967 = vmatprep.subr.bf16.mxu0 0
        %2968 = vmatpush2.bf16.msra.mxu0 0
        %2969 = vmatprep.subr.bf16.mxu0 0
        %2970 = vmatpush2.bf16.msra.mxu0 0
        %2971 = vmatprep.subr.bf16.mxu0 0
        %2972 = vmatpush2.bf16.msra.mxu0 0
        %2973 = vmatprep.subr.bf16.mxu0 0
        %2974 = vmatpush2.bf16.msra.mxu0 0
        %2975 = vmatprep.subr.bf16.mxu0 0
        %2976 = vmatpush2.bf16.msra.mxu0 0
        %2977 = vmatprep.subr.bf16.mxu0 0
        %2978 = vmatpush2.bf16.msra.mxu0 0
        %2979 = vmatprep.mubr.bf16.mxu0 0
        %2980 = vmatmul.mubr.bf16.gmra.mxu0 %v2682
        %v2981 = vpop.f32.mrf.mxu0
        %v2982 = vadd.f32 0.0, %v2981
        %v2983 = vpop.f32.mrf.mxu0
        %v2984 = vadd.f32 0.0, %v2983
        %v2985 = vpop.f32.mrf.mxu0
        %v2986 = vadd.f32 0.0, %v2985
        %v2987 = vpop.f32.mrf.mxu0
        %v2988 = vadd.f32 0.0, %v2987
        %2989 = vmatprep.mubr.bf16.mxu0 0
        %2990 = vmatmul.mubr.bf16.gmra.mxu0 %v2685
        %v2991 = vpop.f32.mrf.mxu0
        %v2992 = vadd.f32 0.0, %v2991
        %v2993 = vpop.f32.mrf.mxu0
        %v2994 = vadd.f32 0.0, %v2993
        %v2995 = vpop.f32.mrf.mxu0
        %v2996 = vadd.f32 0.0, %v2995
        %v2997 = vpop.f32.mrf.mxu0
        %v2998 = vadd.f32 0.0, %v2997
        %2999 = vdwg.mxu0
        %3000 = vmatprep.subr.bf16.mxu0 0
        %3001 = vmatpush1.bf16.msra.mxu0 0
        %3002 = vmatprep.subr.bf16.mxu0 0
        %3003 = vmatpush1.bf16.msra.mxu0 0
        %3004 = vmatprep.subr.bf16.mxu0 0
        %3005 = vmatpush1.bf16.msra.mxu0 0
        %3006 = vmatprep.subr.bf16.mxu0 0
        %3007 = vmatpush1.bf16.msra.mxu0 0
        %3008 = vmatprep.subr.bf16.mxu0 0
        %3009 = vmatpush1.bf16.msra.mxu0 0
        %3010 = vmatprep.subr.bf16.mxu0 0
        %3011 = vmatpush1.bf16.msra.mxu0 0
        %3012 = vmatprep.subr.bf16.mxu0 0
        %3013 = vmatpush1.bf16.msra.mxu0 0
        %3014 = vmatprep.subr.bf16.mxu0 %v2721
        %3015 = vmatpush1.bf16.msra.mxu0 %v2718
        %3016 = vmatprep.subr.bf16.mxu0 0
        %3017 = vmatpush2.bf16.msra.mxu0 0
        %3018 = vmatprep.subr.bf16.mxu0 0
        %3019 = vmatpush2.bf16.msra.mxu0 0
        %3020 = vmatprep.subr.bf16.mxu0 0
        %3021 = vmatpush2.bf16.msra.mxu0 0
        %3022 = vmatprep.subr.bf16.mxu0 0
        %3023 = vmatpush2.bf16.msra.mxu0 0
        %3024 = vmatprep.subr.bf16.mxu0 0
        %3025 = vmatpush2.bf16.msra.mxu0 0
        %3026 = vmatprep.subr.bf16.mxu0 0
        %3027 = vmatpush2.bf16.msra.mxu0 0
        %3028 = vmatprep.subr.bf16.mxu0 0
        %3029 = vmatpush2.bf16.msra.mxu0 0
        %3030 = vmatprep.subr.bf16.mxu0 0
        %3031 = vmatpush2.bf16.msra.mxu0 0
        %3032 = vmatprep.mubr.bf16.mxu0 0
        %3033 = vmatmul.mubr.bf16.gmra.mxu0 %v2682
        %v3034 = vpop.f32.mrf.mxu0
        %v3035 = vadd.f32 0.0, %v3034
        %v3036 = vpop.f32.mrf.mxu0
        %v3037 = vadd.f32 0.0, %v3036
        %v3038 = vpop.f32.mrf.mxu0
        %v3039 = vadd.f32 0.0, %v3038
        %v3040 = vpop.f32.mrf.mxu0
        %v3041 = vadd.f32 0.0, %v3040
        %3042 = vmatprep.mubr.bf16.mxu0 0
        %3043 = vmatmul.mubr.bf16.gmra.mxu0 %v2685
        %v3044 = vpop.f32.mrf.mxu0
        %v3045 = vadd.f32 0.0, %v3044
        %v3046 = vpop.f32.mrf.mxu0
        %v3047 = vadd.f32 0.0, %v3046
        %v3048 = vpop.f32.mrf.mxu0
        %v3049 = vadd.f32 0.0, %v3048
        %v3050 = vpop.f32.mrf.mxu0
        %v3051 = vadd.f32 0.0, %v3050
        %3052 = vdwg.mxu0
        %3053 = vmatprep.subr.bf16.mxu0 0
        %3054 = vmatpush1.bf16.msra.mxu0 0
        %3055 = vmatprep.subr.bf16.mxu0 0
        %3056 = vmatpush1.bf16.msra.mxu0 0
        %3057 = vmatprep.subr.bf16.mxu0 0
        %3058 = vmatpush1.bf16.msra.mxu0 0
        %3059 = vmatprep.subr.bf16.mxu0 0
        %3060 = vmatpush1.bf16.msra.mxu0 0
        %3061 = vmatprep.subr.bf16.mxu0 0
        %3062 = vmatpush1.bf16.msra.mxu0 0
        %3063 = vmatprep.subr.bf16.mxu0 0
        %3064 = vmatpush1.bf16.msra.mxu0 0
        %3065 = vmatprep.subr.bf16.mxu0 0
        %3066 = vmatpush1.bf16.msra.mxu0 0
        %3067 = vmatprep.subr.bf16.mxu0 %v2727
        %3068 = vmatpush1.bf16.msra.mxu0 %v2724
        %3069 = vmatprep.subr.bf16.mxu0 0
        %3070 = vmatpush2.bf16.msra.mxu0 0
        %3071 = vmatprep.subr.bf16.mxu0 0
        %3072 = vmatpush2.bf16.msra.mxu0 0
        %3073 = vmatprep.subr.bf16.mxu0 0
        %3074 = vmatpush2.bf16.msra.mxu0 0
        %3075 = vmatprep.subr.bf16.mxu0 0
        %3076 = vmatpush2.bf16.msra.mxu0 0
        %3077 = vmatprep.subr.bf16.mxu0 0
        %3078 = vmatpush2.bf16.msra.mxu0 0
        %3079 = vmatprep.subr.bf16.mxu0 0
        %3080 = vmatpush2.bf16.msra.mxu0 0
        %3081 = vmatprep.subr.bf16.mxu0 0
        %3082 = vmatpush2.bf16.msra.mxu0 0
        %3083 = vmatprep.subr.bf16.mxu0 0
        %3084 = vmatpush2.bf16.msra.mxu0 0
        %3085 = vmatprep.mubr.bf16.mxu0 0
        %3086 = vmatmul.mubr.bf16.gmra.mxu0 %v2682
        %v3087 = vpop.f32.mrf.mxu0
        %v3088 = vadd.f32 0.0, %v3087
        %v3089 = vpop.f32.mrf.mxu0
        %v3090 = vadd.f32 0.0, %v3089
        %v3091 = vpop.f32.mrf.mxu0
        %v3092 = vadd.f32 0.0, %v3091
        %v3093 = vpop.f32.mrf.mxu0
        %v3094 = vadd.f32 0.0, %v3093
        %3095 = vmatprep.mubr.bf16.mxu0 0
        %3096 = vmatmul.mubr.bf16.gmra.mxu0 %v2685
        %v3097 = vpop.f32.mrf.mxu0
        %v3098 = vadd.f32 0.0, %v3097
        %v3099 = vpop.f32.mrf.mxu0
        %v3100 = vadd.f32 0.0, %v3099
        %v3101 = vpop.f32.mrf.mxu0
        %v3102 = vadd.f32 0.0, %v3101
        %v3103 = vpop.f32.mrf.mxu0
        %v3104 = vadd.f32 0.0, %v3103
        %3105 = vdwg.mxu0
        %3106 = vmatprep.subr.bf16.mxu0 0
        %3107 = vmatpush1.bf16.msra.mxu0 0
        %3108 = vmatprep.subr.bf16.mxu0 0
        %3109 = vmatpush1.bf16.msra.mxu0 0
        %3110 = vmatprep.subr.bf16.mxu0 0
        %3111 = vmatpush1.bf16.msra.mxu0 0
        %3112 = vmatprep.subr.bf16.mxu0 0
        %3113 = vmatpush1.bf16.msra.mxu0 0
        %3114 = vmatprep.subr.bf16.mxu0 0
        %3115 = vmatpush1.bf16.msra.mxu0 0
        %3116 = vmatprep.subr.bf16.mxu0 0
        %3117 = vmatpush1.bf16.msra.mxu0 0
        %3118 = vmatprep.subr.bf16.mxu0 0
        %3119 = vmatpush1.bf16.msra.mxu0 0
        %3120 = vmatprep.subr.bf16.mxu0 %v2733
        %3121 = vmatpush1.bf16.msra.mxu0 %v2730
        %3122 = vmatprep.subr.bf16.mxu0 0
        %3123 = vmatpush2.bf16.msra.mxu0 0
        %3124 = vmatprep.subr.bf16.mxu0 0
        %3125 = vmatpush2.bf16.msra.mxu0 0
        %3126 = vmatprep.subr.bf16.mxu0 0
        %3127 = vmatpush2.bf16.msra.mxu0 0
        %3128 = vmatprep.subr.bf16.mxu0 0
        %3129 = vmatpush2.bf16.msra.mxu0 0
        %3130 = vmatprep.subr.bf16.mxu0 0
        %3131 = vmatpush2.bf16.msra.mxu0 0
        %3132 = vmatprep.subr.bf16.mxu0 0
        %3133 = vmatpush2.bf16.msra.mxu0 0
        %3134 = vmatprep.subr.bf16.mxu0 0
        %3135 = vmatpush2.bf16.msra.mxu0 0
        %3136 = vmatprep.subr.bf16.mxu0 0
        %3137 = vmatpush2.bf16.msra.mxu0 0
        %3138 = vmatprep.mubr.bf16.mxu0 0
        %3139 = vmatmul.mubr.bf16.gmra.mxu0 %v2682
        %v3140 = vpop.f32.mrf.mxu0
        %v3141 = vadd.f32 0.0, %v3140
        %v3142 = vpop.f32.mrf.mxu0
        %v3143 = vadd.f32 0.0, %v3142
        %v3144 = vpop.f32.mrf.mxu0
        %v3145 = vadd.f32 0.0, %v3144
        %v3146 = vpop.f32.mrf.mxu0
        %v3147 = vadd.f32 0.0, %v3146
        %3148 = vmatprep.mubr.bf16.mxu0 0
        %3149 = vmatmul.mubr.bf16.gmra.mxu0 %v2685
        %v3150 = vpop.f32.mrf.mxu0
        %v3151 = vadd.f32 0.0, %v3150
        %v3152 = vpop.f32.mrf.mxu0
        %v3153 = vadd.f32 0.0, %v3152
        %v3154 = vpop.f32.mrf.mxu0
        %v3155 = vadd.f32 0.0, %v3154
        %v3156 = vpop.f32.mrf.mxu0
        %v3157 = vadd.f32 0.0, %v3156
        %3158 = vdwg.mxu0
        %v3159 = vadd.f32 %v2352, %v2770
        %v3160 = vadd.f32 %v2353, %v2772
        %v3161 = vadd.f32 %v2354, %v2823
        %v3162 = vadd.f32 %v2355, %v2825
        %v3163 = vadd.f32 %v2356, %v2876
        %v3164 = vadd.f32 %v2357, %v2878
        %v3165 = vadd.f32 %v2358, %v2929
        %v3166 = vadd.f32 %v2359, %v2931
        %v3167 = vadd.f32 %v2360, %v2982
        %v3168 = vadd.f32 %v2361, %v2984
        %v3169 = vadd.f32 %v2362, %v3035
        %v3170 = vadd.f32 %v2363, %v3037
        %v3171 = vadd.f32 %v2364, %v3088
        %v3172 = vadd.f32 %v2365, %v3090
        %v3173 = vadd.f32 %v2366, %v3141
        %v3174 = vadd.f32 %v2367, %v3143
        %v3175 = vadd.f32 %v2368, %v2774
        %v3176 = vadd.f32 %v2369, %v2776
        %v3177 = vadd.f32 %v2370, %v2827
        %v3178 = vadd.f32 %v2371, %v2829
        %v3179 = vadd.f32 %v2372, %v2880
        %v3180 = vadd.f32 %v2373, %v2882
        %v3181 = vadd.f32 %v2374, %v2933
        %v3182 = vadd.f32 %v2375, %v2935
        %v3183 = vadd.f32 %v2376, %v2986
        %v3184 = vadd.f32 %v2377, %v2988
        %v3185 = vadd.f32 %v2378, %v3039
        %v3186 = vadd.f32 %v2379, %v3041
        %v3187 = vadd.f32 %v2380, %v3092
        %v3188 = vadd.f32 %v2381, %v3094
        %v3189 = vadd.f32 %v2382, %v3145
        %v3190 = vadd.f32 %v2383, %v3147
        %v3191 = vadd.f32 %v2384, %v2780
        %v3192 = vadd.f32 %v2385, %v2782
        %v3193 = vadd.f32 %v2386, %v2833
        %v3194 = vadd.f32 %v2387, %v2835
        %v3195 = vadd.f32 %v2388, %v2886
        %v3196 = vadd.f32 %v2389, %v2888
        %v3197 = vadd.f32 %v2390, %v2939
        %v3198 = vadd.f32 %v2391, %v2941
        %v3199 = vadd.f32 %v2392, %v2992
        %v3200 = vadd.f32 %v2393, %v2994
        %v3201 = vadd.f32 %v2394, %v3045
        %v3202 = vadd.f32 %v2395, %v3047
        %v3203 = vadd.f32 %v2396, %v3098
        %v3204 = vadd.f32 %v2397, %v3100
        %v3205 = vadd.f32 %v2398, %v3151
        %v3206 = vadd.f32 %v2399, %v3153
        %v3207 = vadd.f32 %v2400, %v2784
        %v3208 = vadd.f32 %v2401, %v2786
        %v3209 = vadd.f32 %v2402, %v2837
        %v3210 = vadd.f32 %v2403, %v2839
        %v3211 = vadd.f32 %v2404, %v2890
        %v3212 = vadd.f32 %v2405, %v2892
        %v3213 = vadd.f32 %v2406, %v2943
        %v3214 = vadd.f32 %v2407, %v2945
        %v3215 = vadd.f32 %v2408, %v2996
        %v3216 = vadd.f32 %v2409, %v2998
        %v3217 = vadd.f32 %v2410, %v3049
        %v3218 = vadd.f32 %v2411, %v3051
        %v3219 = vadd.f32 %v2412, %v3102
        %v3220 = vadd.f32 %v2413, %v3104
        %v3221 = vadd.f32 %v2414, %v3155
        %v3222 = vadd.f32 %v2415, %v3157
        %s3223 = scalar_lea.vmem [#allocation3], 192
        %v3224 = vld [vmem:[%s3223] sm:$0xf]
        %v3225 = vld [vmem:[%s3223 + $0x4] sm:$0xf]
        %v3226 = vld [vmem:[%s3223 + $0x8] sm:$0xf]
        %v3227 = vld [vmem:[%s3223 + $0xc] sm:$0xf]
        %v3228 = vld [vmem:[%s3223 + $0x10] sm:$0xf]
        %v3229 = vld [vmem:[%s3223 + $0x14] sm:$0xf]
        %v3230 = vld [vmem:[%s3223 + $0x18] sm:$0xf]
        %v3231 = vld [vmem:[%s3223 + $0x1c] sm:$0xf]
        %v3232 = vld [vmem:[%s3223 + $0x20] sm:$0xf]
        %v3233 = vld [vmem:[%s3223 + $0x24] sm:$0xf]
        %v3234 = vld [vmem:[%s3223 + $0x28] sm:$0xf]
        %v3235 = vld [vmem:[%s3223 + $0x2c] sm:$0xf]
        %v3236 = vld [vmem:[%s3223 + $0x30] sm:$0xf]
        %v3237 = vld [vmem:[%s3223 + $0x34] sm:$0xf]
        %v3238 = vld [vmem:[%s3223 + $0x38] sm:$0xf]
        %v3239 = vld [vmem:[%s3223 + $0x3c] sm:$0xf]
        %v3256 = vunpack.c.l.b16 %v3224
        %v3257 = vunpack.c.l.b16 %v3225
        %v3258 = vunpack.c.l.b16 %v3226
        %v3259 = vunpack.c.l.b16 %v3227
        %v3260 = vunpack.c.l.b16 %v3228
        %v3261 = vunpack.c.l.b16 %v3229
        %v3262 = vunpack.c.l.b16 %v3230
        %v3263 = vunpack.c.l.b16 %v3231
        %v3264 = vunpack.c.l.b16 %v3232
        %v3265 = vunpack.c.l.b16 %v3233
        %v3266 = vunpack.c.l.b16 %v3234
        %v3267 = vunpack.c.l.b16 %v3235
        %v3268 = vunpack.c.l.b16 %v3236
        %v3269 = vunpack.c.l.b16 %v3237
        %v3270 = vunpack.c.l.b16 %v3238
        %v3271 = vunpack.c.l.b16 %v3239
        %v3272 = vpack.c.b16 %v3257, %v3256
        %v3273 = vpack.c.b16 %v3259, %v3258
        %v3274 = vpack.c.b16 %v3261, %v3260
        %v3275 = vpack.c.b16 %v3263, %v3262
        %v3276 = vpack.c.b16 %v3265, %v3264
        %v3277 = vpack.c.b16 %v3267, %v3266
        %v3278 = vpack.c.b16 %v3269, %v3268
        %v3279 = vpack.c.b16 %v3271, %v3270
        %3288 = vmatprep.subr.bf16.mxu0 0
        %3289 = vmatpush1.bf16.msra.mxu0 %v3279
        %3290 = vmatprep.subr.bf16.mxu0 0
        %3291 = vmatpush1.bf16.msra.mxu0 %v3278
        %3292 = vmatprep.subr.bf16.mxu0 0
        %3293 = vmatpush1.bf16.msra.mxu0 %v3277
        %3294 = vmatprep.subr.bf16.mxu0 0
        %3295 = vmatpush1.bf16.msra.mxu0 %v3276
        %3296 = vmatprep.subr.bf16.mxu0 0
        %3297 = vmatpush1.bf16.msra.mxu0 %v3275
        %3298 = vmatprep.subr.bf16.mxu0 0
        %3299 = vmatpush1.bf16.msra.mxu0 %v3274
        %3300 = vmatprep.subr.bf16.mxu0 0
        %3301 = vmatpush1.bf16.msra.mxu0 %v3273
        %3302 = vmatprep.subr.bf16.mxu0 0
        %3303 = vmatpush1.bf16.msra.mxu0 %v3272
        %3304 = vmatprep.subr.bf16.mxu0 0
        %3305 = vmatpush2.bf16.msra.mxu0 0
        %3306 = vmatprep.subr.bf16.mxu0 0
        %3307 = vmatpush2.bf16.msra.mxu0 0
        %3308 = vmatprep.subr.bf16.mxu0 0
        %3309 = vmatpush2.bf16.msra.mxu0 0
        %3310 = vmatprep.subr.bf16.mxu0 0
        %3311 = vmatpush2.bf16.msra.mxu0 0
        %3312 = vmatprep.subr.bf16.mxu0 0
        %3313 = vmatpush2.bf16.msra.mxu0 0
        %3314 = vmatprep.subr.bf16.mxu0 0
        %3315 = vmatpush2.bf16.msra.mxu0 0
        %3316 = vmatprep.subr.bf16.mxu0 0
        %3317 = vmatpush2.bf16.msra.mxu0 0
        %3318 = vmatprep.subr.bf16.mxu0 0
        %3319 = vmatpush2.bf16.msra.mxu0 0
        %3320 = vmatprep.mubr.bf16.mxu0 0
        %3321 = vmatmul.mubr.bf16.gmra.mxu0 %v385
        %v3322 = vpop.f32.mrf.mxu0
        %v3323 = vadd.f32 0.0, %v3322
        %v3324 = vpop.f32.mrf.mxu0
        %v3325 = vpop.f32.mrf.mxu0
        %v3326 = vadd.f32 0.0, %v3325
        %v3327 = vpop.f32.mrf.mxu0
        %3328 = vmatprep.mubr.bf16.mxu0 0
        %3329 = vmatmul.mubr.bf16.gmra.mxu0 %v386
        %v3330 = vpop.f32.mrf.mxu0
        %v3331 = vadd.f32 0.0, %v3330
        %v3332 = vpop.f32.mrf.mxu0
        %v3333 = vpop.f32.mrf.mxu0
        %v3334 = vadd.f32 0.0, %v3333
        %v3335 = vpop.f32.mrf.mxu0
        %3336 = vmatprep.mubr.bf16.mxu0 0
        %3337 = vmatmul.mubr.bf16.gmra.mxu0 %v387
        %v3338 = vpop.f32.mrf.mxu0
        %v3339 = vadd.f32 0.0, %v3338
        %v3340 = vpop.f32.mrf.mxu0
        %v3341 = vpop.f32.mrf.mxu0
        %v3342 = vadd.f32 0.0, %v3341
        %v3343 = vpop.f32.mrf.mxu0
        %3344 = vmatprep.mubr.bf16.mxu0 0
        %3345 = vmatmul.mubr.bf16.gmra.mxu0 %v388
        %v3346 = vpop.f32.mrf.mxu0
        %v3347 = vadd.f32 0.0, %v3346
        %v3348 = vpop.f32.mrf.mxu0
        %v3349 = vpop.f32.mrf.mxu0
        %v3350 = vadd.f32 0.0, %v3349
        %v3351 = vpop.f32.mrf.mxu0
        %3352 = vdwg.mxu0
        %v3353 = vpack.c.bf16 %v3326, %v3323
        %v3354 = vpack.c.bf16 %v3334, %v3331
        %v3355 = vpack.c.bf16 %v3342, %v3339
        %v3356 = vpack.c.bf16 %v3350, %v3347
        %s3357 = scalar_lea.vmem %s2, 64
        %v3358 = vld [vmem:[%s3357] sm:$0xf]
        %v3359 = vld [vmem:[%s3357 + $0x4] sm:$0xf]
        %v3360 = vld [vmem:[%s3357 + $0x8] sm:$0xf]
        %v3361 = vld [vmem:[%s3357 + $0xc] sm:$0xf]
        %v3366 = vunpack.c.l.b16 %v3358
        %v3367 = vunpack.c.l.b16 %v3359
        %v3368 = vunpack.c.l.b16 %v3360
        %v3369 = vunpack.c.l.b16 %v3361
        %v3370 = vpack.c.b16 %v3367, %v3366
        %v3371 = vpack.c.b16 %v3369, %v3368
        %v3376 = vunpack.c.l.b16 %v3353
        %v3377 = vunpack.c.h.b16 %v3353
        %v3378 = vunpack.c.l.b16 %v3354
        %v3379 = vunpack.c.h.b16 %v3354
        %v3380 = vunpack.c.l.b16 %v3355
        %v3381 = vunpack.c.h.b16 %v3355
        %v3382 = vunpack.c.l.b16 %v3356
        %v3383 = vunpack.c.h.b16 %v3356
        %v3384 = vpack.i.b16 %v3378, %v3376
        %v3385 = vpack.i.b16 %v3379, %v3377
        %v3386 = vpack.i.b16 %v3382, %v3380
        %v3387 = vpack.i.b16 %v3383, %v3381
        %v3388 = vcombine.low %v3384, %v3386
        %v3389 = vcombine.high %v3384, %v3386
        %v3391 = vunpack.c.l.s4 1966171168
        %v3392 = vunpack.c.0.s8 %v3391
        %v3393 = vlaneseq
        %v3394 = vshrl.u32 %v3393, 7
        %v3395 = vsub.s32 %v3392, %v3394
        %v3396 = vrot.slane %v3388, %v3395
        %v3398 = vunpack.c.l.s4 1966171168
        %v3399 = vunpack.c.0.s8 %v3398
        %v3400 = vlaneseq
        %v3401 = vshrl.u32 %v3400, 7
        %v3402 = vsub.s32 %v3399, %v3401
        %v3403 = vrot.slane %v3389, %v3402
        %v3404 = vcombine.high %v3396, %v3396
        %v3405 = vcombine.high %v3403, %v3403
        %v3407 = vunpack.c.l.s4 1966171168
        %v3408 = vunpack.c.0.s8 %v3407
        %v3409 = vlaneseq
        %v3410 = vshrl.u32 %v3409, 7
        %v3411 = vsub.s32 %v3408, %v3410
        %v3412 = vrot.slane %v3396, %v3411
        %v3414 = vunpack.c.l.s4 1966171168
        %v3415 = vunpack.c.0.s8 %v3414
        %v3416 = vlaneseq
        %v3417 = vshrl.u32 %v3416, 7
        %v3418 = vsub.s32 %v3415, %v3417
        %v3419 = vrot.slane %v3403, %v3418
        %v3421 = vunpack.c.l.s4 1966171168
        %v3422 = vunpack.c.0.s8 %v3421
        %v3423 = vlaneseq
        %v3424 = vshrl.u32 %v3423, 7
        %v3425 = vsub.s32 %v3422, %v3424
        %v3426 = vrot.slane %v3404, %v3425
        %v3428 = vunpack.c.l.s4 1966171168
        %v3429 = vunpack.c.0.s8 %v3428
        %v3430 = vlaneseq
        %v3431 = vshrl.u32 %v3430, 7
        %v3432 = vsub.s32 %v3429, %v3431
        %v3433 = vrot.slane %v3405, %v3432
        %v3434 = vcombine.high %v3412, %v3412
        %v3435 = vcombine.high %v3419, %v3419
        %v3436 = vcombine.high %v3426, %v3426
        %v3437 = vcombine.high %v3433, %v3433
        %v3438 = vcombine.low %v3385, %v3387
        %v3439 = vcombine.high %v3385, %v3387
        %v3441 = vunpack.c.l.s4 1966171168
        %v3442 = vunpack.c.0.s8 %v3441
        %v3443 = vlaneseq
        %v3444 = vshrl.u32 %v3443, 7
        %v3445 = vsub.s32 %v3442, %v3444
        %v3446 = vrot.slane %v3438, %v3445
        %v3448 = vunpack.c.l.s4 1966171168
        %v3449 = vunpack.c.0.s8 %v3448
        %v3450 = vlaneseq
        %v3451 = vshrl.u32 %v3450, 7
        %v3452 = vsub.s32 %v3449, %v3451
        %v3453 = vrot.slane %v3439, %v3452
        %v3454 = vcombine.high %v3446, %v3446
        %v3455 = vcombine.high %v3453, %v3453
        %v3457 = vunpack.c.l.s4 1966171168
        %v3458 = vunpack.c.0.s8 %v3457
        %v3459 = vlaneseq
        %v3460 = vshrl.u32 %v3459, 7
        %v3461 = vsub.s32 %v3458, %v3460
        %v3462 = vrot.slane %v3446, %v3461
        %v3464 = vunpack.c.l.s4 1966171168
        %v3465 = vunpack.c.0.s8 %v3464
        %v3466 = vlaneseq
        %v3467 = vshrl.u32 %v3466, 7
        %v3468 = vsub.s32 %v3465, %v3467
        %v3469 = vrot.slane %v3453, %v3468
        %v3471 = vunpack.c.l.s4 1966171168
        %v3472 = vunpack.c.0.s8 %v3471
        %v3473 = vlaneseq
        %v3474 = vshrl.u32 %v3473, 7
        %v3475 = vsub.s32 %v3472, %v3474
        %v3476 = vrot.slane %v3454, %v3475
        %v3478 = vunpack.c.l.s4 1966171168
        %v3479 = vunpack.c.0.s8 %v3478
        %v3480 = vlaneseq
        %v3481 = vshrl.u32 %v3480, 7
        %v3482 = vsub.s32 %v3479, %v3481
        %v3483 = vrot.slane %v3455, %v3482
        %v3484 = vcombine.high %v3462, %v3462
        %v3485 = vcombine.high %v3469, %v3469
        %v3486 = vcombine.high %v3476, %v3476
        %v3487 = vcombine.high %v3483, %v3483
        %v3489 = vsel %vm641, %v3370, 0
        %v3492 = vsel %vm641, %v3371, 0
        %v3495 = vsel %vm648, %v3412, 0
        %v3498 = vsel %vm648, %v3426, 0
        %v3501 = vsel %vm648, %v3434, 0
        %v3504 = vsel %vm648, %v3436, 0
        %v3507 = vsel %vm648, %v3419, 0
        %v3510 = vsel %vm648, %v3433, 0
        %v3513 = vsel %vm648, %v3435, 0
        %v3516 = vsel %vm648, %v3437, 0
        %v3519 = vsel %vm648, %v3462, 0
        %v3522 = vsel %vm648, %v3476, 0
        %v3525 = vsel %vm648, %v3484, 0
        %v3528 = vsel %vm648, %v3486, 0
        %v3531 = vsel %vm648, %v3469, 0
        %v3534 = vsel %vm648, %v3483, 0
        %v3537 = vsel %vm648, %v3485, 0
        %v3540 = vsel %vm648, %v3487, 0
        %3542 = vmatprep.subr.bf16.mxu0 0
        %3543 = vmatpush1.bf16.msra.mxu0 0
        %3544 = vmatprep.subr.bf16.mxu0 0
        %3545 = vmatpush1.bf16.msra.mxu0 0
        %3546 = vmatprep.subr.bf16.mxu0 0
        %3547 = vmatpush1.bf16.msra.mxu0 0
        %3548 = vmatprep.subr.bf16.mxu0 0
        %3549 = vmatpush1.bf16.msra.mxu0 0
        %3550 = vmatprep.subr.bf16.mxu0 0
        %3551 = vmatpush1.bf16.msra.mxu0 0
        %3552 = vmatprep.subr.bf16.mxu0 0
        %3553 = vmatpush1.bf16.msra.mxu0 0
        %3554 = vmatprep.subr.bf16.mxu0 0
        %3555 = vmatpush1.bf16.msra.mxu0 0
        %3556 = vmatprep.subr.bf16.mxu0 %v3498
        %3557 = vmatpush1.bf16.msra.mxu0 %v3495
        %3558 = vmatprep.subr.bf16.mxu0 0
        %3559 = vmatpush2.bf16.msra.mxu0 0
        %3560 = vmatprep.subr.bf16.mxu0 0
        %3561 = vmatpush2.bf16.msra.mxu0 0
        %3562 = vmatprep.subr.bf16.mxu0 0
        %3563 = vmatpush2.bf16.msra.mxu0 0
        %3564 = vmatprep.subr.bf16.mxu0 0
        %3565 = vmatpush2.bf16.msra.mxu0 0
        %3566 = vmatprep.subr.bf16.mxu0 0
        %3567 = vmatpush2.bf16.msra.mxu0 0
        %3568 = vmatprep.subr.bf16.mxu0 0
        %3569 = vmatpush2.bf16.msra.mxu0 0
        %3570 = vmatprep.subr.bf16.mxu0 0
        %3571 = vmatpush2.bf16.msra.mxu0 0
        %3572 = vmatprep.subr.bf16.mxu0 0
        %3573 = vmatpush2.bf16.msra.mxu0 0
        %3574 = vmatprep.mubr.bf16.mxu0 0
        %3575 = vmatmul.mubr.bf16.gmra.mxu0 %v3489
        %v3576 = vpop.f32.mrf.mxu0
        %v3577 = vadd.f32 0.0, %v3576
        %v3578 = vpop.f32.mrf.mxu0
        %v3579 = vadd.f32 0.0, %v3578
        %v3580 = vpop.f32.mrf.mxu0
        %v3581 = vadd.f32 0.0, %v3580
        %v3582 = vpop.f32.mrf.mxu0
        %v3583 = vadd.f32 0.0, %v3582
        %3584 = vmatprep.mubr.bf16.mxu0 0
        %3585 = vmatmul.mubr.bf16.gmra.mxu0 %v3492
        %v3586 = vpop.f32.mrf.mxu0
        %v3587 = vadd.f32 0.0, %v3586
        %v3588 = vpop.f32.mrf.mxu0
        %v3589 = vadd.f32 0.0, %v3588
        %v3590 = vpop.f32.mrf.mxu0
        %v3591 = vadd.f32 0.0, %v3590
        %v3592 = vpop.f32.mrf.mxu0
        %v3593 = vadd.f32 0.0, %v3592
        %3594 = vdwg.mxu0
        %3595 = vmatprep.subr.bf16.mxu0 0
        %3596 = vmatpush1.bf16.msra.mxu0 0
        %3597 = vmatprep.subr.bf16.mxu0 0
        %3598 = vmatpush1.bf16.msra.mxu0 0
        %3599 = vmatprep.subr.bf16.mxu0 0
        %3600 = vmatpush1.bf16.msra.mxu0 0
        %3601 = vmatprep.subr.bf16.mxu0 0
        %3602 = vmatpush1.bf16.msra.mxu0 0
        %3603 = vmatprep.subr.bf16.mxu0 0
        %3604 = vmatpush1.bf16.msra.mxu0 0
        %3605 = vmatprep.subr.bf16.mxu0 0
        %3606 = vmatpush1.bf16.msra.mxu0 0
        %3607 = vmatprep.subr.bf16.mxu0 0
        %3608 = vmatpush1.bf16.msra.mxu0 0
        %3609 = vmatprep.subr.bf16.mxu0 %v3504
        %3610 = vmatpush1.bf16.msra.mxu0 %v3501
        %3611 = vmatprep.subr.bf16.mxu0 0
        %3612 = vmatpush2.bf16.msra.mxu0 0
        %3613 = vmatprep.subr.bf16.mxu0 0
        %3614 = vmatpush2.bf16.msra.mxu0 0
        %3615 = vmatprep.subr.bf16.mxu0 0
        %3616 = vmatpush2.bf16.msra.mxu0 0
        %3617 = vmatprep.subr.bf16.mxu0 0
        %3618 = vmatpush2.bf16.msra.mxu0 0
        %3619 = vmatprep.subr.bf16.mxu0 0
        %3620 = vmatpush2.bf16.msra.mxu0 0
        %3621 = vmatprep.subr.bf16.mxu0 0
        %3622 = vmatpush2.bf16.msra.mxu0 0
        %3623 = vmatprep.subr.bf16.mxu0 0
        %3624 = vmatpush2.bf16.msra.mxu0 0
        %3625 = vmatprep.subr.bf16.mxu0 0
        %3626 = vmatpush2.bf16.msra.mxu0 0
        %3627 = vmatprep.mubr.bf16.mxu0 0
        %3628 = vmatmul.mubr.bf16.gmra.mxu0 %v3489
        %v3629 = vpop.f32.mrf.mxu0
        %v3630 = vadd.f32 0.0, %v3629
        %v3631 = vpop.f32.mrf.mxu0
        %v3632 = vadd.f32 0.0, %v3631
        %v3633 = vpop.f32.mrf.mxu0
        %v3634 = vadd.f32 0.0, %v3633
        %v3635 = vpop.f32.mrf.mxu0
        %v3636 = vadd.f32 0.0, %v3635
        %3637 = vmatprep.mubr.bf16.mxu0 0
        %3638 = vmatmul.mubr.bf16.gmra.mxu0 %v3492
        %v3639 = vpop.f32.mrf.mxu0
        %v3640 = vadd.f32 0.0, %v3639
        %v3641 = vpop.f32.mrf.mxu0
        %v3642 = vadd.f32 0.0, %v3641
        %v3643 = vpop.f32.mrf.mxu0
        %v3644 = vadd.f32 0.0, %v3643
        %v3645 = vpop.f32.mrf.mxu0
        %v3646 = vadd.f32 0.0, %v3645
        %3647 = vdwg.mxu0
        %3648 = vmatprep.subr.bf16.mxu0 0
        %3649 = vmatpush1.bf16.msra.mxu0 0
        %3650 = vmatprep.subr.bf16.mxu0 0
        %3651 = vmatpush1.bf16.msra.mxu0 0
        %3652 = vmatprep.subr.bf16.mxu0 0
        %3653 = vmatpush1.bf16.msra.mxu0 0
        %3654 = vmatprep.subr.bf16.mxu0 0
        %3655 = vmatpush1.bf16.msra.mxu0 0
        %3656 = vmatprep.subr.bf16.mxu0 0
        %3657 = vmatpush1.bf16.msra.mxu0 0
        %3658 = vmatprep.subr.bf16.mxu0 0
        %3659 = vmatpush1.bf16.msra.mxu0 0
        %3660 = vmatprep.subr.bf16.mxu0 0
        %3661 = vmatpush1.bf16.msra.mxu0 0
        %3662 = vmatprep.subr.bf16.mxu0 %v3510
        %3663 = vmatpush1.bf16.msra.mxu0 %v3507
        %3664 = vmatprep.subr.bf16.mxu0 0
        %3665 = vmatpush2.bf16.msra.mxu0 0
        %3666 = vmatprep.subr.bf16.mxu0 0
        %3667 = vmatpush2.bf16.msra.mxu0 0
        %3668 = vmatprep.subr.bf16.mxu0 0
        %3669 = vmatpush2.bf16.msra.mxu0 0
        %3670 = vmatprep.subr.bf16.mxu0 0
        %3671 = vmatpush2.bf16.msra.mxu0 0
        %3672 = vmatprep.subr.bf16.mxu0 0
        %3673 = vmatpush2.bf16.msra.mxu0 0
        %3674 = vmatprep.subr.bf16.mxu0 0
        %3675 = vmatpush2.bf16.msra.mxu0 0
        %3676 = vmatprep.subr.bf16.mxu0 0
        %3677 = vmatpush2.bf16.msra.mxu0 0
        %3678 = vmatprep.subr.bf16.mxu0 0
        %3679 = vmatpush2.bf16.msra.mxu0 0
        %3680 = vmatprep.mubr.bf16.mxu0 0
        %3681 = vmatmul.mubr.bf16.gmra.mxu0 %v3489
        %v3682 = vpop.f32.mrf.mxu0
        %v3683 = vadd.f32 0.0, %v3682
        %v3684 = vpop.f32.mrf.mxu0
        %v3685 = vadd.f32 0.0, %v3684
        %v3686 = vpop.f32.mrf.mxu0
        %v3687 = vadd.f32 0.0, %v3686
        %v3688 = vpop.f32.mrf.mxu0
        %v3689 = vadd.f32 0.0, %v3688
        %3690 = vmatprep.mubr.bf16.mxu0 0
        %3691 = vmatmul.mubr.bf16.gmra.mxu0 %v3492
        %v3692 = vpop.f32.mrf.mxu0
        %v3693 = vadd.f32 0.0, %v3692
        %v3694 = vpop.f32.mrf.mxu0
        %v3695 = vadd.f32 0.0, %v3694
        %v3696 = vpop.f32.mrf.mxu0
        %v3697 = vadd.f32 0.0, %v3696
        %v3698 = vpop.f32.mrf.mxu0
        %v3699 = vadd.f32 0.0, %v3698
        %3700 = vdwg.mxu0
        %3701 = vmatprep.subr.bf16.mxu0 0
        %3702 = vmatpush1.bf16.msra.mxu0 0
        %3703 = vmatprep.subr.bf16.mxu0 0
        %3704 = vmatpush1.bf16.msra.mxu0 0
        %3705 = vmatprep.subr.bf16.mxu0 0
        %3706 = vmatpush1.bf16.msra.mxu0 0
        %3707 = vmatprep.subr.bf16.mxu0 0
        %3708 = vmatpush1.bf16.msra.mxu0 0
        %3709 = vmatprep.subr.bf16.mxu0 0
        %3710 = vmatpush1.bf16.msra.mxu0 0
        %3711 = vmatprep.subr.bf16.mxu0 0
        %3712 = vmatpush1.bf16.msra.mxu0 0
        %3713 = vmatprep.subr.bf16.mxu0 0
        %3714 = vmatpush1.bf16.msra.mxu0 0
        %3715 = vmatprep.subr.bf16.mxu0 %v3516
        %3716 = vmatpush1.bf16.msra.mxu0 %v3513
        %3717 = vmatprep.subr.bf16.mxu0 0
        %3718 = vmatpush2.bf16.msra.mxu0 0
        %3719 = vmatprep.subr.bf16.mxu0 0
        %3720 = vmatpush2.bf16.msra.mxu0 0
        %3721 = vmatprep.subr.bf16.mxu0 0
        %3722 = vmatpush2.bf16.msra.mxu0 0
        %3723 = vmatprep.subr.bf16.mxu0 0
        %3724 = vmatpush2.bf16.msra.mxu0 0
        %3725 = vmatprep.subr.bf16.mxu0 0
        %3726 = vmatpush2.bf16.msra.mxu0 0
        %3727 = vmatprep.subr.bf16.mxu0 0
        %3728 = vmatpush2.bf16.msra.mxu0 0
        %3729 = vmatprep.subr.bf16.mxu0 0
        %3730 = vmatpush2.bf16.msra.mxu0 0
        %3731 = vmatprep.subr.bf16.mxu0 0
        %3732 = vmatpush2.bf16.msra.mxu0 0
        %3733 = vmatprep.mubr.bf16.mxu0 0
        %3734 = vmatmul.mubr.bf16.gmra.mxu0 %v3489
        %v3735 = vpop.f32.mrf.mxu0
        %v3736 = vadd.f32 0.0, %v3735
        %v3737 = vpop.f32.mrf.mxu0
        %v3738 = vadd.f32 0.0, %v3737
        %v3739 = vpop.f32.mrf.mxu0
        %v3740 = vadd.f32 0.0, %v3739
        %v3741 = vpop.f32.mrf.mxu0
        %v3742 = vadd.f32 0.0, %v3741
        %3743 = vmatprep.mubr.bf16.mxu0 0
        %3744 = vmatmul.mubr.bf16.gmra.mxu0 %v3492
        %v3745 = vpop.f32.mrf.mxu0
        %v3746 = vadd.f32 0.0, %v3745
        %v3747 = vpop.f32.mrf.mxu0
        %v3748 = vadd.f32 0.0, %v3747
        %v3749 = vpop.f32.mrf.mxu0
        %v3750 = vadd.f32 0.0, %v3749
        %v3751 = vpop.f32.mrf.mxu0
        %v3752 = vadd.f32 0.0, %v3751
        %3753 = vdwg.mxu0
        %3754 = vmatprep.subr.bf16.mxu0 0
        %3755 = vmatpush1.bf16.msra.mxu0 0
        %3756 = vmatprep.subr.bf16.mxu0 0
        %3757 = vmatpush1.bf16.msra.mxu0 0
        %3758 = vmatprep.subr.bf16.mxu0 0
        %3759 = vmatpush1.bf16.msra.mxu0 0
        %3760 = vmatprep.subr.bf16.mxu0 0
        %3761 = vmatpush1.bf16.msra.mxu0 0
        %3762 = vmatprep.subr.bf16.mxu0 0
        %3763 = vmatpush1.bf16.msra.mxu0 0
        %3764 = vmatprep.subr.bf16.mxu0 0
        %3765 = vmatpush1.bf16.msra.mxu0 0
        %3766 = vmatprep.subr.bf16.mxu0 0
        %3767 = vmatpush1.bf16.msra.mxu0 0
        %3768 = vmatprep.subr.bf16.mxu0 %v3522
        %3769 = vmatpush1.bf16.msra.mxu0 %v3519
        %3770 = vmatprep.subr.bf16.mxu0 0
        %3771 = vmatpush2.bf16.msra.mxu0 0
        %3772 = vmatprep.subr.bf16.mxu0 0
        %3773 = vmatpush2.bf16.msra.mxu0 0
        %3774 = vmatprep.subr.bf16.mxu0 0
        %3775 = vmatpush2.bf16.msra.mxu0 0
        %3776 = vmatprep.subr.bf16.mxu0 0
        %3777 = vmatpush2.bf16.msra.mxu0 0
        %3778 = vmatprep.subr.bf16.mxu0 0
        %3779 = vmatpush2.bf16.msra.mxu0 0
        %3780 = vmatprep.subr.bf16.mxu0 0
        %3781 = vmatpush2.bf16.msra.mxu0 0
        %3782 = vmatprep.subr.bf16.mxu0 0
        %3783 = vmatpush2.bf16.msra.mxu0 0
        %3784 = vmatprep.subr.bf16.mxu0 0
        %3785 = vmatpush2.bf16.msra.mxu0 0
        %3786 = vmatprep.mubr.bf16.mxu0 0
        %3787 = vmatmul.mubr.bf16.gmra.mxu0 %v3489
        %v3788 = vpop.f32.mrf.mxu0
        %v3789 = vadd.f32 0.0, %v3788
        %v3790 = vpop.f32.mrf.mxu0
        %v3791 = vadd.f32 0.0, %v3790
        %v3792 = vpop.f32.mrf.mxu0
        %v3793 = vadd.f32 0.0, %v3792
        %v3794 = vpop.f32.mrf.mxu0
        %v3795 = vadd.f32 0.0, %v3794
        %3796 = vmatprep.mubr.bf16.mxu0 0
        %3797 = vmatmul.mubr.bf16.gmra.mxu0 %v3492
        %v3798 = vpop.f32.mrf.mxu0
        %v3799 = vadd.f32 0.0, %v3798
        %v3800 = vpop.f32.mrf.mxu0
        %v3801 = vadd.f32 0.0, %v3800
        %v3802 = vpop.f32.mrf.mxu0
        %v3803 = vadd.f32 0.0, %v3802
        %v3804 = vpop.f32.mrf.mxu0
        %v3805 = vadd.f32 0.0, %v3804
        %3806 = vdwg.mxu0
        %3807 = vmatprep.subr.bf16.mxu0 0
        %3808 = vmatpush1.bf16.msra.mxu0 0
        %3809 = vmatprep.subr.bf16.mxu0 0
        %3810 = vmatpush1.bf16.msra.mxu0 0
        %3811 = vmatprep.subr.bf16.mxu0 0
        %3812 = vmatpush1.bf16.msra.mxu0 0
        %3813 = vmatprep.subr.bf16.mxu0 0
        %3814 = vmatpush1.bf16.msra.mxu0 0
        %3815 = vmatprep.subr.bf16.mxu0 0
        %3816 = vmatpush1.bf16.msra.mxu0 0
        %3817 = vmatprep.subr.bf16.mxu0 0
        %3818 = vmatpush1.bf16.msra.mxu0 0
        %3819 = vmatprep.subr.bf16.mxu0 0
        %3820 = vmatpush1.bf16.msra.mxu0 0
        %3821 = vmatprep.subr.bf16.mxu0 %v3528
        %3822 = vmatpush1.bf16.msra.mxu0 %v3525
        %3823 = vmatprep.subr.bf16.mxu0 0
        %3824 = vmatpush2.bf16.msra.mxu0 0
        %3825 = vmatprep.subr.bf16.mxu0 0
        %3826 = vmatpush2.bf16.msra.mxu0 0
        %3827 = vmatprep.subr.bf16.mxu0 0
        %3828 = vmatpush2.bf16.msra.mxu0 0
        %3829 = vmatprep.subr.bf16.mxu0 0
        %3830 = vmatpush2.bf16.msra.mxu0 0
        %3831 = vmatprep.subr.bf16.mxu0 0
        %3832 = vmatpush2.bf16.msra.mxu0 0
        %3833 = vmatprep.subr.bf16.mxu0 0
        %3834 = vmatpush2.bf16.msra.mxu0 0
        %3835 = vmatprep.subr.bf16.mxu0 0
        %3836 = vmatpush2.bf16.msra.mxu0 0
        %3837 = vmatprep.subr.bf16.mxu0 0
        %3838 = vmatpush2.bf16.msra.mxu0 0
        %3839 = vmatprep.mubr.bf16.mxu0 0
        %3840 = vmatmul.mubr.bf16.gmra.mxu0 %v3489
        %v3841 = vpop.f32.mrf.mxu0
        %v3842 = vadd.f32 0.0, %v3841
        %v3843 = vpop.f32.mrf.mxu0
        %v3844 = vadd.f32 0.0, %v3843
        %v3845 = vpop.f32.mrf.mxu0
        %v3846 = vadd.f32 0.0, %v3845
        %v3847 = vpop.f32.mrf.mxu0
        %v3848 = vadd.f32 0.0, %v3847
        %3849 = vmatprep.mubr.bf16.mxu0 0
        %3850 = vmatmul.mubr.bf16.gmra.mxu0 %v3492
        %v3851 = vpop.f32.mrf.mxu0
        %v3852 = vadd.f32 0.0, %v3851
        %v3853 = vpop.f32.mrf.mxu0
        %v3854 = vadd.f32 0.0, %v3853
        %v3855 = vpop.f32.mrf.mxu0
        %v3856 = vadd.f32 0.0, %v3855
        %v3857 = vpop.f32.mrf.mxu0
        %v3858 = vadd.f32 0.0, %v3857
        %3859 = vdwg.mxu0
        %3860 = vmatprep.subr.bf16.mxu0 0
        %3861 = vmatpush1.bf16.msra.mxu0 0
        %3862 = vmatprep.subr.bf16.mxu0 0
        %3863 = vmatpush1.bf16.msra.mxu0 0
        %3864 = vmatprep.subr.bf16.mxu0 0
        %3865 = vmatpush1.bf16.msra.mxu0 0
        %3866 = vmatprep.subr.bf16.mxu0 0
        %3867 = vmatpush1.bf16.msra.mxu0 0
        %3868 = vmatprep.subr.bf16.mxu0 0
        %3869 = vmatpush1.bf16.msra.mxu0 0
        %3870 = vmatprep.subr.bf16.mxu0 0
        %3871 = vmatpush1.bf16.msra.mxu0 0
        %3872 = vmatprep.subr.bf16.mxu0 0
        %3873 = vmatpush1.bf16.msra.mxu0 0
        %3874 = vmatprep.subr.bf16.mxu0 %v3534
        %3875 = vmatpush1.bf16.msra.mxu0 %v3531
        %3876 = vmatprep.subr.bf16.mxu0 0
        %3877 = vmatpush2.bf16.msra.mxu0 0
        %3878 = vmatprep.subr.bf16.mxu0 0
        %3879 = vmatpush2.bf16.msra.mxu0 0
        %3880 = vmatprep.subr.bf16.mxu0 0
        %3881 = vmatpush2.bf16.msra.mxu0 0
        %3882 = vmatprep.subr.bf16.mxu0 0
        %3883 = vmatpush2.bf16.msra.mxu0 0
        %3884 = vmatprep.subr.bf16.mxu0 0
        %3885 = vmatpush2.bf16.msra.mxu0 0
        %3886 = vmatprep.subr.bf16.mxu0 0
        %3887 = vmatpush2.bf16.msra.mxu0 0
        %3888 = vmatprep.subr.bf16.mxu0 0
        %3889 = vmatpush2.bf16.msra.mxu0 0
        %3890 = vmatprep.subr.bf16.mxu0 0
        %3891 = vmatpush2.bf16.msra.mxu0 0
        %3892 = vmatprep.mubr.bf16.mxu0 0
        %3893 = vmatmul.mubr.bf16.gmra.mxu0 %v3489
        %v3894 = vpop.f32.mrf.mxu0
        %v3895 = vadd.f32 0.0, %v3894
        %v3896 = vpop.f32.mrf.mxu0
        %v3897 = vadd.f32 0.0, %v3896
        %v3898 = vpop.f32.mrf.mxu0
        %v3899 = vadd.f32 0.0, %v3898
        %v3900 = vpop.f32.mrf.mxu0
        %v3901 = vadd.f32 0.0, %v3900
        %3902 = vmatprep.mubr.bf16.mxu0 0
        %3903 = vmatmul.mubr.bf16.gmra.mxu0 %v3492
        %v3904 = vpop.f32.mrf.mxu0
        %v3905 = vadd.f32 0.0, %v3904
        %v3906 = vpop.f32.mrf.mxu0
        %v3907 = vadd.f32 0.0, %v3906
        %v3908 = vpop.f32.mrf.mxu0
        %v3909 = vadd.f32 0.0, %v3908
        %v3910 = vpop.f32.mrf.mxu0
        %v3911 = vadd.f32 0.0, %v3910
        %3912 = vdwg.mxu0
        %3913 = vmatprep.subr.bf16.mxu0 0
        %3914 = vmatpush1.bf16.msra.mxu0 0
        %3915 = vmatprep.subr.bf16.mxu0 0
        %3916 = vmatpush1.bf16.msra.mxu0 0
        %3917 = vmatprep.subr.bf16.mxu0 0
        %3918 = vmatpush1.bf16.msra.mxu0 0
        %3919 = vmatprep.subr.bf16.mxu0 0
        %3920 = vmatpush1.bf16.msra.mxu0 0
        %3921 = vmatprep.subr.bf16.mxu0 0
        %3922 = vmatpush1.bf16.msra.mxu0 0
        %3923 = vmatprep.subr.bf16.mxu0 0
        %3924 = vmatpush1.bf16.msra.mxu0 0
        %3925 = vmatprep.subr.bf16.mxu0 0
        %3926 = vmatpush1.bf16.msra.mxu0 0
        %3927 = vmatprep.subr.bf16.mxu0 %v3540
        %3928 = vmatpush1.bf16.msra.mxu0 %v3537
        %3929 = vmatprep.subr.bf16.mxu0 0
        %3930 = vmatpush2.bf16.msra.mxu0 0
        %3931 = vmatprep.subr.bf16.mxu0 0
        %3932 = vmatpush2.bf16.msra.mxu0 0
        %3933 = vmatprep.subr.bf16.mxu0 0
        %3934 = vmatpush2.bf16.msra.mxu0 0
        %3935 = vmatprep.subr.bf16.mxu0 0
        %3936 = vmatpush2.bf16.msra.mxu0 0
        %3937 = vmatprep.subr.bf16.mxu0 0
        %3938 = vmatpush2.bf16.msra.mxu0 0
        %3939 = vmatprep.subr.bf16.mxu0 0
        %3940 = vmatpush2.bf16.msra.mxu0 0
        %3941 = vmatprep.subr.bf16.mxu0 0
        %3942 = vmatpush2.bf16.msra.mxu0 0
        %3943 = vmatprep.subr.bf16.mxu0 0
        %3944 = vmatpush2.bf16.msra.mxu0 0
        %3945 = vmatprep.mubr.bf16.mxu0 0
        %3946 = vmatmul.mubr.bf16.gmra.mxu0 %v3489
        %v3947 = vpop.f32.mrf.mxu0
        %v3948 = vadd.f32 0.0, %v3947
        %v3949 = vpop.f32.mrf.mxu0
        %v3950 = vadd.f32 0.0, %v3949
        %v3951 = vpop.f32.mrf.mxu0
        %v3952 = vadd.f32 0.0, %v3951
        %v3953 = vpop.f32.mrf.mxu0
        %v3954 = vadd.f32 0.0, %v3953
        %3955 = vmatprep.mubr.bf16.mxu0 0
        %3956 = vmatmul.mubr.bf16.gmra.mxu0 %v3492
        %v3957 = vpop.f32.mrf.mxu0
        %v3958 = vadd.f32 0.0, %v3957
        %v3959 = vpop.f32.mrf.mxu0
        %v3960 = vadd.f32 0.0, %v3959
        %v3961 = vpop.f32.mrf.mxu0
        %v3962 = vadd.f32 0.0, %v3961
        %v3963 = vpop.f32.mrf.mxu0
        %v3964 = vadd.f32 0.0, %v3963
        %3965 = vdwg.mxu0
        %v3966 = vadd.f32 %v3159, %v3577
        %v3967 = vadd.f32 %v3160, %v3579
        %v3968 = vadd.f32 %v3161, %v3630
        %v3969 = vadd.f32 %v3162, %v3632
        %v3970 = vadd.f32 %v3163, %v3683
        %v3971 = vadd.f32 %v3164, %v3685
        %v3972 = vadd.f32 %v3165, %v3736
        %v3973 = vadd.f32 %v3166, %v3738
        %v3974 = vadd.f32 %v3167, %v3789
        %v3975 = vadd.f32 %v3168, %v3791
        %v3976 = vadd.f32 %v3169, %v3842
        %v3977 = vadd.f32 %v3170, %v3844
        %v3978 = vadd.f32 %v3171, %v3895
        %v3979 = vadd.f32 %v3172, %v3897
        %v3980 = vadd.f32 %v3173, %v3948
        %v3981 = vadd.f32 %v3174, %v3950
        %v3982 = vadd.f32 %v3175, %v3581
        %v3983 = vadd.f32 %v3176, %v3583
        %v3984 = vadd.f32 %v3177, %v3634
        %v3985 = vadd.f32 %v3178, %v3636
        %v3986 = vadd.f32 %v3179, %v3687
        %v3987 = vadd.f32 %v3180, %v3689
        %v3988 = vadd.f32 %v3181, %v3740
        %v3989 = vadd.f32 %v3182, %v3742
        %v3990 = vadd.f32 %v3183, %v3793
        %v3991 = vadd.f32 %v3184, %v3795
        %v3992 = vadd.f32 %v3185, %v3846
        %v3993 = vadd.f32 %v3186, %v3848
        %v3994 = vadd.f32 %v3187, %v3899
        %v3995 = vadd.f32 %v3188, %v3901
        %v3996 = vadd.f32 %v3189, %v3952
        %v3997 = vadd.f32 %v3190, %v3954
        %v3998 = vadd.f32 %v3191, %v3587
        %v3999 = vadd.f32 %v3192, %v3589
        %v4000 = vadd.f32 %v3193, %v3640
        %v4001 = vadd.f32 %v3194, %v3642
        %v4002 = vadd.f32 %v3195, %v3693
        %v4003 = vadd.f32 %v3196, %v3695
        %v4004 = vadd.f32 %v3197, %v3746
        %v4005 = vadd.f32 %v3198, %v3748
        %v4006 = vadd.f32 %v3199, %v3799
        %v4007 = vadd.f32 %v3200, %v3801
        %v4008 = vadd.f32 %v3201, %v3852
        %v4009 = vadd.f32 %v3202, %v3854
        %v4010 = vadd.f32 %v3203, %v3905
        %v4011 = vadd.f32 %v3204, %v3907
        %v4012 = vadd.f32 %v3205, %v3958
        %v4013 = vadd.f32 %v3206, %v3960
        %v4014 = vadd.f32 %v3207, %v3591
        %v4015 = vadd.f32 %v3208, %v3593
        %v4016 = vadd.f32 %v3209, %v3644
        %v4017 = vadd.f32 %v3210, %v3646
        %v4018 = vadd.f32 %v3211, %v3697
        %v4019 = vadd.f32 %v3212, %v3699
        %v4020 = vadd.f32 %v3213, %v3750
        %v4021 = vadd.f32 %v3214, %v3752
        %v4022 = vadd.f32 %v3215, %v3803
        %v4023 = vadd.f32 %v3216, %v3805
        %v4024 = vadd.f32 %v3217, %v3856
        %v4025 = vadd.f32 %v3218, %v3858
        %v4026 = vadd.f32 %v3219, %v3909
        %v4027 = vadd.f32 %v3220, %v3911
        %v4028 = vadd.f32 %v3221, %v3962
        %v4029 = vadd.f32 %v3222, %v3964
        %s4030 = scalar_lea.vmem [#allocation3], 256
        %v4031 = vld [vmem:[%s4030] sm:$0xf]
        %v4032 = vld [vmem:[%s4030 + $0x4] sm:$0xf]
        %v4033 = vld [vmem:[%s4030 + $0x8] sm:$0xf]
        %v4034 = vld [vmem:[%s4030 + $0xc] sm:$0xf]
        %v4035 = vld [vmem:[%s4030 + $0x10] sm:$0xf]
        %v4036 = vld [vmem:[%s4030 + $0x14] sm:$0xf]
        %v4037 = vld [vmem:[%s4030 + $0x18] sm:$0xf]
        %v4038 = vld [vmem:[%s4030 + $0x1c] sm:$0xf]
        %v4039 = vld [vmem:[%s4030 + $0x20] sm:$0xf]
        %v4040 = vld [vmem:[%s4030 + $0x24] sm:$0xf]
        %v4041 = vld [vmem:[%s4030 + $0x28] sm:$0xf]
        %v4042 = vld [vmem:[%s4030 + $0x2c] sm:$0xf]
        %v4043 = vld [vmem:[%s4030 + $0x30] sm:$0xf]
        %v4044 = vld [vmem:[%s4030 + $0x34] sm:$0xf]
        %v4045 = vld [vmem:[%s4030 + $0x38] sm:$0xf]
        %v4046 = vld [vmem:[%s4030 + $0x3c] sm:$0xf]
        %v4063 = vunpack.c.l.b16 %v4031
        %v4064 = vunpack.c.l.b16 %v4032
        %v4065 = vunpack.c.l.b16 %v4033
        %v4066 = vunpack.c.l.b16 %v4034
        %v4067 = vunpack.c.l.b16 %v4035
        %v4068 = vunpack.c.l.b16 %v4036
        %v4069 = vunpack.c.l.b16 %v4037
        %v4070 = vunpack.c.l.b16 %v4038
        %v4071 = vunpack.c.l.b16 %v4039
        %v4072 = vunpack.c.l.b16 %v4040
        %v4073 = vunpack.c.l.b16 %v4041
        %v4074 = vunpack.c.l.b16 %v4042
        %v4075 = vunpack.c.l.b16 %v4043
        %v4076 = vunpack.c.l.b16 %v4044
        %v4077 = vunpack.c.l.b16 %v4045
        %v4078 = vunpack.c.l.b16 %v4046
        %v4079 = vpack.c.b16 %v4064, %v4063
        %v4080 = vpack.c.b16 %v4066, %v4065
        %v4081 = vpack.c.b16 %v4068, %v4067
        %v4082 = vpack.c.b16 %v4070, %v4069
        %v4083 = vpack.c.b16 %v4072, %v4071
        %v4084 = vpack.c.b16 %v4074, %v4073
        %v4085 = vpack.c.b16 %v4076, %v4075
        %v4086 = vpack.c.b16 %v4078, %v4077
        %4095 = vmatprep.subr.bf16.mxu0 0
        %4096 = vmatpush1.bf16.msra.mxu0 %v4086
        %4097 = vmatprep.subr.bf16.mxu0 0
        %4098 = vmatpush1.bf16.msra.mxu0 %v4085
        %4099 = vmatprep.subr.bf16.mxu0 0
        %4100 = vmatpush1.bf16.msra.mxu0 %v4084
        %4101 = vmatprep.subr.bf16.mxu0 0
        %4102 = vmatpush1.bf16.msra.mxu0 %v4083
        %4103 = vmatprep.subr.bf16.mxu0 0
        %4104 = vmatpush1.bf16.msra.mxu0 %v4082
        %4105 = vmatprep.subr.bf16.mxu0 0
        %4106 = vmatpush1.bf16.msra.mxu0 %v4081
        %4107 = vmatprep.subr.bf16.mxu0 0
        %4108 = vmatpush1.bf16.msra.mxu0 %v4080
        %4109 = vmatprep.subr.bf16.mxu0 0
        %4110 = vmatpush1.bf16.msra.mxu0 %v4079
        %4111 = vmatprep.subr.bf16.mxu0 0
        %4112 = vmatpush2.bf16.msra.mxu0 0
        %4113 = vmatprep.subr.bf16.mxu0 0
        %4114 = vmatpush2.bf16.msra.mxu0 0
        %4115 = vmatprep.subr.bf16.mxu0 0
        %4116 = vmatpush2.bf16.msra.mxu0 0
        %4117 = vmatprep.subr.bf16.mxu0 0
        %4118 = vmatpush2.bf16.msra.mxu0 0
        %4119 = vmatprep.subr.bf16.mxu0 0
        %4120 = vmatpush2.bf16.msra.mxu0 0
        %4121 = vmatprep.subr.bf16.mxu0 0
        %4122 = vmatpush2.bf16.msra.mxu0 0
        %4123 = vmatprep.subr.bf16.mxu0 0
        %4124 = vmatpush2.bf16.msra.mxu0 0
        %4125 = vmatprep.subr.bf16.mxu0 0
        %4126 = vmatpush2.bf16.msra.mxu0 0
        %4127 = vmatprep.mubr.bf16.mxu0 0
        %4128 = vmatmul.mubr.bf16.gmra.mxu0 %v385
        %v4129 = vpop.f32.mrf.mxu0
        %v4130 = vadd.f32 0.0, %v4129
        %v4131 = vpop.f32.mrf.mxu0
        %v4132 = vpop.f32.mrf.mxu0
        %v4133 = vadd.f32 0.0, %v4132
        %v4134 = vpop.f32.mrf.mxu0
        %4135 = vmatprep.mubr.bf16.mxu0 0
        %4136 = vmatmul.mubr.bf16.gmra.mxu0 %v386
        %v4137 = vpop.f32.mrf.mxu0
        %v4138 = vadd.f32 0.0, %v4137
        %v4139 = vpop.f32.mrf.mxu0
        %v4140 = vpop.f32.mrf.mxu0
        %v4141 = vadd.f32 0.0, %v4140
        %v4142 = vpop.f32.mrf.mxu0
        %4143 = vmatprep.mubr.bf16.mxu0 0
        %4144 = vmatmul.mubr.bf16.gmra.mxu0 %v387
        %v4145 = vpop.f32.mrf.mxu0
        %v4146 = vadd.f32 0.0, %v4145
        %v4147 = vpop.f32.mrf.mxu0
        %v4148 = vpop.f32.mrf.mxu0
        %v4149 = vadd.f32 0.0, %v4148
        %v4150 = vpop.f32.mrf.mxu0
        %4151 = vmatprep.mubr.bf16.mxu0 0
        %4152 = vmatmul.mubr.bf16.gmra.mxu0 %v388
        %v4153 = vpop.f32.mrf.mxu0
        %v4154 = vadd.f32 0.0, %v4153
        %v4155 = vpop.f32.mrf.mxu0
        %v4156 = vpop.f32.mrf.mxu0
        %v4157 = vadd.f32 0.0, %v4156
        %v4158 = vpop.f32.mrf.mxu0
        %4159 = vdwg.mxu0
        %v4160 = vpack.c.bf16 %v4133, %v4130
        %v4161 = vpack.c.bf16 %v4141, %v4138
        %v4162 = vpack.c.bf16 %v4149, %v4146
        %v4163 = vpack.c.bf16 %v4157, %v4154
        %s4164 = scalar_lea.vmem %s2, 80
        %v4165 = vld [vmem:[%s4164] sm:$0xf]
        %v4166 = vld [vmem:[%s4164 + $0x4] sm:$0xf]
        %v4167 = vld [vmem:[%s4164 + $0x8] sm:$0xf]
        %v4168 = vld [vmem:[%s4164 + $0xc] sm:$0xf]
        %v4173 = vunpack.c.l.b16 %v4165
        %v4174 = vunpack.c.l.b16 %v4166
        %v4175 = vunpack.c.l.b16 %v4167
        %v4176 = vunpack.c.l.b16 %v4168
        %v4177 = vpack.c.b16 %v4174, %v4173
        %v4178 = vpack.c.b16 %v4176, %v4175
        %v4183 = vunpack.c.l.b16 %v4160
        %v4184 = vunpack.c.h.b16 %v4160
        %v4185 = vunpack.c.l.b16 %v4161
        %v4186 = vunpack.c.h.b16 %v4161
        %v4187 = vunpack.c.l.b16 %v4162
        %v4188 = vunpack.c.h.b16 %v4162
        %v4189 = vunpack.c.l.b16 %v4163
        %v4190 = vunpack.c.h.b16 %v4163
        %v4191 = vpack.i.b16 %v4185, %v4183
        %v4192 = vpack.i.b16 %v4186, %v4184
        %v4193 = vpack.i.b16 %v4189, %v4187
        %v4194 = vpack.i.b16 %v4190, %v4188
        %v4195 = vcombine.low %v4191, %v4193
        %v4196 = vcombine.high %v4191, %v4193
        %v4198 = vunpack.c.l.s4 1966171168
        %v4199 = vunpack.c.0.s8 %v4198
        %v4200 = vlaneseq
        %v4201 = vshrl.u32 %v4200, 7
        %v4202 = vsub.s32 %v4199, %v4201
        %v4203 = vrot.slane %v4195, %v4202
        %v4205 = vunpack.c.l.s4 1966171168
        %v4206 = vunpack.c.0.s8 %v4205
        %v4207 = vlaneseq
        %v4208 = vshrl.u32 %v4207, 7
        %v4209 = vsub.s32 %v4206, %v4208
        %v4210 = vrot.slane %v4196, %v4209
        %v4211 = vcombine.high %v4203, %v4203
        %v4212 = vcombine.high %v4210, %v4210
        %v4214 = vunpack.c.l.s4 1966171168
        %v4215 = vunpack.c.0.s8 %v4214
        %v4216 = vlaneseq
        %v4217 = vshrl.u32 %v4216, 7
        %v4218 = vsub.s32 %v4215, %v4217
        %v4219 = vrot.slane %v4203, %v4218
        %v4221 = vunpack.c.l.s4 1966171168
        %v4222 = vunpack.c.0.s8 %v4221
        %v4223 = vlaneseq
        %v4224 = vshrl.u32 %v4223, 7
        %v4225 = vsub.s32 %v4222, %v4224
        %v4226 = vrot.slane %v4210, %v4225
        %v4228 = vunpack.c.l.s4 1966171168
        %v4229 = vunpack.c.0.s8 %v4228
        %v4230 = vlaneseq
        %v4231 = vshrl.u32 %v4230, 7
        %v4232 = vsub.s32 %v4229, %v4231
        %v4233 = vrot.slane %v4211, %v4232
        %v4235 = vunpack.c.l.s4 1966171168
        %v4236 = vunpack.c.0.s8 %v4235
        %v4237 = vlaneseq
        %v4238 = vshrl.u32 %v4237, 7
        %v4239 = vsub.s32 %v4236, %v4238
        %v4240 = vrot.slane %v4212, %v4239
        %v4241 = vcombine.high %v4219, %v4219
        %v4242 = vcombine.high %v4226, %v4226
        %v4243 = vcombine.high %v4233, %v4233
        %v4244 = vcombine.high %v4240, %v4240
        %v4245 = vcombine.low %v4192, %v4194
        %v4246 = vcombine.high %v4192, %v4194
        %v4248 = vunpack.c.l.s4 1966171168
        %v4249 = vunpack.c.0.s8 %v4248
        %v4250 = vlaneseq
        %v4251 = vshrl.u32 %v4250, 7
        %v4252 = vsub.s32 %v4249, %v4251
        %v4253 = vrot.slane %v4245, %v4252
        %v4255 = vunpack.c.l.s4 1966171168
        %v4256 = vunpack.c.0.s8 %v4255
        %v4257 = vlaneseq
        %v4258 = vshrl.u32 %v4257, 7
        %v4259 = vsub.s32 %v4256, %v4258
        %v4260 = vrot.slane %v4246, %v4259
        %v4261 = vcombine.high %v4253, %v4253
        %v4262 = vcombine.high %v4260, %v4260
        %v4264 = vunpack.c.l.s4 1966171168
        %v4265 = vunpack.c.0.s8 %v4264
        %v4266 = vlaneseq
        %v4267 = vshrl.u32 %v4266, 7
        %v4268 = vsub.s32 %v4265, %v4267
        %v4269 = vrot.slane %v4253, %v4268
        %v4271 = vunpack.c.l.s4 1966171168
        %v4272 = vunpack.c.0.s8 %v4271
        %v4273 = vlaneseq
        %v4274 = vshrl.u32 %v4273, 7
        %v4275 = vsub.s32 %v4272, %v4274
        %v4276 = vrot.slane %v4260, %v4275
        %v4278 = vunpack.c.l.s4 1966171168
        %v4279 = vunpack.c.0.s8 %v4278
        %v4280 = vlaneseq
        %v4281 = vshrl.u32 %v4280, 7
        %v4282 = vsub.s32 %v4279, %v4281
        %v4283 = vrot.slane %v4261, %v4282
        %v4285 = vunpack.c.l.s4 1966171168
        %v4286 = vunpack.c.0.s8 %v4285
        %v4287 = vlaneseq
        %v4288 = vshrl.u32 %v4287, 7
        %v4289 = vsub.s32 %v4286, %v4288
        %v4290 = vrot.slane %v4262, %v4289
        %v4291 = vcombine.high %v4269, %v4269
        %v4292 = vcombine.high %v4276, %v4276
        %v4293 = vcombine.high %v4283, %v4283
        %v4294 = vcombine.high %v4290, %v4290
        %v4296 = vsel %vm641, %v4177, 0
        %v4299 = vsel %vm641, %v4178, 0
        %v4302 = vsel %vm648, %v4219, 0
        %v4305 = vsel %vm648, %v4233, 0
        %v4308 = vsel %vm648, %v4241, 0
        %v4311 = vsel %vm648, %v4243, 0
        %v4314 = vsel %vm648, %v4226, 0
        %v4317 = vsel %vm648, %v4240, 0
        %v4320 = vsel %vm648, %v4242, 0
        %v4323 = vsel %vm648, %v4244, 0
        %v4326 = vsel %vm648, %v4269, 0
        %v4329 = vsel %vm648, %v4283, 0
        %v4332 = vsel %vm648, %v4291, 0
        %v4335 = vsel %vm648, %v4293, 0
        %v4338 = vsel %vm648, %v4276, 0
        %v4341 = vsel %vm648, %v4290, 0
        %v4344 = vsel %vm648, %v4292, 0
        %v4347 = vsel %vm648, %v4294, 0
        %4349 = vmatprep.subr.bf16.mxu0 0
        %4350 = vmatpush1.bf16.msra.mxu0 0
        %4351 = vmatprep.subr.bf16.mxu0 0
        %4352 = vmatpush1.bf16.msra.mxu0 0
        %4353 = vmatprep.subr.bf16.mxu0 0
        %4354 = vmatpush1.bf16.msra.mxu0 0
        %4355 = vmatprep.subr.bf16.mxu0 0
        %4356 = vmatpush1.bf16.msra.mxu0 0
        %4357 = vmatprep.subr.bf16.mxu0 0
        %4358 = vmatpush1.bf16.msra.mxu0 0
        %4359 = vmatprep.subr.bf16.mxu0 0
        %4360 = vmatpush1.bf16.msra.mxu0 0
        %4361 = vmatprep.subr.bf16.mxu0 0
        %4362 = vmatpush1.bf16.msra.mxu0 0
        %4363 = vmatprep.subr.bf16.mxu0 %v4305
        %4364 = vmatpush1.bf16.msra.mxu0 %v4302
        %4365 = vmatprep.subr.bf16.mxu0 0
        %4366 = vmatpush2.bf16.msra.mxu0 0
        %4367 = vmatprep.subr.bf16.mxu0 0
        %4368 = vmatpush2.bf16.msra.mxu0 0
        %4369 = vmatprep.subr.bf16.mxu0 0
        %4370 = vmatpush2.bf16.msra.mxu0 0
        %4371 = vmatprep.subr.bf16.mxu0 0
        %4372 = vmatpush2.bf16.msra.mxu0 0
        %4373 = vmatprep.subr.bf16.mxu0 0
        %4374 = vmatpush2.bf16.msra.mxu0 0
        %4375 = vmatprep.subr.bf16.mxu0 0
        %4376 = vmatpush2.bf16.msra.mxu0 0
        %4377 = vmatprep.subr.bf16.mxu0 0
        %4378 = vmatpush2.bf16.msra.mxu0 0
        %4379 = vmatprep.subr.bf16.mxu0 0
        %4380 = vmatpush2.bf16.msra.mxu0 0
        %4381 = vmatprep.mubr.bf16.mxu0 0
        %4382 = vmatmul.mubr.bf16.gmra.mxu0 %v4296
        %v4383 = vpop.f32.mrf.mxu0
        %v4384 = vadd.f32 0.0, %v4383
        %v4385 = vpop.f32.mrf.mxu0
        %v4386 = vadd.f32 0.0, %v4385
        %v4387 = vpop.f32.mrf.mxu0
        %v4388 = vadd.f32 0.0, %v4387
        %v4389 = vpop.f32.mrf.mxu0
        %v4390 = vadd.f32 0.0, %v4389
        %4391 = vmatprep.mubr.bf16.mxu0 0
        %4392 = vmatmul.mubr.bf16.gmra.mxu0 %v4299
        %v4393 = vpop.f32.mrf.mxu0
        %v4394 = vadd.f32 0.0, %v4393
        %v4395 = vpop.f32.mrf.mxu0
        %v4396 = vadd.f32 0.0, %v4395
        %v4397 = vpop.f32.mrf.mxu0
        %v4398 = vadd.f32 0.0, %v4397
        %v4399 = vpop.f32.mrf.mxu0
        %v4400 = vadd.f32 0.0, %v4399
        %4401 = vdwg.mxu0
        %4402 = vmatprep.subr.bf16.mxu0 0
        %4403 = vmatpush1.bf16.msra.mxu0 0
        %4404 = vmatprep.subr.bf16.mxu0 0
        %4405 = vmatpush1.bf16.msra.mxu0 0
        %4406 = vmatprep.subr.bf16.mxu0 0
        %4407 = vmatpush1.bf16.msra.mxu0 0
        %4408 = vmatprep.subr.bf16.mxu0 0
        %4409 = vmatpush1.bf16.msra.mxu0 0
        %4410 = vmatprep.subr.bf16.mxu0 0
        %4411 = vmatpush1.bf16.msra.mxu0 0
        %4412 = vmatprep.subr.bf16.mxu0 0
        %4413 = vmatpush1.bf16.msra.mxu0 0
        %4414 = vmatprep.subr.bf16.mxu0 0
        %4415 = vmatpush1.bf16.msra.mxu0 0
        %4416 = vmatprep.subr.bf16.mxu0 %v4311
        %4417 = vmatpush1.bf16.msra.mxu0 %v4308
        %4418 = vmatprep.subr.bf16.mxu0 0
        %4419 = vmatpush2.bf16.msra.mxu0 0
        %4420 = vmatprep.subr.bf16.mxu0 0
        %4421 = vmatpush2.bf16.msra.mxu0 0
        %4422 = vmatprep.subr.bf16.mxu0 0
        %4423 = vmatpush2.bf16.msra.mxu0 0
        %4424 = vmatprep.subr.bf16.mxu0 0
        %4425 = vmatpush2.bf16.msra.mxu0 0
        %4426 = vmatprep.subr.bf16.mxu0 0
        %4427 = vmatpush2.bf16.msra.mxu0 0
        %4428 = vmatprep.subr.bf16.mxu0 0
        %4429 = vmatpush2.bf16.msra.mxu0 0
        %4430 = vmatprep.subr.bf16.mxu0 0
        %4431 = vmatpush2.bf16.msra.mxu0 0
        %4432 = vmatprep.subr.bf16.mxu0 0
        %4433 = vmatpush2.bf16.msra.mxu0 0
        %4434 = vmatprep.mubr.bf16.mxu0 0
        %4435 = vmatmul.mubr.bf16.gmra.mxu0 %v4296
        %v4436 = vpop.f32.mrf.mxu0
        %v4437 = vadd.f32 0.0, %v4436
        %v4438 = vpop.f32.mrf.mxu0
        %v4439 = vadd.f32 0.0, %v4438
        %v4440 = vpop.f32.mrf.mxu0
        %v4441 = vadd.f32 0.0, %v4440
        %v4442 = vpop.f32.mrf.mxu0
        %v4443 = vadd.f32 0.0, %v4442
        %4444 = vmatprep.mubr.bf16.mxu0 0
        %4445 = vmatmul.mubr.bf16.gmra.mxu0 %v4299
        %v4446 = vpop.f32.mrf.mxu0
        %v4447 = vadd.f32 0.0, %v4446
        %v4448 = vpop.f32.mrf.mxu0
        %v4449 = vadd.f32 0.0, %v4448
        %v4450 = vpop.f32.mrf.mxu0
        %v4451 = vadd.f32 0.0, %v4450
        %v4452 = vpop.f32.mrf.mxu0
        %v4453 = vadd.f32 0.0, %v4452
        %4454 = vdwg.mxu0
        %4455 = vmatprep.subr.bf16.mxu0 0
        %4456 = vmatpush1.bf16.msra.mxu0 0
        %4457 = vmatprep.subr.bf16.mxu0 0
        %4458 = vmatpush1.bf16.msra.mxu0 0
        %4459 = vmatprep.subr.bf16.mxu0 0
        %4460 = vmatpush1.bf16.msra.mxu0 0
        %4461 = vmatprep.subr.bf16.mxu0 0
        %4462 = vmatpush1.bf16.msra.mxu0 0
        %4463 = vmatprep.subr.bf16.mxu0 0
        %4464 = vmatpush1.bf16.msra.mxu0 0
        %4465 = vmatprep.subr.bf16.mxu0 0
        %4466 = vmatpush1.bf16.msra.mxu0 0
        %4467 = vmatprep.subr.bf16.mxu0 0
        %4468 = vmatpush1.bf16.msra.mxu0 0
        %4469 = vmatprep.subr.bf16.mxu0 %v4317
        %4470 = vmatpush1.bf16.msra.mxu0 %v4314
        %4471 = vmatprep.subr.bf16.mxu0 0
        %4472 = vmatpush2.bf16.msra.mxu0 0
        %4473 = vmatprep.subr.bf16.mxu0 0
        %4474 = vmatpush2.bf16.msra.mxu0 0
        %4475 = vmatprep.subr.bf16.mxu0 0
        %4476 = vmatpush2.bf16.msra.mxu0 0
        %4477 = vmatprep.subr.bf16.mxu0 0
        %4478 = vmatpush2.bf16.msra.mxu0 0
        %4479 = vmatprep.subr.bf16.mxu0 0
        %4480 = vmatpush2.bf16.msra.mxu0 0
        %4481 = vmatprep.subr.bf16.mxu0 0
        %4482 = vmatpush2.bf16.msra.mxu0 0
        %4483 = vmatprep.subr.bf16.mxu0 0
        %4484 = vmatpush2.bf16.msra.mxu0 0
        %4485 = vmatprep.subr.bf16.mxu0 0
        %4486 = vmatpush2.bf16.msra.mxu0 0
        %4487 = vmatprep.mubr.bf16.mxu0 0
        %4488 = vmatmul.mubr.bf16.gmra.mxu0 %v4296
        %v4489 = vpop.f32.mrf.mxu0
        %v4490 = vadd.f32 0.0, %v4489
        %v4491 = vpop.f32.mrf.mxu0
        %v4492 = vadd.f32 0.0, %v4491
        %v4493 = vpop.f32.mrf.mxu0
        %v4494 = vadd.f32 0.0, %v4493
        %v4495 = vpop.f32.mrf.mxu0
        %v4496 = vadd.f32 0.0, %v4495
        %4497 = vmatprep.mubr.bf16.mxu0 0
        %4498 = vmatmul.mubr.bf16.gmra.mxu0 %v4299
        %v4499 = vpop.f32.mrf.mxu0
        %v4500 = vadd.f32 0.0, %v4499
        %v4501 = vpop.f32.mrf.mxu0
        %v4502 = vadd.f32 0.0, %v4501
        %v4503 = vpop.f32.mrf.mxu0
        %v4504 = vadd.f32 0.0, %v4503
        %v4505 = vpop.f32.mrf.mxu0
        %v4506 = vadd.f32 0.0, %v4505
        %4507 = vdwg.mxu0
        %4508 = vmatprep.subr.bf16.mxu0 0
        %4509 = vmatpush1.bf16.msra.mxu0 0
        %4510 = vmatprep.subr.bf16.mxu0 0
        %4511 = vmatpush1.bf16.msra.mxu0 0
        %4512 = vmatprep.subr.bf16.mxu0 0
        %4513 = vmatpush1.bf16.msra.mxu0 0
        %4514 = vmatprep.subr.bf16.mxu0 0
        %4515 = vmatpush1.bf16.msra.mxu0 0
        %4516 = vmatprep.subr.bf16.mxu0 0
        %4517 = vmatpush1.bf16.msra.mxu0 0
        %4518 = vmatprep.subr.bf16.mxu0 0
        %4519 = vmatpush1.bf16.msra.mxu0 0
        %4520 = vmatprep.subr.bf16.mxu0 0
        %4521 = vmatpush1.bf16.msra.mxu0 0
        %4522 = vmatprep.subr.bf16.mxu0 %v4323
        %4523 = vmatpush1.bf16.msra.mxu0 %v4320
        %4524 = vmatprep.subr.bf16.mxu0 0
        %4525 = vmatpush2.bf16.msra.mxu0 0
        %4526 = vmatprep.subr.bf16.mxu0 0
        %4527 = vmatpush2.bf16.msra.mxu0 0
        %4528 = vmatprep.subr.bf16.mxu0 0
        %4529 = vmatpush2.bf16.msra.mxu0 0
        %4530 = vmatprep.subr.bf16.mxu0 0
        %4531 = vmatpush2.bf16.msra.mxu0 0
        %4532 = vmatprep.subr.bf16.mxu0 0
        %4533 = vmatpush2.bf16.msra.mxu0 0
        %4534 = vmatprep.subr.bf16.mxu0 0
        %4535 = vmatpush2.bf16.msra.mxu0 0
        %4536 = vmatprep.subr.bf16.mxu0 0
        %4537 = vmatpush2.bf16.msra.mxu0 0
        %4538 = vmatprep.subr.bf16.mxu0 0
        %4539 = vmatpush2.bf16.msra.mxu0 0
        %4540 = vmatprep.mubr.bf16.mxu0 0
        %4541 = vmatmul.mubr.bf16.gmra.mxu0 %v4296
        %v4542 = vpop.f32.mrf.mxu0
        %v4543 = vadd.f32 0.0, %v4542
        %v4544 = vpop.f32.mrf.mxu0
        %v4545 = vadd.f32 0.0, %v4544
        %v4546 = vpop.f32.mrf.mxu0
        %v4547 = vadd.f32 0.0, %v4546
        %v4548 = vpop.f32.mrf.mxu0
        %v4549 = vadd.f32 0.0, %v4548
        %4550 = vmatprep.mubr.bf16.mxu0 0
        %4551 = vmatmul.mubr.bf16.gmra.mxu0 %v4299
        %v4552 = vpop.f32.mrf.mxu0
        %v4553 = vadd.f32 0.0, %v4552
        %v4554 = vpop.f32.mrf.mxu0
        %v4555 = vadd.f32 0.0, %v4554
        %v4556 = vpop.f32.mrf.mxu0
        %v4557 = vadd.f32 0.0, %v4556
        %v4558 = vpop.f32.mrf.mxu0
        %v4559 = vadd.f32 0.0, %v4558
        %4560 = vdwg.mxu0
        %4561 = vmatprep.subr.bf16.mxu0 0
        %4562 = vmatpush1.bf16.msra.mxu0 0
        %4563 = vmatprep.subr.bf16.mxu0 0
        %4564 = vmatpush1.bf16.msra.mxu0 0
        %4565 = vmatprep.subr.bf16.mxu0 0
        %4566 = vmatpush1.bf16.msra.mxu0 0
        %4567 = vmatprep.subr.bf16.mxu0 0
        %4568 = vmatpush1.bf16.msra.mxu0 0
        %4569 = vmatprep.subr.bf16.mxu0 0
        %4570 = vmatpush1.bf16.msra.mxu0 0
        %4571 = vmatprep.subr.bf16.mxu0 0
        %4572 = vmatpush1.bf16.msra.mxu0 0
        %4573 = vmatprep.subr.bf16.mxu0 0
        %4574 = vmatpush1.bf16.msra.mxu0 0
        %4575 = vmatprep.subr.bf16.mxu0 %v4329
        %4576 = vmatpush1.bf16.msra.mxu0 %v4326
        %4577 = vmatprep.subr.bf16.mxu0 0
        %4578 = vmatpush2.bf16.msra.mxu0 0
        %4579 = vmatprep.subr.bf16.mxu0 0
        %4580 = vmatpush2.bf16.msra.mxu0 0
        %4581 = vmatprep.subr.bf16.mxu0 0
        %4582 = vmatpush2.bf16.msra.mxu0 0
        %4583 = vmatprep.subr.bf16.mxu0 0
        %4584 = vmatpush2.bf16.msra.mxu0 0
        %4585 = vmatprep.subr.bf16.mxu0 0
        %4586 = vmatpush2.bf16.msra.mxu0 0
        %4587 = vmatprep.subr.bf16.mxu0 0
        %4588 = vmatpush2.bf16.msra.mxu0 0
        %4589 = vmatprep.subr.bf16.mxu0 0
        %4590 = vmatpush2.bf16.msra.mxu0 0
        %4591 = vmatprep.subr.bf16.mxu0 0
        %4592 = vmatpush2.bf16.msra.mxu0 0
        %4593 = vmatprep.mubr.bf16.mxu0 0
        %4594 = vmatmul.mubr.bf16.gmra.mxu0 %v4296
        %v4595 = vpop.f32.mrf.mxu0
        %v4596 = vadd.f32 0.0, %v4595
        %v4597 = vpop.f32.mrf.mxu0
        %v4598 = vadd.f32 0.0, %v4597
        %v4599 = vpop.f32.mrf.mxu0
        %v4600 = vadd.f32 0.0, %v4599
        %v4601 = vpop.f32.mrf.mxu0
        %v4602 = vadd.f32 0.0, %v4601
        %4603 = vmatprep.mubr.bf16.mxu0 0
        %4604 = vmatmul.mubr.bf16.gmra.mxu0 %v4299
        %v4605 = vpop.f32.mrf.mxu0
        %v4606 = vadd.f32 0.0, %v4605
        %v4607 = vpop.f32.mrf.mxu0
        %v4608 = vadd.f32 0.0, %v4607
        %v4609 = vpop.f32.mrf.mxu0
        %v4610 = vadd.f32 0.0, %v4609
        %v4611 = vpop.f32.mrf.mxu0
        %v4612 = vadd.f32 0.0, %v4611
        %4613 = vdwg.mxu0
        %4614 = vmatprep.subr.bf16.mxu0 0
        %4615 = vmatpush1.bf16.msra.mxu0 0
        %4616 = vmatprep.subr.bf16.mxu0 0
        %4617 = vmatpush1.bf16.msra.mxu0 0
        %4618 = vmatprep.subr.bf16.mxu0 0
        %4619 = vmatpush1.bf16.msra.mxu0 0
        %4620 = vmatprep.subr.bf16.mxu0 0
        %4621 = vmatpush1.bf16.msra.mxu0 0
        %4622 = vmatprep.subr.bf16.mxu0 0
        %4623 = vmatpush1.bf16.msra.mxu0 0
        %4624 = vmatprep.subr.bf16.mxu0 0
        %4625 = vmatpush1.bf16.msra.mxu0 0
        %4626 = vmatprep.subr.bf16.mxu0 0
        %4627 = vmatpush1.bf16.msra.mxu0 0
        %4628 = vmatprep.subr.bf16.mxu0 %v4335
        %4629 = vmatpush1.bf16.msra.mxu0 %v4332
        %4630 = vmatprep.subr.bf16.mxu0 0
        %4631 = vmatpush2.bf16.msra.mxu0 0
        %4632 = vmatprep.subr.bf16.mxu0 0
        %4633 = vmatpush2.bf16.msra.mxu0 0
        %4634 = vmatprep.subr.bf16.mxu0 0
        %4635 = vmatpush2.bf16.msra.mxu0 0
        %4636 = vmatprep.subr.bf16.mxu0 0
        %4637 = vmatpush2.bf16.msra.mxu0 0
        %4638 = vmatprep.subr.bf16.mxu0 0
        %4639 = vmatpush2.bf16.msra.mxu0 0
        %4640 = vmatprep.subr.bf16.mxu0 0
        %4641 = vmatpush2.bf16.msra.mxu0 0
        %4642 = vmatprep.subr.bf16.mxu0 0
        %4643 = vmatpush2.bf16.msra.mxu0 0
        %4644 = vmatprep.subr.bf16.mxu0 0
        %4645 = vmatpush2.bf16.msra.mxu0 0
        %4646 = vmatprep.mubr.bf16.mxu0 0
        %4647 = vmatmul.mubr.bf16.gmra.mxu0 %v4296
        %v4648 = vpop.f32.mrf.mxu0
        %v4649 = vadd.f32 0.0, %v4648
        %v4650 = vpop.f32.mrf.mxu0
        %v4651 = vadd.f32 0.0, %v4650
        %v4652 = vpop.f32.mrf.mxu0
        %v4653 = vadd.f32 0.0, %v4652
        %v4654 = vpop.f32.mrf.mxu0
        %v4655 = vadd.f32 0.0, %v4654
        %4656 = vmatprep.mubr.bf16.mxu0 0
        %4657 = vmatmul.mubr.bf16.gmra.mxu0 %v4299
        %v4658 = vpop.f32.mrf.mxu0
        %v4659 = vadd.f32 0.0, %v4658
        %v4660 = vpop.f32.mrf.mxu0
        %v4661 = vadd.f32 0.0, %v4660
        %v4662 = vpop.f32.mrf.mxu0
        %v4663 = vadd.f32 0.0, %v4662
        %v4664 = vpop.f32.mrf.mxu0
        %v4665 = vadd.f32 0.0, %v4664
        %4666 = vdwg.mxu0
        %4667 = vmatprep.subr.bf16.mxu0 0
        %4668 = vmatpush1.bf16.msra.mxu0 0
        %4669 = vmatprep.subr.bf16.mxu0 0
        %4670 = vmatpush1.bf16.msra.mxu0 0
        %4671 = vmatprep.subr.bf16.mxu0 0
        %4672 = vmatpush1.bf16.msra.mxu0 0
        %4673 = vmatprep.subr.bf16.mxu0 0
        %4674 = vmatpush1.bf16.msra.mxu0 0
        %4675 = vmatprep.subr.bf16.mxu0 0
        %4676 = vmatpush1.bf16.msra.mxu0 0
        %4677 = vmatprep.subr.bf16.mxu0 0
        %4678 = vmatpush1.bf16.msra.mxu0 0
        %4679 = vmatprep.subr.bf16.mxu0 0
        %4680 = vmatpush1.bf16.msra.mxu0 0
        %4681 = vmatprep.subr.bf16.mxu0 %v4341
        %4682 = vmatpush1.bf16.msra.mxu0 %v4338
        %4683 = vmatprep.subr.bf16.mxu0 0
        %4684 = vmatpush2.bf16.msra.mxu0 0
        %4685 = vmatprep.subr.bf16.mxu0 0
        %4686 = vmatpush2.bf16.msra.mxu0 0
        %4687 = vmatprep.subr.bf16.mxu0 0
        %4688 = vmatpush2.bf16.msra.mxu0 0
        %4689 = vmatprep.subr.bf16.mxu0 0
        %4690 = vmatpush2.bf16.msra.mxu0 0
        %4691 = vmatprep.subr.bf16.mxu0 0
        %4692 = vmatpush2.bf16.msra.mxu0 0
        %4693 = vmatprep.subr.bf16.mxu0 0
        %4694 = vmatpush2.bf16.msra.mxu0 0
        %4695 = vmatprep.subr.bf16.mxu0 0
        %4696 = vmatpush2.bf16.msra.mxu0 0
        %4697 = vmatprep.subr.bf16.mxu0 0
        %4698 = vmatpush2.bf16.msra.mxu0 0
        %4699 = vmatprep.mubr.bf16.mxu0 0
        %4700 = vmatmul.mubr.bf16.gmra.mxu0 %v4296
        %v4701 = vpop.f32.mrf.mxu0
        %v4702 = vadd.f32 0.0, %v4701
        %v4703 = vpop.f32.mrf.mxu0
        %v4704 = vadd.f32 0.0, %v4703
        %v4705 = vpop.f32.mrf.mxu0
        %v4706 = vadd.f32 0.0, %v4705
        %v4707 = vpop.f32.mrf.mxu0
        %v4708 = vadd.f32 0.0, %v4707
        %4709 = vmatprep.mubr.bf16.mxu0 0
        %4710 = vmatmul.mubr.bf16.gmra.mxu0 %v4299
        %v4711 = vpop.f32.mrf.mxu0
        %v4712 = vadd.f32 0.0, %v4711
        %v4713 = vpop.f32.mrf.mxu0
        %v4714 = vadd.f32 0.0, %v4713
        %v4715 = vpop.f32.mrf.mxu0
        %v4716 = vadd.f32 0.0, %v4715
        %v4717 = vpop.f32.mrf.mxu0
        %v4718 = vadd.f32 0.0, %v4717
        %4719 = vdwg.mxu0
        %4720 = vmatprep.subr.bf16.mxu0 0
        %4721 = vmatpush1.bf16.msra.mxu0 0
        %4722 = vmatprep.subr.bf16.mxu0 0
        %4723 = vmatpush1.bf16.msra.mxu0 0
        %4724 = vmatprep.subr.bf16.mxu0 0
        %4725 = vmatpush1.bf16.msra.mxu0 0
        %4726 = vmatprep.subr.bf16.mxu0 0
        %4727 = vmatpush1.bf16.msra.mxu0 0
        %4728 = vmatprep.subr.bf16.mxu0 0
        %4729 = vmatpush1.bf16.msra.mxu0 0
        %4730 = vmatprep.subr.bf16.mxu0 0
        %4731 = vmatpush1.bf16.msra.mxu0 0
        %4732 = vmatprep.subr.bf16.mxu0 0
        %4733 = vmatpush1.bf16.msra.mxu0 0
        %4734 = vmatprep.subr.bf16.mxu0 %v4347
        %4735 = vmatpush1.bf16.msra.mxu0 %v4344
        %4736 = vmatprep.subr.bf16.mxu0 0
        %4737 = vmatpush2.bf16.msra.mxu0 0
        %4738 = vmatprep.subr.bf16.mxu0 0
        %4739 = vmatpush2.bf16.msra.mxu0 0
        %4740 = vmatprep.subr.bf16.mxu0 0
        %4741 = vmatpush2.bf16.msra.mxu0 0
        %4742 = vmatprep.subr.bf16.mxu0 0
        %4743 = vmatpush2.bf16.msra.mxu0 0
        %4744 = vmatprep.subr.bf16.mxu0 0
        %4745 = vmatpush2.bf16.msra.mxu0 0
        %4746 = vmatprep.subr.bf16.mxu0 0
        %4747 = vmatpush2.bf16.msra.mxu0 0
        %4748 = vmatprep.subr.bf16.mxu0 0
        %4749 = vmatpush2.bf16.msra.mxu0 0
        %4750 = vmatprep.subr.bf16.mxu0 0
        %4751 = vmatpush2.bf16.msra.mxu0 0
        %4752 = vmatprep.mubr.bf16.mxu0 0
        %4753 = vmatmul.mubr.bf16.gmra.mxu0 %v4296
        %v4754 = vpop.f32.mrf.mxu0
        %v4755 = vadd.f32 0.0, %v4754
        %v4756 = vpop.f32.mrf.mxu0
        %v4757 = vadd.f32 0.0, %v4756
        %v4758 = vpop.f32.mrf.mxu0
        %v4759 = vadd.f32 0.0, %v4758
        %v4760 = vpop.f32.mrf.mxu0
        %v4761 = vadd.f32 0.0, %v4760
        %4762 = vmatprep.mubr.bf16.mxu0 0
        %4763 = vmatmul.mubr.bf16.gmra.mxu0 %v4299
        %v4764 = vpop.f32.mrf.mxu0
        %v4765 = vadd.f32 0.0, %v4764
        %v4766 = vpop.f32.mrf.mxu0
        %v4767 = vadd.f32 0.0, %v4766
        %v4768 = vpop.f32.mrf.mxu0
        %v4769 = vadd.f32 0.0, %v4768
        %v4770 = vpop.f32.mrf.mxu0
        %v4771 = vadd.f32 0.0, %v4770
        %4772 = vdwg.mxu0
        %v4773 = vadd.f32 %v3966, %v4384
        %v4774 = vadd.f32 %v3967, %v4386
        %v4775 = vadd.f32 %v3968, %v4437
        %v4776 = vadd.f32 %v3969, %v4439
        %v4777 = vadd.f32 %v3970, %v4490
        %v4778 = vadd.f32 %v3971, %v4492
        %v4779 = vadd.f32 %v3972, %v4543
        %v4780 = vadd.f32 %v3973, %v4545
        %v4781 = vadd.f32 %v3974, %v4596
        %v4782 = vadd.f32 %v3975, %v4598
        %v4783 = vadd.f32 %v3976, %v4649
        %v4784 = vadd.f32 %v3977, %v4651
        %v4785 = vadd.f32 %v3978, %v4702
        %v4786 = vadd.f32 %v3979, %v4704
        %v4787 = vadd.f32 %v3980, %v4755
        %v4788 = vadd.f32 %v3981, %v4757
        %v4789 = vadd.f32 %v3982, %v4388
        %v4790 = vadd.f32 %v3983, %v4390
        %v4791 = vadd.f32 %v3984, %v4441
        %v4792 = vadd.f32 %v3985, %v4443
        %v4793 = vadd.f32 %v3986, %v4494
        %v4794 = vadd.f32 %v3987, %v4496
        %v4795 = vadd.f32 %v3988, %v4547
        %v4796 = vadd.f32 %v3989, %v4549
        %v4797 = vadd.f32 %v3990, %v4600
        %v4798 = vadd.f32 %v3991, %v4602
        %v4799 = vadd.f32 %v3992, %v4653
        %v4800 = vadd.f32 %v3993, %v4655
        %v4801 = vadd.f32 %v3994, %v4706
        %v4802 = vadd.f32 %v3995, %v4708
        %v4803 = vadd.f32 %v3996, %v4759
        %v4804 = vadd.f32 %v3997, %v4761
        %v4805 = vadd.f32 %v3998, %v4394
        %v4806 = vadd.f32 %v3999, %v4396
        %v4807 = vadd.f32 %v4000, %v4447
        %v4808 = vadd.f32 %v4001, %v4449
        %v4809 = vadd.f32 %v4002, %v4500
        %v4810 = vadd.f32 %v4003, %v4502
        %v4811 = vadd.f32 %v4004, %v4553
        %v4812 = vadd.f32 %v4005, %v4555
        %v4813 = vadd.f32 %v4006, %v4606
        %v4814 = vadd.f32 %v4007, %v4608
        %v4815 = vadd.f32 %v4008, %v4659
        %v4816 = vadd.f32 %v4009, %v4661
        %v4817 = vadd.f32 %v4010, %v4712
        %v4818 = vadd.f32 %v4011, %v4714
        %v4819 = vadd.f32 %v4012, %v4765
        %v4820 = vadd.f32 %v4013, %v4767
        %v4821 = vadd.f32 %v4014, %v4398
        %v4822 = vadd.f32 %v4015, %v4400
        %v4823 = vadd.f32 %v4016, %v4451
        %v4824 = vadd.f32 %v4017, %v4453
        %v4825 = vadd.f32 %v4018, %v4504
        %v4826 = vadd.f32 %v4019, %v4506
        %v4827 = vadd.f32 %v4020, %v4557
        %v4828 = vadd.f32 %v4021, %v4559
        %v4829 = vadd.f32 %v4022, %v4610
        %v4830 = vadd.f32 %v4023, %v4612
        %v4831 = vadd.f32 %v4024, %v4663
        %v4832 = vadd.f32 %v4025, %v4665
        %v4833 = vadd.f32 %v4026, %v4716
        %v4834 = vadd.f32 %v4027, %v4718
        %v4835 = vadd.f32 %v4028, %v4769
        %v4836 = vadd.f32 %v4029, %v4771
        %s4837 = scalar_lea.vmem [#allocation3], 320
        %v4838 = vld [vmem:[%s4837] sm:$0xf]
        %v4839 = vld [vmem:[%s4837 + $0x4] sm:$0xf]
        %v4840 = vld [vmem:[%s4837 + $0x8] sm:$0xf]
        %v4841 = vld [vmem:[%s4837 + $0xc] sm:$0xf]
        %v4842 = vld [vmem:[%s4837 + $0x10] sm:$0xf]
        %v4843 = vld [vmem:[%s4837 + $0x14] sm:$0xf]
        %v4844 = vld [vmem:[%s4837 + $0x18] sm:$0xf]
        %v4845 = vld [vmem:[%s4837 + $0x1c] sm:$0xf]
        %v4846 = vld [vmem:[%s4837 + $0x20] sm:$0xf]
        %v4847 = vld [vmem:[%s4837 + $0x24] sm:$0xf]
        %v4848 = vld [vmem:[%s4837 + $0x28] sm:$0xf]
        %v4849 = vld [vmem:[%s4837 + $0x2c] sm:$0xf]
        %v4850 = vld [vmem:[%s4837 + $0x30] sm:$0xf]
        %v4851 = vld [vmem:[%s4837 + $0x34] sm:$0xf]
        %v4852 = vld [vmem:[%s4837 + $0x38] sm:$0xf]
        %v4853 = vld [vmem:[%s4837 + $0x3c] sm:$0xf]
        %v4870 = vunpack.c.l.b16 %v4838
        %v4871 = vunpack.c.l.b16 %v4839
        %v4872 = vunpack.c.l.b16 %v4840
        %v4873 = vunpack.c.l.b16 %v4841
        %v4874 = vunpack.c.l.b16 %v4842
        %v4875 = vunpack.c.l.b16 %v4843
        %v4876 = vunpack.c.l.b16 %v4844
        %v4877 = vunpack.c.l.b16 %v4845
        %v4878 = vunpack.c.l.b16 %v4846
        %v4879 = vunpack.c.l.b16 %v4847
        %v4880 = vunpack.c.l.b16 %v4848
        %v4881 = vunpack.c.l.b16 %v4849
        %v4882 = vunpack.c.l.b16 %v4850
        %v4883 = vunpack.c.l.b16 %v4851
        %v4884 = vunpack.c.l.b16 %v4852
        %v4885 = vunpack.c.l.b16 %v4853
        %v4886 = vpack.c.b16 %v4871, %v4870
        %v4887 = vpack.c.b16 %v4873, %v4872
        %v4888 = vpack.c.b16 %v4875, %v4874
        %v4889 = vpack.c.b16 %v4877, %v4876
        %v4890 = vpack.c.b16 %v4879, %v4878
        %v4891 = vpack.c.b16 %v4881, %v4880
        %v4892 = vpack.c.b16 %v4883, %v4882
        %v4893 = vpack.c.b16 %v4885, %v4884
        %4902 = vmatprep.subr.bf16.mxu0 0
        %4903 = vmatpush1.bf16.msra.mxu0 %v4893
        %4904 = vmatprep.subr.bf16.mxu0 0
        %4905 = vmatpush1.bf16.msra.mxu0 %v4892
        %4906 = vmatprep.subr.bf16.mxu0 0
        %4907 = vmatpush1.bf16.msra.mxu0 %v4891
        %4908 = vmatprep.subr.bf16.mxu0 0
        %4909 = vmatpush1.bf16.msra.mxu0 %v4890
        %4910 = vmatprep.subr.bf16.mxu0 0
        %4911 = vmatpush1.bf16.msra.mxu0 %v4889
        %4912 = vmatprep.subr.bf16.mxu0 0
        %4913 = vmatpush1.bf16.msra.mxu0 %v4888
        %4914 = vmatprep.subr.bf16.mxu0 0
        %4915 = vmatpush1.bf16.msra.mxu0 %v4887
        %4916 = vmatprep.subr.bf16.mxu0 0
        %4917 = vmatpush1.bf16.msra.mxu0 %v4886
        %4918 = vmatprep.subr.bf16.mxu0 0
        %4919 = vmatpush2.bf16.msra.mxu0 0
        %4920 = vmatprep.subr.bf16.mxu0 0
        %4921 = vmatpush2.bf16.msra.mxu0 0
        %4922 = vmatprep.subr.bf16.mxu0 0
        %4923 = vmatpush2.bf16.msra.mxu0 0
        %4924 = vmatprep.subr.bf16.mxu0 0
        %4925 = vmatpush2.bf16.msra.mxu0 0
        %4926 = vmatprep.subr.bf16.mxu0 0
        %4927 = vmatpush2.bf16.msra.mxu0 0
        %4928 = vmatprep.subr.bf16.mxu0 0
        %4929 = vmatpush2.bf16.msra.mxu0 0
        %4930 = vmatprep.subr.bf16.mxu0 0
        %4931 = vmatpush2.bf16.msra.mxu0 0
        %4932 = vmatprep.subr.bf16.mxu0 0
        %4933 = vmatpush2.bf16.msra.mxu0 0
        %4934 = vmatprep.mubr.bf16.mxu0 0
        %4935 = vmatmul.mubr.bf16.gmra.mxu0 %v385
        %v4936 = vpop.f32.mrf.mxu0
        %v4937 = vadd.f32 0.0, %v4936
        %v4938 = vpop.f32.mrf.mxu0
        %v4939 = vpop.f32.mrf.mxu0
        %v4940 = vadd.f32 0.0, %v4939
        %v4941 = vpop.f32.mrf.mxu0
        %4942 = vmatprep.mubr.bf16.mxu0 0
        %4943 = vmatmul.mubr.bf16.gmra.mxu0 %v386
        %v4944 = vpop.f32.mrf.mxu0
        %v4945 = vadd.f32 0.0, %v4944
        %v4946 = vpop.f32.mrf.mxu0
        %v4947 = vpop.f32.mrf.mxu0
        %v4948 = vadd.f32 0.0, %v4947
        %v4949 = vpop.f32.mrf.mxu0
        %4950 = vmatprep.mubr.bf16.mxu0 0
        %4951 = vmatmul.mubr.bf16.gmra.mxu0 %v387
        %v4952 = vpop.f32.mrf.mxu0
        %v4953 = vadd.f32 0.0, %v4952
        %v4954 = vpop.f32.mrf.mxu0
        %v4955 = vpop.f32.mrf.mxu0
        %v4956 = vadd.f32 0.0, %v4955
        %v4957 = vpop.f32.mrf.mxu0
        %4958 = vmatprep.mubr.bf16.mxu0 0
        %4959 = vmatmul.mubr.bf16.gmra.mxu0 %v388
        %v4960 = vpop.f32.mrf.mxu0
        %v4961 = vadd.f32 0.0, %v4960
        %v4962 = vpop.f32.mrf.mxu0
        %v4963 = vpop.f32.mrf.mxu0
        %v4964 = vadd.f32 0.0, %v4963
        %v4965 = vpop.f32.mrf.mxu0
        %4966 = vdwg.mxu0
        %v4967 = vpack.c.bf16 %v4940, %v4937
        %v4968 = vpack.c.bf16 %v4948, %v4945
        %v4969 = vpack.c.bf16 %v4956, %v4953
        %v4970 = vpack.c.bf16 %v4964, %v4961
        %s4971 = scalar_lea.vmem %s2, 96
        %v4972 = vld [vmem:[%s4971] sm:$0xf]
        %v4973 = vld [vmem:[%s4971 + $0x4] sm:$0xf]
        %v4974 = vld [vmem:[%s4971 + $0x8] sm:$0xf]
        %v4975 = vld [vmem:[%s4971 + $0xc] sm:$0xf]
        %v4980 = vunpack.c.l.b16 %v4972
        %v4981 = vunpack.c.l.b16 %v4973
        %v4982 = vunpack.c.l.b16 %v4974
        %v4983 = vunpack.c.l.b16 %v4975
        %v4984 = vpack.c.b16 %v4981, %v4980
        %v4985 = vpack.c.b16 %v4983, %v4982
        %v4990 = vunpack.c.l.b16 %v4967
        %v4991 = vunpack.c.h.b16 %v4967
        %v4992 = vunpack.c.l.b16 %v4968
        %v4993 = vunpack.c.h.b16 %v4968
        %v4994 = vunpack.c.l.b16 %v4969
        %v4995 = vunpack.c.h.b16 %v4969
        %v4996 = vunpack.c.l.b16 %v4970
        %v4997 = vunpack.c.h.b16 %v4970
        %v4998 = vpack.i.b16 %v4992, %v4990
        %v4999 = vpack.i.b16 %v4993, %v4991
        %v5000 = vpack.i.b16 %v4996, %v4994
        %v5001 = vpack.i.b16 %v4997, %v4995
        %v5002 = vcombine.low %v4998, %v5000
        %v5003 = vcombine.high %v4998, %v5000
        %v5005 = vunpack.c.l.s4 1966171168
        %v5006 = vunpack.c.0.s8 %v5005
        %v5007 = vlaneseq
        %v5008 = vshrl.u32 %v5007, 7
        %v5009 = vsub.s32 %v5006, %v5008
        %v5010 = vrot.slane %v5002, %v5009
        %v5012 = vunpack.c.l.s4 1966171168
        %v5013 = vunpack.c.0.s8 %v5012
        %v5014 = vlaneseq
        %v5015 = vshrl.u32 %v5014, 7
        %v5016 = vsub.s32 %v5013, %v5015
        %v5017 = vrot.slane %v5003, %v5016
        %v5018 = vcombine.high %v5010, %v5010
        %v5019 = vcombine.high %v5017, %v5017
        %v5021 = vunpack.c.l.s4 1966171168
        %v5022 = vunpack.c.0.s8 %v5021
        %v5023 = vlaneseq
        %v5024 = vshrl.u32 %v5023, 7
        %v5025 = vsub.s32 %v5022, %v5024
        %v5026 = vrot.slane %v5010, %v5025
        %v5028 = vunpack.c.l.s4 1966171168
        %v5029 = vunpack.c.0.s8 %v5028
        %v5030 = vlaneseq
        %v5031 = vshrl.u32 %v5030, 7
        %v5032 = vsub.s32 %v5029, %v5031
        %v5033 = vrot.slane %v5017, %v5032
        %v5035 = vunpack.c.l.s4 1966171168
        %v5036 = vunpack.c.0.s8 %v5035
        %v5037 = vlaneseq
        %v5038 = vshrl.u32 %v5037, 7
        %v5039 = vsub.s32 %v5036, %v5038
        %v5040 = vrot.slane %v5018, %v5039
        %v5042 = vunpack.c.l.s4 1966171168
        %v5043 = vunpack.c.0.s8 %v5042
        %v5044 = vlaneseq
        %v5045 = vshrl.u32 %v5044, 7
        %v5046 = vsub.s32 %v5043, %v5045
        %v5047 = vrot.slane %v5019, %v5046
        %v5048 = vcombine.high %v5026, %v5026
        %v5049 = vcombine.high %v5033, %v5033
        %v5050 = vcombine.high %v5040, %v5040
        %v5051 = vcombine.high %v5047, %v5047
        %v5052 = vcombine.low %v4999, %v5001
        %v5053 = vcombine.high %v4999, %v5001
        %v5055 = vunpack.c.l.s4 1966171168
        %v5056 = vunpack.c.0.s8 %v5055
        %v5057 = vlaneseq
        %v5058 = vshrl.u32 %v5057, 7
        %v5059 = vsub.s32 %v5056, %v5058
        %v5060 = vrot.slane %v5052, %v5059
        %v5062 = vunpack.c.l.s4 1966171168
        %v5063 = vunpack.c.0.s8 %v5062
        %v5064 = vlaneseq
        %v5065 = vshrl.u32 %v5064, 7
        %v5066 = vsub.s32 %v5063, %v5065
        %v5067 = vrot.slane %v5053, %v5066
        %v5068 = vcombine.high %v5060, %v5060
        %v5069 = vcombine.high %v5067, %v5067
        %v5071 = vunpack.c.l.s4 1966171168
        %v5072 = vunpack.c.0.s8 %v5071
        %v5073 = vlaneseq
        %v5074 = vshrl.u32 %v5073, 7
        %v5075 = vsub.s32 %v5072, %v5074
        %v5076 = vrot.slane %v5060, %v5075
        %v5078 = vunpack.c.l.s4 1966171168
        %v5079 = vunpack.c.0.s8 %v5078
        %v5080 = vlaneseq
        %v5081 = vshrl.u32 %v5080, 7
        %v5082 = vsub.s32 %v5079, %v5081
        %v5083 = vrot.slane %v5067, %v5082
        %v5085 = vunpack.c.l.s4 1966171168
        %v5086 = vunpack.c.0.s8 %v5085
        %v5087 = vlaneseq
        %v5088 = vshrl.u32 %v5087, 7
        %v5089 = vsub.s32 %v5086, %v5088
        %v5090 = vrot.slane %v5068, %v5089
        %v5092 = vunpack.c.l.s4 1966171168
        %v5093 = vunpack.c.0.s8 %v5092
        %v5094 = vlaneseq
        %v5095 = vshrl.u32 %v5094, 7
        %v5096 = vsub.s32 %v5093, %v5095
        %v5097 = vrot.slane %v5069, %v5096
        %v5098 = vcombine.high %v5076, %v5076
        %v5099 = vcombine.high %v5083, %v5083
        %v5100 = vcombine.high %v5090, %v5090
        %v5101 = vcombine.high %v5097, %v5097
        %v5103 = vsel %vm641, %v4984, 0
        %v5106 = vsel %vm641, %v4985, 0
        %v5109 = vsel %vm648, %v5026, 0
        %v5112 = vsel %vm648, %v5040, 0
        %v5115 = vsel %vm648, %v5048, 0
        %v5118 = vsel %vm648, %v5050, 0
        %v5121 = vsel %vm648, %v5033, 0
        %v5124 = vsel %vm648, %v5047, 0
        %v5127 = vsel %vm648, %v5049, 0
        %v5130 = vsel %vm648, %v5051, 0
        %v5133 = vsel %vm648, %v5076, 0
        %v5136 = vsel %vm648, %v5090, 0
        %v5139 = vsel %vm648, %v5098, 0
        %v5142 = vsel %vm648, %v5100, 0
        %v5145 = vsel %vm648, %v5083, 0
        %v5148 = vsel %vm648, %v5097, 0
        %v5151 = vsel %vm648, %v5099, 0
        %v5154 = vsel %vm648, %v5101, 0
        %5156 = vmatprep.subr.bf16.mxu0 0
        %5157 = vmatpush1.bf16.msra.mxu0 0
        %5158 = vmatprep.subr.bf16.mxu0 0
        %5159 = vmatpush1.bf16.msra.mxu0 0
        %5160 = vmatprep.subr.bf16.mxu0 0
        %5161 = vmatpush1.bf16.msra.mxu0 0
        %5162 = vmatprep.subr.bf16.mxu0 0
        %5163 = vmatpush1.bf16.msra.mxu0 0
        %5164 = vmatprep.subr.bf16.mxu0 0
        %5165 = vmatpush1.bf16.msra.mxu0 0
        %5166 = vmatprep.subr.bf16.mxu0 0
        %5167 = vmatpush1.bf16.msra.mxu0 0
        %5168 = vmatprep.subr.bf16.mxu0 0
        %5169 = vmatpush1.bf16.msra.mxu0 0
        %5170 = vmatprep.subr.bf16.mxu0 %v5112
        %5171 = vmatpush1.bf16.msra.mxu0 %v5109
        %5172 = vmatprep.subr.bf16.mxu0 0
        %5173 = vmatpush2.bf16.msra.mxu0 0
        %5174 = vmatprep.subr.bf16.mxu0 0
        %5175 = vmatpush2.bf16.msra.mxu0 0
        %5176 = vmatprep.subr.bf16.mxu0 0
        %5177 = vmatpush2.bf16.msra.mxu0 0
        %5178 = vmatprep.subr.bf16.mxu0 0
        %5179 = vmatpush2.bf16.msra.mxu0 0
        %5180 = vmatprep.subr.bf16.mxu0 0
        %5181 = vmatpush2.bf16.msra.mxu0 0
        %5182 = vmatprep.subr.bf16.mxu0 0
        %5183 = vmatpush2.bf16.msra.mxu0 0
        %5184 = vmatprep.subr.bf16.mxu0 0
        %5185 = vmatpush2.bf16.msra.mxu0 0
        %5186 = vmatprep.subr.bf16.mxu0 0
        %5187 = vmatpush2.bf16.msra.mxu0 0
        %5188 = vmatprep.mubr.bf16.mxu0 0
        %5189 = vmatmul.mubr.bf16.gmra.mxu0 %v5103
        %v5190 = vpop.f32.mrf.mxu0
        %v5191 = vadd.f32 0.0, %v5190
        %v5192 = vpop.f32.mrf.mxu0
        %v5193 = vadd.f32 0.0, %v5192
        %v5194 = vpop.f32.mrf.mxu0
        %v5195 = vadd.f32 0.0, %v5194
        %v5196 = vpop.f32.mrf.mxu0
        %v5197 = vadd.f32 0.0, %v5196
        %5198 = vmatprep.mubr.bf16.mxu0 0
        %5199 = vmatmul.mubr.bf16.gmra.mxu0 %v5106
        %v5200 = vpop.f32.mrf.mxu0
        %v5201 = vadd.f32 0.0, %v5200
        %v5202 = vpop.f32.mrf.mxu0
        %v5203 = vadd.f32 0.0, %v5202
        %v5204 = vpop.f32.mrf.mxu0
        %v5205 = vadd.f32 0.0, %v5204
        %v5206 = vpop.f32.mrf.mxu0
        %v5207 = vadd.f32 0.0, %v5206
        %5208 = vdwg.mxu0
        %5209 = vmatprep.subr.bf16.mxu0 0
        %5210 = vmatpush1.bf16.msra.mxu0 0
        %5211 = vmatprep.subr.bf16.mxu0 0
        %5212 = vmatpush1.bf16.msra.mxu0 0
        %5213 = vmatprep.subr.bf16.mxu0 0
        %5214 = vmatpush1.bf16.msra.mxu0 0
        %5215 = vmatprep.subr.bf16.mxu0 0
        %5216 = vmatpush1.bf16.msra.mxu0 0
        %5217 = vmatprep.subr.bf16.mxu0 0
        %5218 = vmatpush1.bf16.msra.mxu0 0
        %5219 = vmatprep.subr.bf16.mxu0 0
        %5220 = vmatpush1.bf16.msra.mxu0 0
        %5221 = vmatprep.subr.bf16.mxu0 0
        %5222 = vmatpush1.bf16.msra.mxu0 0
        %5223 = vmatprep.subr.bf16.mxu0 %v5118
        %5224 = vmatpush1.bf16.msra.mxu0 %v5115
        %5225 = vmatprep.subr.bf16.mxu0 0
        %5226 = vmatpush2.bf16.msra.mxu0 0
        %5227 = vmatprep.subr.bf16.mxu0 0
        %5228 = vmatpush2.bf16.msra.mxu0 0
        %5229 = vmatprep.subr.bf16.mxu0 0
        %5230 = vmatpush2.bf16.msra.mxu0 0
        %5231 = vmatprep.subr.bf16.mxu0 0
        %5232 = vmatpush2.bf16.msra.mxu0 0
        %5233 = vmatprep.subr.bf16.mxu0 0
        %5234 = vmatpush2.bf16.msra.mxu0 0
        %5235 = vmatprep.subr.bf16.mxu0 0
        %5236 = vmatpush2.bf16.msra.mxu0 0
        %5237 = vmatprep.subr.bf16.mxu0 0
        %5238 = vmatpush2.bf16.msra.mxu0 0
        %5239 = vmatprep.subr.bf16.mxu0 0
        %5240 = vmatpush2.bf16.msra.mxu0 0
        %5241 = vmatprep.mubr.bf16.mxu0 0
        %5242 = vmatmul.mubr.bf16.gmra.mxu0 %v5103
        %v5243 = vpop.f32.mrf.mxu0
        %v5244 = vadd.f32 0.0, %v5243
        %v5245 = vpop.f32.mrf.mxu0
        %v5246 = vadd.f32 0.0, %v5245
        %v5247 = vpop.f32.mrf.mxu0
        %v5248 = vadd.f32 0.0, %v5247
        %v5249 = vpop.f32.mrf.mxu0
        %v5250 = vadd.f32 0.0, %v5249
        %5251 = vmatprep.mubr.bf16.mxu0 0
        %5252 = vmatmul.mubr.bf16.gmra.mxu0 %v5106
        %v5253 = vpop.f32.mrf.mxu0
        %v5254 = vadd.f32 0.0, %v5253
        %v5255 = vpop.f32.mrf.mxu0
        %v5256 = vadd.f32 0.0, %v5255
        %v5257 = vpop.f32.mrf.mxu0
        %v5258 = vadd.f32 0.0, %v5257
        %v5259 = vpop.f32.mrf.mxu0
        %v5260 = vadd.f32 0.0, %v5259
        %5261 = vdwg.mxu0
        %5262 = vmatprep.subr.bf16.mxu0 0
        %5263 = vmatpush1.bf16.msra.mxu0 0
        %5264 = vmatprep.subr.bf16.mxu0 0
        %5265 = vmatpush1.bf16.msra.mxu0 0
        %5266 = vmatprep.subr.bf16.mxu0 0
        %5267 = vmatpush1.bf16.msra.mxu0 0
        %5268 = vmatprep.subr.bf16.mxu0 0
        %5269 = vmatpush1.bf16.msra.mxu0 0
        %5270 = vmatprep.subr.bf16.mxu0 0
        %5271 = vmatpush1.bf16.msra.mxu0 0
        %5272 = vmatprep.subr.bf16.mxu0 0
        %5273 = vmatpush1.bf16.msra.mxu0 0
        %5274 = vmatprep.subr.bf16.mxu0 0
        %5275 = vmatpush1.bf16.msra.mxu0 0
        %5276 = vmatprep.subr.bf16.mxu0 %v5124
        %5277 = vmatpush1.bf16.msra.mxu0 %v5121
        %5278 = vmatprep.subr.bf16.mxu0 0
        %5279 = vmatpush2.bf16.msra.mxu0 0
        %5280 = vmatprep.subr.bf16.mxu0 0
        %5281 = vmatpush2.bf16.msra.mxu0 0
        %5282 = vmatprep.subr.bf16.mxu0 0
        %5283 = vmatpush2.bf16.msra.mxu0 0
        %5284 = vmatprep.subr.bf16.mxu0 0
        %5285 = vmatpush2.bf16.msra.mxu0 0
        %5286 = vmatprep.subr.bf16.mxu0 0
        %5287 = vmatpush2.bf16.msra.mxu0 0
        %5288 = vmatprep.subr.bf16.mxu0 0
        %5289 = vmatpush2.bf16.msra.mxu0 0
        %5290 = vmatprep.subr.bf16.mxu0 0
        %5291 = vmatpush2.bf16.msra.mxu0 0
        %5292 = vmatprep.subr.bf16.mxu0 0
        %5293 = vmatpush2.bf16.msra.mxu0 0
        %5294 = vmatprep.mubr.bf16.mxu0 0
        %5295 = vmatmul.mubr.bf16.gmra.mxu0 %v5103
        %v5296 = vpop.f32.mrf.mxu0
        %v5297 = vadd.f32 0.0, %v5296
        %v5298 = vpop.f32.mrf.mxu0
        %v5299 = vadd.f32 0.0, %v5298
        %v5300 = vpop.f32.mrf.mxu0
        %v5301 = vadd.f32 0.0, %v5300
        %v5302 = vpop.f32.mrf.mxu0
        %v5303 = vadd.f32 0.0, %v5302
        %5304 = vmatprep.mubr.bf16.mxu0 0
        %5305 = vmatmul.mubr.bf16.gmra.mxu0 %v5106
        %v5306 = vpop.f32.mrf.mxu0
        %v5307 = vadd.f32 0.0, %v5306
        %v5308 = vpop.f32.mrf.mxu0
        %v5309 = vadd.f32 0.0, %v5308
        %v5310 = vpop.f32.mrf.mxu0
        %v5311 = vadd.f32 0.0, %v5310
        %v5312 = vpop.f32.mrf.mxu0
        %v5313 = vadd.f32 0.0, %v5312
        %5314 = vdwg.mxu0
        %5315 = vmatprep.subr.bf16.mxu0 0
        %5316 = vmatpush1.bf16.msra.mxu0 0
        %5317 = vmatprep.subr.bf16.mxu0 0
        %5318 = vmatpush1.bf16.msra.mxu0 0
        %5319 = vmatprep.subr.bf16.mxu0 0
        %5320 = vmatpush1.bf16.msra.mxu0 0
        %5321 = vmatprep.subr.bf16.mxu0 0
        %5322 = vmatpush1.bf16.msra.mxu0 0
        %5323 = vmatprep.subr.bf16.mxu0 0
        %5324 = vmatpush1.bf16.msra.mxu0 0
        %5325 = vmatprep.subr.bf16.mxu0 0
        %5326 = vmatpush1.bf16.msra.mxu0 0
        %5327 = vmatprep.subr.bf16.mxu0 0
        %5328 = vmatpush1.bf16.msra.mxu0 0
        %5329 = vmatprep.subr.bf16.mxu0 %v5130
        %5330 = vmatpush1.bf16.msra.mxu0 %v5127
        %5331 = vmatprep.subr.bf16.mxu0 0
        %5332 = vmatpush2.bf16.msra.mxu0 0
        %5333 = vmatprep.subr.bf16.mxu0 0
        %5334 = vmatpush2.bf16.msra.mxu0 0
        %5335 = vmatprep.subr.bf16.mxu0 0
        %5336 = vmatpush2.bf16.msra.mxu0 0
        %5337 = vmatprep.subr.bf16.mxu0 0
        %5338 = vmatpush2.bf16.msra.mxu0 0
        %5339 = vmatprep.subr.bf16.mxu0 0
        %5340 = vmatpush2.bf16.msra.mxu0 0
        %5341 = vmatprep.subr.bf16.mxu0 0
        %5342 = vmatpush2.bf16.msra.mxu0 0
        %5343 = vmatprep.subr.bf16.mxu0 0
        %5344 = vmatpush2.bf16.msra.mxu0 0
        %5345 = vmatprep.subr.bf16.mxu0 0
        %5346 = vmatpush2.bf16.msra.mxu0 0
        %5347 = vmatprep.mubr.bf16.mxu0 0
        %5348 = vmatmul.mubr.bf16.gmra.mxu0 %v5103
        %v5349 = vpop.f32.mrf.mxu0
        %v5350 = vadd.f32 0.0, %v5349
        %v5351 = vpop.f32.mrf.mxu0
        %v5352 = vadd.f32 0.0, %v5351
        %v5353 = vpop.f32.mrf.mxu0
        %v5354 = vadd.f32 0.0, %v5353
        %v5355 = vpop.f32.mrf.mxu0
        %v5356 = vadd.f32 0.0, %v5355
        %5357 = vmatprep.mubr.bf16.mxu0 0
        %5358 = vmatmul.mubr.bf16.gmra.mxu0 %v5106
        %v5359 = vpop.f32.mrf.mxu0
        %v5360 = vadd.f32 0.0, %v5359
        %v5361 = vpop.f32.mrf.mxu0
        %v5362 = vadd.f32 0.0, %v5361
        %v5363 = vpop.f32.mrf.mxu0
        %v5364 = vadd.f32 0.0, %v5363
        %v5365 = vpop.f32.mrf.mxu0
        %v5366 = vadd.f32 0.0, %v5365
        %5367 = vdwg.mxu0
        %5368 = vmatprep.subr.bf16.mxu0 0
        %5369 = vmatpush1.bf16.msra.mxu0 0
        %5370 = vmatprep.subr.bf16.mxu0 0
        %5371 = vmatpush1.bf16.msra.mxu0 0
        %5372 = vmatprep.subr.bf16.mxu0 0
        %5373 = vmatpush1.bf16.msra.mxu0 0
        %5374 = vmatprep.subr.bf16.mxu0 0
        %5375 = vmatpush1.bf16.msra.mxu0 0
        %5376 = vmatprep.subr.bf16.mxu0 0
        %5377 = vmatpush1.bf16.msra.mxu0 0
        %5378 = vmatprep.subr.bf16.mxu0 0
        %5379 = vmatpush1.bf16.msra.mxu0 0
        %5380 = vmatprep.subr.bf16.mxu0 0
        %5381 = vmatpush1.bf16.msra.mxu0 0
        %5382 = vmatprep.subr.bf16.mxu0 %v5136
        %5383 = vmatpush1.bf16.msra.mxu0 %v5133
        %5384 = vmatprep.subr.bf16.mxu0 0
        %5385 = vmatpush2.bf16.msra.mxu0 0
        %5386 = vmatprep.subr.bf16.mxu0 0
        %5387 = vmatpush2.bf16.msra.mxu0 0
        %5388 = vmatprep.subr.bf16.mxu0 0
        %5389 = vmatpush2.bf16.msra.mxu0 0
        %5390 = vmatprep.subr.bf16.mxu0 0
        %5391 = vmatpush2.bf16.msra.mxu0 0
        %5392 = vmatprep.subr.bf16.mxu0 0
        %5393 = vmatpush2.bf16.msra.mxu0 0
        %5394 = vmatprep.subr.bf16.mxu0 0
        %5395 = vmatpush2.bf16.msra.mxu0 0
        %5396 = vmatprep.subr.bf16.mxu0 0
        %5397 = vmatpush2.bf16.msra.mxu0 0
        %5398 = vmatprep.subr.bf16.mxu0 0
        %5399 = vmatpush2.bf16.msra.mxu0 0
        %5400 = vmatprep.mubr.bf16.mxu0 0
        %5401 = vmatmul.mubr.bf16.gmra.mxu0 %v5103
        %v5402 = vpop.f32.mrf.mxu0
        %v5403 = vadd.f32 0.0, %v5402
        %v5404 = vpop.f32.mrf.mxu0
        %v5405 = vadd.f32 0.0, %v5404
        %v5406 = vpop.f32.mrf.mxu0
        %v5407 = vadd.f32 0.0, %v5406
        %v5408 = vpop.f32.mrf.mxu0
        %v5409 = vadd.f32 0.0, %v5408
        %5410 = vmatprep.mubr.bf16.mxu0 0
        %5411 = vmatmul.mubr.bf16.gmra.mxu0 %v5106
        %v5412 = vpop.f32.mrf.mxu0
        %v5413 = vadd.f32 0.0, %v5412
        %v5414 = vpop.f32.mrf.mxu0
        %v5415 = vadd.f32 0.0, %v5414
        %v5416 = vpop.f32.mrf.mxu0
        %v5417 = vadd.f32 0.0, %v5416
        %v5418 = vpop.f32.mrf.mxu0
        %v5419 = vadd.f32 0.0, %v5418
        %5420 = vdwg.mxu0
        %5421 = vmatprep.subr.bf16.mxu0 0
        %5422 = vmatpush1.bf16.msra.mxu0 0
        %5423 = vmatprep.subr.bf16.mxu0 0
        %5424 = vmatpush1.bf16.msra.mxu0 0
        %5425 = vmatprep.subr.bf16.mxu0 0
        %5426 = vmatpush1.bf16.msra.mxu0 0
        %5427 = vmatprep.subr.bf16.mxu0 0
        %5428 = vmatpush1.bf16.msra.mxu0 0
        %5429 = vmatprep.subr.bf16.mxu0 0
        %5430 = vmatpush1.bf16.msra.mxu0 0
        %5431 = vmatprep.subr.bf16.mxu0 0
        %5432 = vmatpush1.bf16.msra.mxu0 0
        %5433 = vmatprep.subr.bf16.mxu0 0
        %5434 = vmatpush1.bf16.msra.mxu0 0
        %5435 = vmatprep.subr.bf16.mxu0 %v5142
        %5436 = vmatpush1.bf16.msra.mxu0 %v5139
        %5437 = vmatprep.subr.bf16.mxu0 0
        %5438 = vmatpush2.bf16.msra.mxu0 0
        %5439 = vmatprep.subr.bf16.mxu0 0
        %5440 = vmatpush2.bf16.msra.mxu0 0
        %5441 = vmatprep.subr.bf16.mxu0 0
        %5442 = vmatpush2.bf16.msra.mxu0 0
        %5443 = vmatprep.subr.bf16.mxu0 0
        %5444 = vmatpush2.bf16.msra.mxu0 0
        %5445 = vmatprep.subr.bf16.mxu0 0
        %5446 = vmatpush2.bf16.msra.mxu0 0
        %5447 = vmatprep.subr.bf16.mxu0 0
        %5448 = vmatpush2.bf16.msra.mxu0 0
        %5449 = vmatprep.subr.bf16.mxu0 0
        %5450 = vmatpush2.bf16.msra.mxu0 0
        %5451 = vmatprep.subr.bf16.mxu0 0
        %5452 = vmatpush2.bf16.msra.mxu0 0
        %5453 = vmatprep.mubr.bf16.mxu0 0
        %5454 = vmatmul.mubr.bf16.gmra.mxu0 %v5103
        %v5455 = vpop.f32.mrf.mxu0
        %v5456 = vadd.f32 0.0, %v5455
        %v5457 = vpop.f32.mrf.mxu0
        %v5458 = vadd.f32 0.0, %v5457
        %v5459 = vpop.f32.mrf.mxu0
        %v5460 = vadd.f32 0.0, %v5459
        %v5461 = vpop.f32.mrf.mxu0
        %v5462 = vadd.f32 0.0, %v5461
        %5463 = vmatprep.mubr.bf16.mxu0 0
        %5464 = vmatmul.mubr.bf16.gmra.mxu0 %v5106
        %v5465 = vpop.f32.mrf.mxu0
        %v5466 = vadd.f32 0.0, %v5465
        %v5467 = vpop.f32.mrf.mxu0
        %v5468 = vadd.f32 0.0, %v5467
        %v5469 = vpop.f32.mrf.mxu0
        %v5470 = vadd.f32 0.0, %v5469
        %v5471 = vpop.f32.mrf.mxu0
        %v5472 = vadd.f32 0.0, %v5471
        %5473 = vdwg.mxu0
        %5474 = vmatprep.subr.bf16.mxu0 0
        %5475 = vmatpush1.bf16.msra.mxu0 0
        %5476 = vmatprep.subr.bf16.mxu0 0
        %5477 = vmatpush1.bf16.msra.mxu0 0
        %5478 = vmatprep.subr.bf16.mxu0 0
        %5479 = vmatpush1.bf16.msra.mxu0 0
        %5480 = vmatprep.subr.bf16.mxu0 0
        %5481 = vmatpush1.bf16.msra.mxu0 0
        %5482 = vmatprep.subr.bf16.mxu0 0
        %5483 = vmatpush1.bf16.msra.mxu0 0
        %5484 = vmatprep.subr.bf16.mxu0 0
        %5485 = vmatpush1.bf16.msra.mxu0 0
        %5486 = vmatprep.subr.bf16.mxu0 0
        %5487 = vmatpush1.bf16.msra.mxu0 0
        %5488 = vmatprep.subr.bf16.mxu0 %v5148
        %5489 = vmatpush1.bf16.msra.mxu0 %v5145
        %5490 = vmatprep.subr.bf16.mxu0 0
        %5491 = vmatpush2.bf16.msra.mxu0 0
        %5492 = vmatprep.subr.bf16.mxu0 0
        %5493 = vmatpush2.bf16.msra.mxu0 0
        %5494 = vmatprep.subr.bf16.mxu0 0
        %5495 = vmatpush2.bf16.msra.mxu0 0
        %5496 = vmatprep.subr.bf16.mxu0 0
        %5497 = vmatpush2.bf16.msra.mxu0 0
        %5498 = vmatprep.subr.bf16.mxu0 0
        %5499 = vmatpush2.bf16.msra.mxu0 0
        %5500 = vmatprep.subr.bf16.mxu0 0
        %5501 = vmatpush2.bf16.msra.mxu0 0
        %5502 = vmatprep.subr.bf16.mxu0 0
        %5503 = vmatpush2.bf16.msra.mxu0 0
        %5504 = vmatprep.subr.bf16.mxu0 0
        %5505 = vmatpush2.bf16.msra.mxu0 0
        %5506 = vmatprep.mubr.bf16.mxu0 0
        %5507 = vmatmul.mubr.bf16.gmra.mxu0 %v5103
        %v5508 = vpop.f32.mrf.mxu0
        %v5509 = vadd.f32 0.0, %v5508
        %v5510 = vpop.f32.mrf.mxu0
        %v5511 = vadd.f32 0.0, %v5510
        %v5512 = vpop.f32.mrf.mxu0
        %v5513 = vadd.f32 0.0, %v5512
        %v5514 = vpop.f32.mrf.mxu0
        %v5515 = vadd.f32 0.0, %v5514
        %5516 = vmatprep.mubr.bf16.mxu0 0
        %5517 = vmatmul.mubr.bf16.gmra.mxu0 %v5106
        %v5518 = vpop.f32.mrf.mxu0
        %v5519 = vadd.f32 0.0, %v5518
        %v5520 = vpop.f32.mrf.mxu0
        %v5521 = vadd.f32 0.0, %v5520
        %v5522 = vpop.f32.mrf.mxu0
        %v5523 = vadd.f32 0.0, %v5522
        %v5524 = vpop.f32.mrf.mxu0
        %v5525 = vadd.f32 0.0, %v5524
        %5526 = vdwg.mxu0
        %5527 = vmatprep.subr.bf16.mxu0 0
        %5528 = vmatpush1.bf16.msra.mxu0 0
        %5529 = vmatprep.subr.bf16.mxu0 0
        %5530 = vmatpush1.bf16.msra.mxu0 0
        %5531 = vmatprep.subr.bf16.mxu0 0
        %5532 = vmatpush1.bf16.msra.mxu0 0
        %5533 = vmatprep.subr.bf16.mxu0 0
        %5534 = vmatpush1.bf16.msra.mxu0 0
        %5535 = vmatprep.subr.bf16.mxu0 0
        %5536 = vmatpush1.bf16.msra.mxu0 0
        %5537 = vmatprep.subr.bf16.mxu0 0
        %5538 = vmatpush1.bf16.msra.mxu0 0
        %5539 = vmatprep.subr.bf16.mxu0 0
        %5540 = vmatpush1.bf16.msra.mxu0 0
        %5541 = vmatprep.subr.bf16.mxu0 %v5154
        %5542 = vmatpush1.bf16.msra.mxu0 %v5151
        %5543 = vmatprep.subr.bf16.mxu0 0
        %5544 = vmatpush2.bf16.msra.mxu0 0
        %5545 = vmatprep.subr.bf16.mxu0 0
        %5546 = vmatpush2.bf16.msra.mxu0 0
        %5547 = vmatprep.subr.bf16.mxu0 0
        %5548 = vmatpush2.bf16.msra.mxu0 0
        %5549 = vmatprep.subr.bf16.mxu0 0
        %5550 = vmatpush2.bf16.msra.mxu0 0
        %5551 = vmatprep.subr.bf16.mxu0 0
        %5552 = vmatpush2.bf16.msra.mxu0 0
        %5553 = vmatprep.subr.bf16.mxu0 0
        %5554 = vmatpush2.bf16.msra.mxu0 0
        %5555 = vmatprep.subr.bf16.mxu0 0
        %5556 = vmatpush2.bf16.msra.mxu0 0
        %5557 = vmatprep.subr.bf16.mxu0 0
        %5558 = vmatpush2.bf16.msra.mxu0 0
        %5559 = vmatprep.mubr.bf16.mxu0 0
        %5560 = vmatmul.mubr.bf16.gmra.mxu0 %v5103
        %v5561 = vpop.f32.mrf.mxu0
        %v5562 = vadd.f32 0.0, %v5561
        %v5563 = vpop.f32.mrf.mxu0
        %v5564 = vadd.f32 0.0, %v5563
        %v5565 = vpop.f32.mrf.mxu0
        %v5566 = vadd.f32 0.0, %v5565
        %v5567 = vpop.f32.mrf.mxu0
        %v5568 = vadd.f32 0.0, %v5567
        %5569 = vmatprep.mubr.bf16.mxu0 0
        %5570 = vmatmul.mubr.bf16.gmra.mxu0 %v5106
        %v5571 = vpop.f32.mrf.mxu0
        %v5572 = vadd.f32 0.0, %v5571
        %v5573 = vpop.f32.mrf.mxu0
        %v5574 = vadd.f32 0.0, %v5573
        %v5575 = vpop.f32.mrf.mxu0
        %v5576 = vadd.f32 0.0, %v5575
        %v5577 = vpop.f32.mrf.mxu0
        %v5578 = vadd.f32 0.0, %v5577
        %5579 = vdwg.mxu0
        %v5580 = vadd.f32 %v4773, %v5191
        %v5581 = vadd.f32 %v4774, %v5193
        %v5582 = vadd.f32 %v4775, %v5244
        %v5583 = vadd.f32 %v4776, %v5246
        %v5584 = vadd.f32 %v4777, %v5297
        %v5585 = vadd.f32 %v4778, %v5299
        %v5586 = vadd.f32 %v4779, %v5350
        %v5587 = vadd.f32 %v4780, %v5352
        %v5588 = vadd.f32 %v4781, %v5403
        %v5589 = vadd.f32 %v4782, %v5405
        %v5590 = vadd.f32 %v4783, %v5456
        %v5591 = vadd.f32 %v4784, %v5458
        %v5592 = vadd.f32 %v4785, %v5509
        %v5593 = vadd.f32 %v4786, %v5511
        %v5594 = vadd.f32 %v4787, %v5562
        %v5595 = vadd.f32 %v4788, %v5564
        %v5596 = vadd.f32 %v4789, %v5195
        %v5597 = vadd.f32 %v4790, %v5197
        %v5598 = vadd.f32 %v4791, %v5248
        %v5599 = vadd.f32 %v4792, %v5250
        %v5600 = vadd.f32 %v4793, %v5301
        %v5601 = vadd.f32 %v4794, %v5303
        %v5602 = vadd.f32 %v4795, %v5354
        %v5603 = vadd.f32 %v4796, %v5356
        %v5604 = vadd.f32 %v4797, %v5407
        %v5605 = vadd.f32 %v4798, %v5409
        %v5606 = vadd.f32 %v4799, %v5460
        %v5607 = vadd.f32 %v4800, %v5462
        %v5608 = vadd.f32 %v4801, %v5513
        %v5609 = vadd.f32 %v4802, %v5515
        %v5610 = vadd.f32 %v4803, %v5566
        %v5611 = vadd.f32 %v4804, %v5568
        %v5612 = vadd.f32 %v4805, %v5201
        %v5613 = vadd.f32 %v4806, %v5203
        %v5614 = vadd.f32 %v4807, %v5254
        %v5615 = vadd.f32 %v4808, %v5256
        %v5616 = vadd.f32 %v4809, %v5307
        %v5617 = vadd.f32 %v4810, %v5309
        %v5618 = vadd.f32 %v4811, %v5360
        %v5619 = vadd.f32 %v4812, %v5362
        %v5620 = vadd.f32 %v4813, %v5413
        %v5621 = vadd.f32 %v4814, %v5415
        %v5622 = vadd.f32 %v4815, %v5466
        %v5623 = vadd.f32 %v4816, %v5468
        %v5624 = vadd.f32 %v4817, %v5519
        %v5625 = vadd.f32 %v4818, %v5521
        %v5626 = vadd.f32 %v4819, %v5572
        %v5627 = vadd.f32 %v4820, %v5574
        %v5628 = vadd.f32 %v4821, %v5205
        %v5629 = vadd.f32 %v4822, %v5207
        %v5630 = vadd.f32 %v4823, %v5258
        %v5631 = vadd.f32 %v4824, %v5260
        %v5632 = vadd.f32 %v4825, %v5311
        %v5633 = vadd.f32 %v4826, %v5313
        %v5634 = vadd.f32 %v4827, %v5364
        %v5635 = vadd.f32 %v4828, %v5366
        %v5636 = vadd.f32 %v4829, %v5417
        %v5637 = vadd.f32 %v4830, %v5419
        %v5638 = vadd.f32 %v4831, %v5470
        %v5639 = vadd.f32 %v4832, %v5472
        %v5640 = vadd.f32 %v4833, %v5523
        %v5641 = vadd.f32 %v4834, %v5525
        %v5642 = vadd.f32 %v4835, %v5576
        %v5643 = vadd.f32 %v4836, %v5578
        %v5644 = vld [vmem:[%s3] sm:$0xff]
        %v5645 = vld [vmem:[%s3 + $0x8] sm:$0xff]
        %v5646 = vld [vmem:[%s3 + $0x10] sm:$0xff]
        %v5647 = vld [vmem:[%s3 + $0x18] sm:$0xff]
        %5649 = vset.pattern.permute.xlu0 0
        %5650 = vperm.xlu0 %5649, %v5644
        %v5651 = vpop.permute.xlu0 %5650
        %5654 = vset.pattern.permute.xlu0 0
        %5655 = vperm.xlu0 %5654, %v5645
        %v5656 = vpop.permute.xlu0 %5655
        %5659 = vset.pattern.permute.xlu0 0
        %5660 = vperm.xlu0 %5659, %v5646
        %v5661 = vpop.permute.xlu0 %5660
        %5664 = vset.pattern.permute.xlu0 0
        %5665 = vperm.xlu0 %5664, %v5647
        %v5666 = vpop.permute.xlu0 %5665
        %v5668 = vadd.f32 %v5580, %v5651
        %v5669 = vadd.f32 %v5581, %v5651
        %v5670 = vadd.f32 %v5582, %v5651
        %v5671 = vadd.f32 %v5583, %v5651
        %v5672 = vadd.f32 %v5584, %v5651
        %v5673 = vadd.f32 %v5585, %v5651
        %v5674 = vadd.f32 %v5586, %v5651
        %v5675 = vadd.f32 %v5587, %v5651
        %v5676 = vadd.f32 %v5588, %v5651
        %v5677 = vadd.f32 %v5589, %v5651
        %v5678 = vadd.f32 %v5590, %v5651
        %v5679 = vadd.f32 %v5591, %v5651
        %v5680 = vadd.f32 %v5592, %v5651
        %v5681 = vadd.f32 %v5593, %v5651
        %v5682 = vadd.f32 %v5594, %v5651
        %v5683 = vadd.f32 %v5595, %v5651
        %v5684 = vadd.f32 %v5596, %v5656
        %v5685 = vadd.f32 %v5597, %v5656
        %v5686 = vadd.f32 %v5598, %v5656
        %v5687 = vadd.f32 %v5599, %v5656
        %v5688 = vadd.f32 %v5600, %v5656
        %v5689 = vadd.f32 %v5601, %v5656
        %v5690 = vadd.f32 %v5602, %v5656
        %v5691 = vadd.f32 %v5603, %v5656
        %v5692 = vadd.f32 %v5604, %v5656
        %v5693 = vadd.f32 %v5605, %v5656
        %v5694 = vadd.f32 %v5606, %v5656
        %v5695 = vadd.f32 %v5607, %v5656
        %v5696 = vadd.f32 %v5608, %v5656
        %v5697 = vadd.f32 %v5609, %v5656
        %v5698 = vadd.f32 %v5610, %v5656
        %v5699 = vadd.f32 %v5611, %v5656
        %v5700 = vadd.f32 %v5612, %v5661
        %v5701 = vadd.f32 %v5613, %v5661
        %v5702 = vadd.f32 %v5614, %v5661
        %v5703 = vadd.f32 %v5615, %v5661
        %v5704 = vadd.f32 %v5616, %v5661
        %v5705 = vadd.f32 %v5617, %v5661
        %v5706 = vadd.f32 %v5618, %v5661
        %v5707 = vadd.f32 %v5619, %v5661
        %v5708 = vadd.f32 %v5620, %v5661
        %v5709 = vadd.f32 %v5621, %v5661
        %v5710 = vadd.f32 %v5622, %v5661
        %v5711 = vadd.f32 %v5623, %v5661
        %v5712 = vadd.f32 %v5624, %v5661
        %v5713 = vadd.f32 %v5625, %v5661
        %v5714 = vadd.f32 %v5626, %v5661
        %v5715 = vadd.f32 %v5627, %v5661
        %v5716 = vadd.f32 %v5628, %v5666
        %v5717 = vadd.f32 %v5629, %v5666
        %v5718 = vadd.f32 %v5630, %v5666
        %v5719 = vadd.f32 %v5631, %v5666
        %v5720 = vadd.f32 %v5632, %v5666
        %v5721 = vadd.f32 %v5633, %v5666
        %v5722 = vadd.f32 %v5634, %v5666
        %v5723 = vadd.f32 %v5635, %v5666
        %v5724 = vadd.f32 %v5636, %v5666
        %v5725 = vadd.f32 %v5637, %v5666
        %v5726 = vadd.f32 %v5638, %v5666
        %v5727 = vadd.f32 %v5639, %v5666
        %v5728 = vadd.f32 %v5640, %v5666
        %v5729 = vadd.f32 %v5641, %v5666
        %v5730 = vadd.f32 %v5642, %v5666
        %v5731 = vadd.f32 %v5643, %v5666
        %5732 = vst [vmem:[%s282] sm:$0xff] %v5668
        %5733 = vst [vmem:[%s282 + $0x8] sm:$0xff] %v5669
        %5734 = vst [vmem:[%s282 + $0x10] sm:$0xff] %v5670
        %5735 = vst [vmem:[%s282 + $0x18] sm:$0xff] %v5671
        %5736 = vst [vmem:[%s282 + $0x20] sm:$0xff] %v5672
        %5737 = vst [vmem:[%s282 + $0x28] sm:$0xff] %v5673
        %5738 = vst [vmem:[%s282 + $0x30] sm:$0xff] %v5674
        %5739 = vst [vmem:[%s282 + $0x38] sm:$0xff] %v5675
        %5740 = vst [vmem:[%s282 + $0x40] sm:$0xff] %v5676
        %5741 = vst [vmem:[%s282 + $0x48] sm:$0xff] %v5677
        %5742 = vst [vmem:[%s282 + $0x50] sm:$0xff] %v5678
        %5743 = vst [vmem:[%s282 + $0x58] sm:$0xff] %v5679
        %5744 = vst [vmem:[%s282 + $0x60] sm:$0xff] %v5680
        %5745 = vst [vmem:[%s282 + $0x68] sm:$0xff] %v5681
        %5746 = vst [vmem:[%s282 + $0x70] sm:$0xff] %v5682
        %5747 = vst [vmem:[%s282 + $0x78] sm:$0xff] %v5683
        %5748 = vst [vmem:[%s282 + $0x80] sm:$0xff] %v5684
        %5749 = vst [vmem:[%s282 + $0x88] sm:$0xff] %v5685
        %5750 = vst [vmem:[%s282 + $0x90] sm:$0xff] %v5686
        %5751 = vst [vmem:[%s282 + $0x98] sm:$0xff] %v5687
        %5752 = vst [vmem:[%s282 + $0xa0] sm:$0xff] %v5688
        %5753 = vst [vmem:[%s282 + $0xa8] sm:$0xff] %v5689
        %5754 = vst [vmem:[%s282 + $0xb0] sm:$0xff] %v5690
        %5755 = vst [vmem:[%s282 + $0xb8] sm:$0xff] %v5691
        %5756 = vst [vmem:[%s282 + $0xc0] sm:$0xff] %v5692
        %5757 = vst [vmem:[%s282 + $0xc8] sm:$0xff] %v5693
        %5758 = vst [vmem:[%s282 + $0xd0] sm:$0xff] %v5694
        %5759 = vst [vmem:[%s282 + $0xd8] sm:$0xff] %v5695
        %5760 = vst [vmem:[%s282 + $0xe0] sm:$0xff] %v5696
        %5761 = vst [vmem:[%s282 + $0xe8] sm:$0xff] %v5697
        %5762 = vst [vmem:[%s282 + $0xf0] sm:$0xff] %v5698
        %5763 = vst [vmem:[%s282 + $0xf8] sm:$0xff] %v5699
        %5764 = vst [vmem:[%s282 + $0x100] sm:$0xff] %v5700
        %5765 = vst [vmem:[%s282 + $0x108] sm:$0xff] %v5701
        %5766 = vst [vmem:[%s282 + $0x110] sm:$0xff] %v5702
        %5767 = vst [vmem:[%s282 + $0x118] sm:$0xff] %v5703
        %5768 = vst [vmem:[%s282 + $0x120] sm:$0xff] %v5704
        %5769 = vst [vmem:[%s282 + $0x128] sm:$0xff] %v5705
        %5770 = vst [vmem:[%s282 + $0x130] sm:$0xff] %v5706
        %5771 = vst [vmem:[%s282 + $0x138] sm:$0xff] %v5707
        %5772 = vst [vmem:[%s282 + $0x140] sm:$0xff] %v5708
        %5773 = vst [vmem:[%s282 + $0x148] sm:$0xff] %v5709
        %5774 = vst [vmem:[%s282 + $0x150] sm:$0xff] %v5710
        %5775 = vst [vmem:[%s282 + $0x158] sm:$0xff] %v5711
        %5776 = vst [vmem:[%s282 + $0x160] sm:$0xff] %v5712
        %5777 = vst [vmem:[%s282 + $0x168] sm:$0xff] %v5713
        %5778 = vst [vmem:[%s282 + $0x170] sm:$0xff] %v5714
        %5779 = vst [vmem:[%s282 + $0x178] sm:$0xff] %v5715
        %5780 = vst [vmem:[%s282 + $0x180] sm:$0xff] %v5716
        %5781 = vst [vmem:[%s282 + $0x188] sm:$0xff] %v5717
        %5782 = vst [vmem:[%s282 + $0x190] sm:$0xff] %v5718
        %5783 = vst [vmem:[%s282 + $0x198] sm:$0xff] %v5719
        %5784 = vst [vmem:[%s282 + $0x1a0] sm:$0xff] %v5720
        %5785 = vst [vmem:[%s282 + $0x1a8] sm:$0xff] %v5721
        %5786 = vst [vmem:[%s282 + $0x1b0] sm:$0xff] %v5722
        %5787 = vst [vmem:[%s282 + $0x1b8] sm:$0xff] %v5723
        %5788 = vst [vmem:[%s282 + $0x1c0] sm:$0xff] %v5724
        %5789 = vst [vmem:[%s282 + $0x1c8] sm:$0xff] %v5725
        %5790 = vst [vmem:[%s282 + $0x1d0] sm:$0xff] %v5726
        %5791 = vst [vmem:[%s282 + $0x1d8] sm:$0xff] %v5727
        %5792 = vst [vmem:[%s282 + $0x1e0] sm:$0xff] %v5728
        %5793 = vst [vmem:[%s282 + $0x1e8] sm:$0xff] %v5729
        %5794 = vst [vmem:[%s282 + $0x1f0] sm:$0xff] %v5730
        %5795 = vst [vmem:[%s282 + $0x1f8] sm:$0xff] %v5731
        %s5796 = sand.u32 %s116, 1
        %s5797 = scalar_lea.sflag [#allocation5], %s5796
        %s5798 = sand.u32 %s116, 1
        %s5799 = smul.addr %s5798, 512
        %s5800 = scalar_lea.vmem [#allocation6], %s5799
        // Predicated region
        $region82: #{tpu_custom_call.1} parent=72 // pred_check
          %p5801 = pneg %p126
        $region83: #{tpu_custom_call.1} parent=72 // pred_check_branch
          %5803 = sbr.rel (%p5801) target = $region85
        $region84: #{tpu_custom_call.1} parent=72 // pred_region
          %s5804 = smul.u32 16, %s19
          %s5806 = ssub.s32 8192, 8192
          %5807 = vsyncadd %s5797, %s5806
          %s5808 = smul.addr %s5804, 128
          %s5809 = scalar_lea.hbm %s4, %s5808
          %s5810 = sshll.u32 %s5800, 4
          %s5811 = int_to_ptr.vmem [resolvable:$true] %s5810
          %5816 = dma.vmem_to_hbm [thread:$0]  %s5811, 8192, %s5809, %s5797, 2048, 6144, 128
        $region85: #{tpu_custom_call.1} parent=72 // pred_fallthru
          _
      $region73: #{tpu_custom_call.1} parent=5 // pred_fallthru
        _
      %p5817 = scmp.le.s32.totalorder 2, %s14
      // Predicated region
      $region86: #{tpu_custom_call.1} parent=5 // pred_check
        %p5818 = pneg %p5817
      $region87: #{tpu_custom_call.1} parent=5 // pred_check_branch
        %5820 = sbr.rel (%p5818) target = $region89
      $region88: #{tpu_custom_call.1} parent=5 // pred_region
        %s5821 = ssub.s32 %s14, 2
        // Predicated region
        $region90: #{tpu_custom_call.1} parent=88 // pred_check
          %p5822 = pneg %p132
        $region91: #{tpu_custom_call.1} parent=88 // pred_check_branch
          %5824 = sbr.rel (%p5822) target = $region93
        $region92: #{tpu_custom_call.1} parent=88 // pred_region
          %s5825 = sand.u32 %s117, 1
          %s5826 = scalar_lea.sflag [#allocation5], %s5825
          %s5827 = sand.u32 %s117, 1
          %s5828 = smul.addr %s5827, 512
          %s5829 = scalar_lea.vmem [#allocation6], %s5828
          %5830 = dma.done %s5826, 8192
        $region93: #{tpu_custom_call.1} parent=88 // pred_fallthru
          _
      $region89: #{tpu_custom_call.1} parent=5 // pred_fallthru
        _
    $region6: #{tpu_custom_call.1} parent=1 // loop_footer
      %s18 = sadd.s32 1, %s14
    $region7: #{tpu_custom_call.1} parent=1 // loop_footer_branch
      %13 = sbr.rel target = $region3
    $region8: #{tpu_custom_call.1} parent=1 // loop_exit
      _
    %5831 = vsyncpa [#allocation4], 1
    %s5832 = scalar_lea.sflag [#allocation4], 1
    %5833 = vsyncpa %s5832, 1
    %5834 = vsyncpa [#allocation5], 1
    %s5835 = scalar_lea.sflag [#allocation5], 1
    %5836 = vsyncpa %s5835, 1

</llo_original>
